<compile_context>
chip_gen: v5e
topology: v5e:2x2
jax: 0.10.0
libtpu: 0.0.40
codegen_flags: <defaults>
</compile_context>

<pallas_src>
import functools
import math

import jax
import jax.numpy as jnp
from jax import lax
from jax.experimental import pallas as pl
from jax.experimental.pallas import tpu as pltpu


_MASK_NEG = -1e30   # finite "-inf" for masked logits (avoids inf-inf NaN risk)

# Single-buffer grid-invariant operands when the installed JAX supports it.
_SINGLE_BUFFER_CONSTS = [hasattr(pl, "Buffered")]


# ----------------------------------------------------------------------------
# Small helpers
# ----------------------------------------------------------------------------

def _layernorm(x, gamma, beta, eps=1e-5):
    mu = jnp.mean(x, axis=-1, keepdims=True)
    var = jnp.mean((x - mu) ** 2, axis=-1, keepdims=True)
    return (x - mu) * lax.rsqrt(var + eps) * gamma + beta


def _gelu_exact(x):
    # nn.GELU() default = exact erf-based GELU.
    return 0.5 * x * (1.0 + lax.erf(x * (1.0 / math.sqrt(2.0))))


def _tile(dim, target):
    """Largest multiple-of-128 tile <= target that divides dim; else full dim."""
    if dim % 128 != 0:
        return dim
    t = min(max(target, 128), dim)
    t = (t // 128) * 128
    while dim % t != 0:
        t -= 128
    return t


def _vmem_limit_bytes():
    """Per-generation VMEM budget (~100 MiB on v5e/v6e, ~54 MiB on v7x)."""
    cap = 64 * 1024 * 1024
    try:
        info = pltpu.get_tpu_info()
        cap = int(getattr(info, "vmem_capacity_bytes", cap) or cap)
    except Exception:
        pass
    return max(32 * 1024 * 1024, min(int(cap * 0.85), 100 * 1024 * 1024))


def _const_spec(p, single_buffer):
    """Grid-invariant full-array block (DMA'd once, stays VMEM-resident)."""
    nd = p.ndim
    imap = lambda *_: (0,) * nd
    if single_buffer:
        try:
            return pl.BlockSpec(p.shape, imap, pipeline_mode=pl.Buffered(1))
        except TypeError:
            pass
    return pl.BlockSpec(p.shape, imap)


def _call_with_fallback(build, args):
    """Run build(True)(*args); if single-buffered constants fail to lower,
    permanently fall back to default (double-buffered) constant specs."""
    if _SINGLE_BUFFER_CONSTS[0]:
        try:
            return build(True)(*args)
        except Exception:
            _SINGLE_BUFFER_CONSTS[0] = False
    return build(False)(*args)


# ----------------------------------------------------------------------------
# Kernels
# ----------------------------------------------------------------------------

def decoder_block_kernel(x_ref,
                         ln1_g_ref, ln1_b_ref,
                         wqkv_ref, bqkv_ref,
                         wo_ref, bo_ref,
                         ln2_g_ref, ln2_b_ref,
                         w1_ref, b1_ref, w2_ref, b2_ref,
                         o_ref,
                         xa_sc, h2_sc, acc_sc, *, n_heads):
    """Fused decoder block: x + Attn(LN1(x)), then + MLP(LN2(.)).

    grid = (B, n_hidden_tiles).  The attention branch runs once per batch row
    (hidden-tile 0) storing x+attn and LN2(x+attn) into scratch; the MLP streams
    W1/W2 hidden tiles and accumulates the second matmul into f32 scratch.
    """
    hk = pl.program_id(1)
    n_hk = pl.num_programs(1)

    @pl.when(hk == 0)
    def _attention():
        x = x_ref[0].astype(jnp.float32)            # (T, C) residual kept f32
        T, C = x.shape
        H = n_heads
        dh = C // H
        scale = dh ** -0.5

        h = _layernorm(x, ln1_g_ref[...], ln1_b_ref[...]).astype(jnp.bfloat16)

        # One wide QKV matmul (RHS is 3C lanes wide), f32 accumulation.
        qkv = jnp.dot(h, wqkv_ref[...], preferred_element_type=jnp.float32)
        qkv = qkv + bqkv_ref[...]                               # (T, 3C)
        qkv = jnp.swapaxes(qkv.reshape(T, H, 3 * dh), 0, 1)     # (H, T, 3*dh)
        q = qkv[:, :, 0 * dh:1 * dh] * scale     # fold 1/sqrt(dh) into q
        k = qkv[:, :, 1 * dh:2 * dh]
        v = qkv[:, :, 2 * dh:3 * dh]

        # Causal scores + softmax, batched over heads (f32 statistics).
        row = lax.broadcasted_iota(jnp.int32, (T, T), 0)
        col = lax.broadcasted_iota(jnp.int32, (T, T), 1)
        causal = row >= col
        s = jnp.einsum("htd,hsd->hts",
                       q.astype(jnp.bfloat16), k.astype(jnp.bfloat16),
                       preferred_element_type=jnp.float32)
        s = jnp.where(causal[None], s, _MASK_NEG)
        s = s - jnp.max(s, axis=-1, keepdims=True)
        p = jnp.exp(s)
        p = p * pl.reciprocal(jnp.sum(p, axis=-1, keepdims=True), approx=True)

        o = jnp.einsum("hts,hsd->htd",
                       p.astype(jnp.bfloat16), v.astype(jnp.bfloat16),
                       preferred_element_type=jnp.float32)
        # Fused output projection: one matmul with K = H*dh = C (no head-sum).
        o2 = jnp.swapaxes(o.astype(jnp.bfloat16), 0, 1).reshape(T, C)
        attn = jnp.dot(o2, wo_ref[...],
                       preferred_element_type=jnp.float32) + bo_ref[...]

        xa = x + attn
        xa_sc[...] = xa
        # LN2 hoisted: computed once per batch row, reused by every hidden tile.
        h2_sc[...] = _layernorm(xa, ln2_g_ref[...], ln2_b_ref[...]).astype(jnp.bfloat16)
        acc_sc[...] = jnp.zeros_like(acc_sc)

    # --- MLP for the current hidden tile, f32 accumulation over hidden axis ---
    ff = jnp.dot(h2_sc[...], w1_ref[...],
                 preferred_element_type=jnp.float32) + b1_ref[...]
    ff = _gelu_exact(ff)
    acc_sc[...] += jnp.dot(ff.astype(jnp.bfloat16), w2_ref[...],
                           preferred_element_type=jnp.float32)

    @pl.when(hk == n_hk - 1)
    def _finalize():
        o_ref[0] = (xa_sc[...] + acc_sc[...] + b2_ref[...]).astype(o_ref.dtype)


def final_head_kernel(x_ref, g_ref, b_ref, wlm_ref, blm_ref, o_ref, h_sc):
    # Final LayerNorm hoisted: computed once per batch row (vocab tile 0).
    @pl.when(pl.program_id(1) == 0)
    def _ln():
        x = x_ref[0].astype(jnp.float32)             # (T, C)
        h_sc[...] = _layernorm(x, g_ref[...], b_ref[...]).astype(jnp.bfloat16)

    logits = jnp.dot(h_sc[...], wlm_ref[...],
                     preferred_element_type=jnp.float32) + blm_ref[...]
    o_ref[0] = logits.astype(o_ref.dtype)


# ----------------------------------------------------------------------------
# Wrappers
# ----------------------------------------------------------------------------

def decoder_block(x, blk_params, *, tile_h, n_heads):
    B, T, C = x.shape
    (ln1_g, ln1_b, wqkv, bqkv, wo, bo,
     ln2_g, ln2_b, w1, b1, w2, b2) = blk_params
    hidden = w1.shape[1]
    n_hk = hidden // tile_h
    kernel = functools.partial(decoder_block_kernel, n_heads=n_heads)

    def build(single_buffer):
        cs = lambda p: _const_spec(p, single_buffer)
        in_specs = [
            pl.BlockSpec((1, T, C), lambda b, hk: (b, 0, 0)),
            cs(ln1_g), cs(ln1_b), cs(wqkv), cs(bqkv), cs(wo), cs(bo),
            cs(ln2_g), cs(ln2_b),
            pl.BlockSpec((C, tile_h), lambda b, hk: (0, hk)),   # W1 streamed over hidden
            pl.BlockSpec((1, tile_h), lambda b, hk: (0, hk)),   # b1
            pl.BlockSpec((tile_h, C), lambda b, hk: (hk, 0)),   # W2 streamed over hidden
            cs(b2),
        ]
        return pl.pallas_call(
            kernel,
            out_shape=jax.ShapeDtypeStruct((B, T, C), x.dtype),
            grid=(B, n_hk),
            in_specs=in_specs,
            out_specs=pl.BlockSpec((1, T, C), lambda b, hk: (b, 0, 0)),
            scratch_shapes=[pltpu.VMEM((T, C), jnp.float32),    # x + attn residual
                            pltpu.VMEM((T, C), jnp.bfloat16),   # hoisted LN2 output
                            pltpu.VMEM((T, C), jnp.float32)],   # MLP accumulator
            compiler_params=pltpu.CompilerParams(
                dimension_semantics=("parallel", "arbitrary"),
                vmem_limit_bytes=_vmem_limit_bytes()),
        )

    args = (x, ln1_g, ln1_b, wqkv, bqkv, wo, bo, ln2_g, ln2_b, w1, b1, w2, b2)
    return _call_with_fallback(build, args)


def final_head(x, gamma, beta, wlm, blm, *, tile_v_target=2048):
    B, T, C = x.shape
    V = wlm.shape[1]
    # Pad vocab to a multiple of 128 so the LM head always streams lane-dense
    # (C, tile_v) weight tiles instead of falling back to the full (C, V) block.
    Vp = ((V + 127) // 128) * 128
    if Vp != V:
        wlm = jnp.pad(wlm, ((0, 0), (0, Vp - V)))
        blm = jnp.pad(blm, ((0, 0), (0, Vp - V)))
    tile_v = _tile(Vp, tile_v_target)
    n_v = Vp // tile_v

    def build(single_buffer):
        cs = lambda p: _const_spec(p, single_buffer)
        in_specs = [
            pl.BlockSpec((1, T, C), lambda b, v: (b, 0, 0)),
            cs(gamma), cs(beta),
            pl.BlockSpec((C, tile_v), lambda b, v: (0, v)),     # LM-head weight over vocab
            pl.BlockSpec((1, tile_v), lambda b, v: (0, v)),
        ]
        return pl.pallas_call(
            final_head_kernel,
            out_shape=jax.ShapeDtypeStruct((B, T, Vp), jnp.float32),
            grid=(B, n_v),
            in_specs=in_specs,
            out_specs=pl.BlockSpec((1, T, tile_v), lambda b, v: (b, 0, v)),
            scratch_shapes=[pltpu.VMEM((T, C), jnp.bfloat16)],  # hoisted final LN
            compiler_params=pltpu.CompilerParams(
                # vocab axis is "arbitrary": the hoisted-LN scratch carries across tiles.
                dimension_semantics=("parallel", "arbitrary"),
                vmem_limit_bytes=_vmem_limit_bytes()),
        )

    logits = _call_with_fallback(build, (x, gamma, beta, wlm, blm))
    return logits[..., :V] if Vp != V else logits


# ----------------------------------------------------------------------------
# Model (parameter init + forward)
# ----------------------------------------------------------------------------

def init_params(key, vocab_size, d_model, n_heads, num_layers, max_len):
    # QKV weights are merged as (C, 3C) with columns laid out (head, [q|k|v], dh);
    # the out-projection rows are laid out (head, dh).  A PyTorch checkpoint's
    # qkv_proj/out_proj weights map onto this with a static column/row permutation.
    C = d_model
    hidden = 4 * C
    keys = jax.random.split(key, 3 + num_layers)

    def mat(k, shape):   # MXU weight matrices stored bf16 (halves HBM/VMEM)
        return (jax.random.normal(k, shape, jnp.float32) * 0.02).astype(jnp.bfloat16)

    def vec(k, shape):   # biases stay f32
        return jax.random.normal(k, shape, jnp.float32) * 0.02

    params = {
        "n_heads": n_heads,
        "token_emb": jax.random.normal(keys[0], (vocab_size, C), jnp.float32) * 0.02,
        "pos_emb": jax.random.normal(keys[1], (max_len, C), jnp.float32) * 0.02,
        "blocks": [],
    }
    for layer in range(num_layers):
        lk = jax.random.split(keys[2 + layer], 8)
        blk = [
            jnp.ones((1, C), jnp.float32), jnp.zeros((1, C), jnp.float32),  # ln1
            mat(lk[0], (C, 3 * C)),       # wqkv (merged, per-head column layout)
            vec(lk[1], (1, 3 * C)),       # bqkv
            mat(lk[2], (C, C)),           # wo   (rows: head-major)
            vec(lk[3], (1, C)),           # bo
            jnp.ones((1, C), jnp.float32), jnp.zeros((1, C), jnp.float32),  # ln2
            mat(lk[4], (C, hidden)),      # W1
            vec(lk[5], (1, hidden)),      # b1
            mat(lk[6], (hidden, C)),      # W2
            vec(lk[7], (1, C)),           # b2
        ]
        params["blocks"].append(blk)
    hk_ = jax.random.split(keys[-1], 2)
    params["ln_f_g"] = jnp.ones((1, C), jnp.float32)
    params["ln_f_b"] = jnp.zeros((1, C), jnp.float32)
    params["wlm"] = mat(hk_[0], (C, vocab_size))
    params["blm"] = vec(hk_[1], (1, vocab_size))
    return params


def gpt_forward_pallas(params, input_ids, *, tile_h_target=512, tile_v_target=2048):
    B, T = input_ids.shape
    # Embedding gathers: plain-JAX glue.  Dropout = identity (eval semantics).
    x = params["token_emb"][input_ids] + params["pos_emb"][:T][None, :, :]
    # Inter-layer activations in bf16 (residual / stats stay f32 inside kernels).
    x = x.astype(jnp.bfloat16)
    hidden = params["blocks"][0][8].shape[1]
    tile_h = _tile(hidden, tile_h_target)
    for blk in params["blocks"]:
        x = decoder_block(x, blk, tile_h=tile_h, n_heads=params["n_heads"])
    return final_head(x, params["ln_f_g"], params["ln_f_b"],
                      params["wlm"], params["blm"], tile_v_target=tile_v_target)


# pure-JAX f32 reference for correctness checking (same weight layout)
def gpt_forward_ref(params, input_ids):
    H = params["n_heads"]
    B, T = input_ids.shape
    x = params["token_emb"][input_ids] + params["pos_emb"][:T][None, :, :]

    def ln(v, g, b):
        mu = v.mean(-1, keepdims=True)
        var = ((v - mu) ** 2).mean(-1, keepdims=True)
        return (v - mu) / jnp.sqrt(var + 1e-5) * g + b

    f32 = lambda a: a.astype(jnp.float32)
    causal = jnp.tril(jnp.ones((T, T), bool))
    for blk in params["blocks"]:
        (g1, b1_, wqkv, bqkv, wo, bo, g2, b2_, w1, b1h, w2, b2h) = blk
        C = x.shape[-1]
        dh = C // H
        h = ln(x, g1, b1_)
        qkv = (h @ f32(wqkv) + bqkv).reshape(B, T, H, 3 * dh)
        q, k, v = qkv[..., :dh], qkv[..., dh:2 * dh], qkv[..., 2 * dh:]
        s = jnp.einsum("bthd,bshd->bhts", q, k) * dh ** -0.5
        s = jnp.where(causal, s, -jnp.inf)
        p = jax.nn.softmax(s, axis=-1)
        o = jnp.einsum("bhts,bshd->bthd", p, v).reshape(B, T, C)
        x = x + (o @ f32(wo) + bo)
        h2 = ln(x, g2, b2_)
        ff = jax.nn.gelu(h2 @ f32(w1) + b1h, approximate=False)
        x = x + ff @ f32(w2) + b2h
    h = ln(x, params["ln_f_g"], params["ln_f_b"])
    return h @ f32(params["wlm"]) + params["blm"]


# ----------------------------------------------------------------------------

if __name__ == "__main__":
    vocab_size = 300     # deliberately NOT a multiple of 128 -> exercises vocab padding
    d_model = 128        # matches module default; (T, C) = (8, 128) is vreg-aligned
    n_heads = 4
    num_layers = 2
    max_len = 16
    B, T = 2, 8

    key = jax.random.PRNGKey(0)
    pkey, dkey = jax.random.split(key)
    params = init_params(pkey, vocab_size, d_model, n_heads, num_layers, max_len)
    input_ids = jax.random.randint(dkey, (B, T), 0, vocab_size, dtype=jnp.int32)

    # tile_h_target=256 at hidden=512 gives two hidden tiles so the reduction /
    # accumulator path is exercised at toy scale; production uses 512-1024.
    logits = gpt_forward_pallas(params, input_ids,
                                tile_h_target=256, tile_v_target=2048)
    logits = jax.block_until_ready(logits)
    assert logits.shape == (B, T, vocab_size)

    ref = gpt_forward_ref(params, input_ids)
    err = float(jnp.max(jnp.abs(logits - ref)))
    # bf16 MXU operands + bf16 inter-layer activations + approx softmax reciprocal
    # vs. exact-f32 reference -> loose tolerance.
    assert err < 5e-2, f"mismatch vs reference: max abs err {err}"

    print("KERNEL_OK")
</pallas_src>

<mosaic_0001>
module attributes {stable_mosaic.version = 11 : i64} {
  func.func @decoder_block_kernel(%arg0: i32, %arg1: i32, %arg2: memref<1x8x128xbf16, #tpu.memory_space<vmem>>, %arg3: memref<1x128xf32, #tpu.memory_space<vmem>>, %arg4: memref<1x128xf32, #tpu.memory_space<vmem>>, %arg5: memref<128x384xbf16, #tpu.memory_space<vmem>>, %arg6: memref<1x384xf32, #tpu.memory_space<vmem>>, %arg7: memref<128x128xbf16, #tpu.memory_space<vmem>>, %arg8: memref<1x128xf32, #tpu.memory_space<vmem>>, %arg9: memref<1x128xf32, #tpu.memory_space<vmem>>, %arg10: memref<1x128xf32, #tpu.memory_space<vmem>>, %arg11: memref<128x256xbf16, #tpu.memory_space<vmem>>, %arg12: memref<1x256xf32, #tpu.memory_space<vmem>>, %arg13: memref<256x128xbf16, #tpu.memory_space<vmem>>, %arg14: memref<1x128xf32, #tpu.memory_space<vmem>>, %arg15: memref<1x8x128xbf16, #tpu.memory_space<vmem>>, %arg16: memref<8x128xf32, #tpu.memory_space<vmem>>, %arg17: memref<8x128xbf16, #tpu.memory_space<vmem>>, %arg18: memref<8x128xf32, #tpu.memory_space<vmem>>) attributes {dimension_semantics = [#tpu.dimension_semantics<parallel>, #tpu.dimension_semantics<arbitrary>], iteration_bounds = array<i64: 2, 2>, scalar_prefetch = 0 : i64, scratch_operands = 3 : i64, tpu.core_type = #tpu.core_type<tc>, window_params = [{transform_indices = @transform_0, window_bounds = array<i64: 1, 8, 128>}, {pipeline_mode = #tpu.pipeline_mode<synchronous>, transform_indices = @transform_1, window_bounds = array<i64: 1, 128>}, {pipeline_mode = #tpu.pipeline_mode<synchronous>, transform_indices = @transform_2, window_bounds = array<i64: 1, 128>}, {pipeline_mode = #tpu.pipeline_mode<synchronous>, transform_indices = @transform_3, window_bounds = array<i64: 128, 384>}, {pipeline_mode = #tpu.pipeline_mode<synchronous>, transform_indices = @transform_4, window_bounds = array<i64: 1, 384>}, {pipeline_mode = #tpu.pipeline_mode<synchronous>, transform_indices = @transform_5, window_bounds = array<i64: 128, 128>}, {pipeline_mode = #tpu.pipeline_mode<synchronous>, transform_indices = @transform_6, window_bounds = array<i64: 1, 128>}, {pipeline_mode = #tpu.pipeline_mode<synchronous>, transform_indices = @transform_7, window_bounds = array<i64: 1, 128>}, {pipeline_mode = #tpu.pipeline_mode<synchronous>, transform_indices = @transform_8, window_bounds = array<i64: 1, 128>}, {transform_indices = @transform_9, window_bounds = array<i64: 128, 256>}, {transform_indices = @transform_10, window_bounds = array<i64: 1, 256>}, {transform_indices = @transform_11, window_bounds = array<i64: 256, 128>}, {pipeline_mode = #tpu.pipeline_mode<synchronous>, transform_indices = @transform_12, window_bounds = array<i64: 1, 128>}, {transform_indices = @transform_13, window_bounds = array<i64: 1, 8, 128>}]} {
    %c0_i32 = arith.constant 0 : i32
    %0 = arith.cmpi eq, %arg1, %c0_i32 : i32
    %1 = arith.extui %0 : i1 to i32
    %c0_i32_0 = arith.constant 0 : i32
    %2 = arith.cmpi ne, %1, %c0_i32_0 : i32
    scf.if %2 {
      %c0_17 = arith.constant 0 : index
      %c0_18 = arith.constant 0 : index
      %c0_19 = arith.constant 0 : index
      %26 = vector.load %arg2[%c0_17, %c0_18, %c0_19] : memref<1x8x128xbf16, #tpu.memory_space<vmem>>, vector<1x8x128xbf16>
      %27 = vector.shape_cast %26 : vector<1x8x128xbf16> to vector<8x128xbf16>
      %28 = arith.extf %27 : vector<8x128xbf16> to vector<8x128xf32>
      %c0_20 = arith.constant 0 : index
      %c0_21 = arith.constant 0 : index
      %29 = vector.load %arg3[%c0_20, %c0_21] : memref<1x128xf32, #tpu.memory_space<vmem>>, vector<1x128xf32>
      %c0_22 = arith.constant 0 : index
      %c0_23 = arith.constant 0 : index
      %30 = vector.load %arg4[%c0_22, %c0_23] : memref<1x128xf32, #tpu.memory_space<vmem>>, vector<1x128xf32>
      %cst_24 = arith.constant dense<0.000000e+00> : vector<8xf32>
      %31 = vector.multi_reduction <add>, %28, %cst_24 [1] : vector<8x128xf32> to vector<8xf32>
      %32 = vector.shape_cast %31 : vector<8xf32> to vector<8x1xf32>
      %cst_25 = arith.constant 1.280000e+02 : f32
      %33 = vector.broadcast %cst_25 : f32 to vector<8x1xf32>
      %34 = arith.divf %32, %33 : vector<8x1xf32>
      %35 = vector.broadcast %34 : vector<8x1xf32> to vector<8x128xf32>
      %36 = arith.subf %28, %35 : vector<8x128xf32>
      %37 = arith.mulf %36, %36 : vector<8x128xf32>
      %cst_26 = arith.constant dense<0.000000e+00> : vector<8xf32>
      %38 = vector.multi_reduction <add>, %37, %cst_26 [1] : vector<8x128xf32> to vector<8xf32>
      %39 = vector.shape_cast %38 : vector<8xf32> to vector<8x1xf32>
      %cst_27 = arith.constant 1.280000e+02 : f32
      %40 = vector.broadcast %cst_27 : f32 to vector<8x1xf32>
      %41 = arith.divf %39, %40 : vector<8x1xf32>
      %42 = vector.broadcast %34 : vector<8x1xf32> to vector<8x128xf32>
      %43 = arith.subf %28, %42 : vector<8x128xf32>
      %cst_28 = arith.constant 9.99999974E-6 : f32
      %44 = vector.broadcast %cst_28 : f32 to vector<8x1xf32>
      %45 = arith.addf %41, %44 : vector<8x1xf32>
      %46 = math.rsqrt %45 : vector<8x1xf32>
      %47 = vector.broadcast %46 : vector<8x1xf32> to vector<8x128xf32>
      %48 = arith.mulf %43, %47 : vector<8x128xf32>
      %49 = vector.broadcast %29 : vector<1x128xf32> to vector<8x128xf32>
      %50 = arith.mulf %48, %49 : vector<8x128xf32>
      %51 = vector.broadcast %30 : vector<1x128xf32> to vector<8x128xf32>
      %52 = arith.addf %50, %51 : vector<8x128xf32>
      %53 = arith.truncf %52 : vector<8x128xf32> to vector<8x128xbf16>
      %c0_29 = arith.constant 0 : index
      %c0_30 = arith.constant 0 : index
      %54 = vector.load %arg5[%c0_29, %c0_30] : memref<128x384xbf16, #tpu.memory_space<vmem>>, vector<128x384xbf16>
      %cst_31 = arith.constant dense<0.000000e+00> : vector<8x384xf32>
      %55 = tpu.matmul %53, %54, %cst_31 {dimension_numbers = #tpu.dot_dimension_numbers<[1], [0], [0], [1], [0, 0, 1, 1], [], []>} : vector<8x128xbf16>, vector<128x384xbf16>, vector<8x384xf32> -> vector<8x384xf32>
      %c0_32 = arith.constant 0 : index
      %c0_33 = arith.constant 0 : index
      %56 = vector.load %arg6[%c0_32, %c0_33] : memref<1x384xf32, #tpu.memory_space<vmem>>, vector<1x384xf32>
      %57 = vector.broadcast %56 : vector<1x384xf32> to vector<8x384xf32>
      %58 = arith.addf %55, %57 : vector<8x384xf32>
      %59 = vector.shape_cast %58 : vector<8x384xf32> to vector<8x4x96xf32>
      %60 = tpu.transpose %59, [1, 0, 2] : vector<8x4x96xf32> -> vector<4x8x96xf32>
      %61 = vector.extract_strided_slice %60 {offsets = [0, 0, 0], sizes = [4, 8, 32], strides = [1, 1, 1]} : vector<4x8x96xf32> to vector<4x8x32xf32>
      %cst_34 = arith.constant 0.176776692 : f32
      %62 = vector.broadcast %cst_34 : f32 to vector<4x8x32xf32>
      %63 = arith.mulf %61, %62 : vector<4x8x32xf32>
      %64 = vector.extract_strided_slice %60 {offsets = [0, 0, 32], sizes = [4, 8, 32], strides = [1, 1, 1]} : vector<4x8x96xf32> to vector<4x8x32xf32>
      %65 = vector.extract_strided_slice %60 {offsets = [0, 0, 64], sizes = [4, 8, 32], strides = [1, 1, 1]} : vector<4x8x96xf32> to vector<4x8x32xf32>
      %66 = tpu.iota {dimensions = array<i32: 0>} : vector<8x8xi32>
      %67 = tpu.iota {dimensions = array<i32: 1>} : vector<8x8xi32>
      %68 = arith.cmpi sge, %66, %67 : vector<8x8xi32>
      %69 = arith.truncf %63 : vector<4x8x32xf32> to vector<4x8x32xbf16>
      %70 = arith.truncf %64 : vector<4x8x32xf32> to vector<4x8x32xbf16>
      "tpu.trace_start"() <{level = 10 : i32, message = "htd,hsd->hts"}> : () -> ()
      %cst_35 = arith.constant dense<0.000000e+00> : vector<4x8x8xf32>
      %71 = tpu.matmul %69, %70, %cst_35 {dimension_numbers = #tpu.dot_dimension_numbers<[2], [2], [1], [1], [0, 0, 0, 1, 1, 1], [0], [0]>} : vector<4x8x32xbf16>, vector<4x8x32xbf16>, vector<4x8x8xf32> -> vector<4x8x8xf32>
      "tpu.trace_stop"() : () -> ()
      %72 = vector.shape_cast %68 : vector<8x8xi1> to vector<1x8x8xi1>
      %cst_36 = arith.constant -1.000000e+30 : f32
      %73 = vector.shape_cast %72 : vector<1x8x8xi1> to vector<1x8x8xi1>
      %74 = vector.broadcast %73 : vector<1x8x8xi1> to vector<4x8x8xi1>
      %75 = vector.broadcast %cst_36 : f32 to vector<4x8x8xf32>
      %76 = arith.select %74, %71, %75 : vector<4x8x8xi1>, vector<4x8x8xf32>
      %cst_37 = arith.constant dense<0xFF800000> : vector<4x8xf32>
      %77 = vector.multi_reduction <maximumf>, %76, %cst_37 [2] : vector<4x8x8xf32> to vector<4x8xf32>
      %78 = vector.shape_cast %77 : vector<4x8xf32> to vector<4x8x1xf32>
      %79 = vector.broadcast %78 : vector<4x8x1xf32> to vector<4x8x8xf32>
      %80 = arith.subf %76, %79 : vector<4x8x8xf32>
      %81 = math.exp %80 : vector<4x8x8xf32>
      %cst_38 = arith.constant dense<0.000000e+00> : vector<4x8xf32>
      %82 = vector.multi_reduction <add>, %81, %cst_38 [2] : vector<4x8x8xf32> to vector<4x8xf32>
      %83 = vector.shape_cast %82 : vector<4x8xf32> to vector<4x8x1xf32>
      %84 = tpu.reciprocal %83 {approx = true} : vector<4x8x1xf32> -> vector<4x8x1xf32>
      %85 = vector.broadcast %84 : vector<4x8x1xf32> to vector<4x8x8xf32>
      %86 = arith.mulf %81, %85 : vector<4x8x8xf32>
      %87 = arith.truncf %86 : vector<4x8x8xf32> to vector<4x8x8xbf16>
      %88 = arith.truncf %65 : vector<4x8x32xf32> to vector<4x8x32xbf16>
      "tpu.trace_start"() <{level = 10 : i32, message = "hts,hsd->htd"}> : () -> ()
      %cst_39 = arith.constant dense<0.000000e+00> : vector<4x8x32xf32>
      %89 = tpu.matmul %87, %88, %cst_39 {dimension_numbers = #tpu.dot_dimension_numbers<[2], [1], [1], [2], [0, 0, 0, 1, 1, 2], [0], [0]>} : vector<4x8x8xbf16>, vector<4x8x32xbf16>, vector<4x8x32xf32> -> vector<4x8x32xf32>
      "tpu.trace_stop"() : () -> ()
      %90 = arith.truncf %89 : vector<4x8x32xf32> to vector<4x8x32xbf16>
      %91 = tpu.transpose %90, [1, 0, 2] : vector<4x8x32xbf16> -> vector<8x4x32xbf16>
      %92 = vector.shape_cast %91 : vector<8x4x32xbf16> to vector<8x128xbf16>
      %c0_40 = arith.constant 0 : index
      %c0_41 = arith.constant 0 : index
      %93 = vector.load %arg7[%c0_40, %c0_41] : memref<128x128xbf16, #tpu.memory_space<vmem>>, vector<128x128xbf16>
      %cst_42 = arith.constant dense<0.000000e+00> : vector<8x128xf32>
      %94 = tpu.matmul %92, %93, %cst_42 {dimension_numbers = #tpu.dot_dimension_numbers<[1], [0], [0], [1], [0, 0, 1, 1], [], []>} : vector<8x128xbf16>, vector<128x128xbf16>, vector<8x128xf32> -> vector<8x128xf32>
      %c0_43 = arith.constant 0 : index
      %c0_44 = arith.constant 0 : index
      %95 = vector.load %arg8[%c0_43, %c0_44] : memref<1x128xf32, #tpu.memory_space<vmem>>, vector<1x128xf32>
      %96 = vector.broadcast %95 : vector<1x128xf32> to vector<8x128xf32>
      %97 = arith.addf %94, %96 : vector<8x128xf32>
      %98 = arith.addf %28, %97 : vector<8x128xf32>
      %c0_45 = arith.constant 0 : index
      %c0_46 = arith.constant 0 : index
      %99 = vector.load %arg16[%c0_45, %c0_46] : memref<8x128xf32, #tpu.memory_space<vmem>>, vector<8x128xf32>
      tpu.vector_store %arg16[%c0_45, %c0_46], %98 {strides = array<i32>} : memref<8x128xf32, #tpu.memory_space<vmem>>, vector<8x128xf32>,
      %c0_47 = arith.constant 0 : index
      %c0_48 = arith.constant 0 : index
      %100 = vector.load %arg9[%c0_47, %c0_48] : memref<1x128xf32, #tpu.memory_space<vmem>>, vector<1x128xf32>
      %c0_49 = arith.constant 0 : index
      %c0_50 = arith.constant 0 : index
      %101 = vector.load %arg10[%c0_49, %c0_50] : memref<1x128xf32, #tpu.memory_space<vmem>>, vector<1x128xf32>
      %cst_51 = arith.constant dense<0.000000e+00> : vector<8xf32>
      %102 = vector.multi_reduction <add>, %98, %cst_51 [1] : vector<8x128xf32> to vector<8xf32>
      %103 = vector.shape_cast %102 : vector<8xf32> to vector<8x1xf32>
      %cst_52 = arith.constant 1.280000e+02 : f32
      %104 = vector.broadcast %cst_52 : f32 to vector<8x1xf32>
      %105 = arith.divf %103, %104 : vector<8x1xf32>
      %106 = vector.broadcast %105 : vector<8x1xf32> to vector<8x128xf32>
      %107 = arith.subf %98, %106 : vector<8x128xf32>
      %108 = arith.mulf %107, %107 : vector<8x128xf32>
      %cst_53 = arith.constant dense<0.000000e+00> : vector<8xf32>
      %109 = vector.multi_reduction <add>, %108, %cst_53 [1] : vector<8x128xf32> to vector<8xf32>
      %110 = vector.shape_cast %109 : vector<8xf32> to vector<8x1xf32>
      %cst_54 = arith.constant 1.280000e+02 : f32
      %111 = vector.broadcast %cst_54 : f32 to vector<8x1xf32>
      %112 = arith.divf %110, %111 : vector<8x1xf32>
      %113 = vector.broadcast %105 : vector<8x1xf32> to vector<8x128xf32>
      %114 = arith.subf %98, %113 : vector<8x128xf32>
      %cst_55 = arith.constant 9.99999974E-6 : f32
      %115 = vector.broadcast %cst_55 : f32 to vector<8x1xf32>
      %116 = arith.addf %112, %115 : vector<8x1xf32>
      %117 = math.rsqrt %116 : vector<8x1xf32>
      %118 = vector.broadcast %117 : vector<8x1xf32> to vector<8x128xf32>
      %119 = arith.mulf %114, %118 : vector<8x128xf32>
      %120 = vector.broadcast %100 : vector<1x128xf32> to vector<8x128xf32>
      %121 = arith.mulf %119, %120 : vector<8x128xf32>
      %122 = vector.broadcast %101 : vector<1x128xf32> to vector<8x128xf32>
      %123 = arith.addf %121, %122 : vector<8x128xf32>
      %124 = arith.truncf %123 : vector<8x128xf32> to vector<8x128xbf16>
      %c0_56 = arith.constant 0 : index
      %c0_57 = arith.constant 0 : index
      %125 = vector.load %arg17[%c0_56, %c0_57] : memref<8x128xbf16, #tpu.memory_space<vmem>>, vector<8x128xbf16>
      tpu.vector_store %arg17[%c0_56, %c0_57], %124 {strides = array<i32>} : memref<8x128xbf16, #tpu.memory_space<vmem>>, vector<8x128xbf16>,
      %cst_58 = arith.constant 0.000000e+00 : f32
      %126 = vector.broadcast %cst_58 : f32 to vector<8x128xf32>
      %c0_59 = arith.constant 0 : index
      %c0_60 = arith.constant 0 : index
      %127 = vector.load %arg18[%c0_59, %c0_60] : memref<8x128xf32, #tpu.memory_space<vmem>>, vector<8x128xf32>
      tpu.vector_store %arg18[%c0_59, %c0_60], %126 {strides = array<i32>} : memref<8x128xf32, #tpu.memory_space<vmem>>, vector<8x128xf32>,
    } else {
    }
    %c0 = arith.constant 0 : index
    %c0_1 = arith.constant 0 : index
    %3 = vector.load %arg17[%c0, %c0_1] : memref<8x128xbf16, #tpu.memory_space<vmem>>, vector<8x128xbf16>
    %c0_2 = arith.constant 0 : index
    %c0_3 = arith.constant 0 : index
    %4 = vector.load %arg11[%c0_2, %c0_3] : memref<128x256xbf16, #tpu.memory_space<vmem>>, vector<128x256xbf16>
    %cst = arith.constant dense<0.000000e+00> : vector<8x256xf32>
    %5 = tpu.matmul %3, %4, %cst {dimension_numbers = #tpu.dot_dimension_numbers<[1], [0], [0], [1], [0, 0, 1, 1], [], []>} : vector<8x128xbf16>, vector<128x256xbf16>, vector<8x256xf32> -> vector<8x256xf32>
    %c0_4 = arith.constant 0 : index
    %c0_5 = arith.constant 0 : index
    %6 = vector.load %arg12[%c0_4, %c0_5] : memref<1x256xf32, #tpu.memory_space<vmem>>, vector<1x256xf32>
    %7 = vector.broadcast %6 : vector<1x256xf32> to vector<8x256xf32>
    %8 = arith.addf %5, %7 : vector<8x256xf32>
    %cst_6 = arith.constant 5.000000e-01 : f32
    %9 = vector.broadcast %cst_6 : f32 to vector<8x256xf32>
    %10 = arith.mulf %9, %8 : vector<8x256xf32>
    %cst_7 = arith.constant 0.707106769 : f32
    %11 = vector.broadcast %cst_7 : f32 to vector<8x256xf32>
    %12 = arith.mulf %8, %11 : vector<8x256xf32>
    %13 = math.erf %12 : vector<8x256xf32>
    %cst_8 = arith.constant 1.000000e+00 : f32
    %14 = vector.broadcast %cst_8 : f32 to vector<8x256xf32>
    %15 = arith.addf %14, %13 : vector<8x256xf32>
    %16 = arith.mulf %10, %15 : vector<8x256xf32>
    %c0_9 = arith.constant 0 : index
    %c0_10 = arith.constant 0 : index
    %17 = vector.load %arg18[%c0_9, %c0_10] : memref<8x128xf32, #tpu.memory_space<vmem>>, vector<8x128xf32>
    %18 = arith.truncf %16 : vector<8x256xf32> to vector<8x256xbf16>
    %c0_11 = arith.constant 0 : index
    %c0_12 = arith.constant 0 : index
    %19 = vector.load %arg13[%c0_11, %c0_12] : memref<256x128xbf16, #tpu.memory_space<vmem>>, vector<256x128xbf16>
    %cst_13 = arith.constant dense<0.000000e+00> : vector<8x128xf32>
    %20 = tpu.matmul %18, %19, %cst_13 {dimension_numbers = #tpu.dot_dimension_numbers<[1], [0], [0], [1], [0, 0, 1, 1], [], []>} : vector<8x256xbf16>, vector<256x128xbf16>, vector<8x128xf32> -> vector<8x128xf32>
    %21 = arith.addf %17, %20 : vector<8x128xf32>
    %c0_14 = arith.constant 0 : index
    %c0_15 = arith.constant 0 : index
    %22 = vector.load %arg18[%c0_14, %c0_15] : memref<8x128xf32, #tpu.memory_space<vmem>>, vector<8x128xf32>
    tpu.vector_store %arg18[%c0_14, %c0_15], %21 {strides = array<i32>} : memref<8x128xf32, #tpu.memory_space<vmem>>, vector<8x128xf32>,
    %c1_i32 = arith.constant 1 : i32
    %23 = arith.cmpi eq, %arg1, %c1_i32 : i32
    %24 = arith.extui %23 : i1 to i32
    %c0_i32_16 = arith.constant 0 : i32
    %25 = arith.cmpi ne, %24, %c0_i32_16 : i32
    scf.if %25 {
      %c0_17 = arith.constant 0 : index
      %c0_18 = arith.constant 0 : index
      %26 = vector.load %arg16[%c0_17, %c0_18] : memref<8x128xf32, #tpu.memory_space<vmem>>, vector<8x128xf32>
      %c0_19 = arith.constant 0 : index
      %c0_20 = arith.constant 0 : index
      %27 = vector.load %arg18[%c0_19, %c0_20] : memref<8x128xf32, #tpu.memory_space<vmem>>, vector<8x128xf32>
      %28 = arith.addf %26, %27 : vector<8x128xf32>
      %c0_21 = arith.constant 0 : index
      %c0_22 = arith.constant 0 : index
      %29 = vector.load %arg14[%c0_21, %c0_22] : memref<1x128xf32, #tpu.memory_space<vmem>>, vector<1x128xf32>
      %30 = vector.broadcast %29 : vector<1x128xf32> to vector<8x128xf32>
      %31 = arith.addf %28, %30 : vector<8x128xf32>
      %32 = arith.truncf %31 : vector<8x128xf32> to vector<8x128xbf16>
      %c0_23 = arith.constant 0 : index
      %c0_24 = arith.constant 0 : index
      %c0_25 = arith.constant 0 : index
      %33 = vector.load %arg15[%c0_23, %c0_24, %c0_25] : memref<1x8x128xbf16, #tpu.memory_space<vmem>>, vector<1x8x128xbf16>
      %34 = vector.shape_cast %33 : vector<1x8x128xbf16> to vector<8x128xbf16>
      %35 = vector.shape_cast %32 : vector<8x128xbf16> to vector<1x8x128xbf16>
      tpu.vector_store %arg15[%c0_23, %c0_24, %c0_25], %35 {strides = array<i32>} : memref<1x8x128xbf16, #tpu.memory_space<vmem>>, vector<1x8x128xbf16>,
    } else {
    }
    return
  }
  func.func @transform_0(%arg0: i32, %arg1: i32) -> (i32, i32, i32) {
    %c0_i32 = arith.constant 0 : i32
    %c0_i32_0 = arith.constant 0 : i32
    %c0_i32_1 = arith.constant 0 : i32
    return %arg0, %c0_i32, %c0_i32_0 : i32, i32, i32
  }
  func.func @transform_1(%arg0: i32, %arg1: i32) -> (i32, i32) {
    %c0_i32 = arith.constant 0 : i32
    %c0_i32_0 = arith.constant 0 : i32
    %c0_i32_1 = arith.constant 0 : i32
    return %c0_i32, %c0_i32_0 : i32, i32
  }
  func.func @transform_2(%arg0: i32, %arg1: i32) -> (i32, i32) {
    %c0_i32 = arith.constant 0 : i32
    %c0_i32_0 = arith.constant 0 : i32
    %c0_i32_1 = arith.constant 0 : i32
    return %c0_i32, %c0_i32_0 : i32, i32
  }
  func.func @transform_3(%arg0: i32, %arg1: i32) -> (i32, i32) {
    %c0_i32 = arith.constant 0 : i32
    %c0_i32_0 = arith.constant 0 : i32
    %c0_i32_1 = arith.constant 0 : i32
    return %c0_i32, %c0_i32_0 : i32, i32
  }
  func.func @transform_4(%arg0: i32, %arg1: i32) -> (i32, i32) {
    %c0_i32 = arith.constant 0 : i32
    %c0_i32_0 = arith.constant 0 : i32
    %c0_i32_1 = arith.constant 0 : i32
    return %c0_i32, %c0_i32_0 : i32, i32
  }
  func.func @transform_5(%arg0: i32, %arg1: i32) -> (i32, i32) {
    %c0_i32 = arith.constant 0 : i32
    %c0_i32_0 = arith.constant 0 : i32
    %c0_i32_1 = arith.constant 0 : i32
    return %c0_i32, %c0_i32_0 : i32, i32
  }
  func.func @transform_6(%arg0: i32, %arg1: i32) -> (i32, i32) {
    %c0_i32 = arith.constant 0 : i32
    %c0_i32_0 = arith.constant 0 : i32
    %c0_i32_1 = arith.constant 0 : i32
    return %c0_i32, %c0_i32_0 : i32, i32
  }
  func.func @transform_7(%arg0: i32, %arg1: i32) -> (i32, i32) {
    %c0_i32 = arith.constant 0 : i32
    %c0_i32_0 = arith.constant 0 : i32
    %c0_i32_1 = arith.constant 0 : i32
    return %c0_i32, %c0_i32_0 : i32, i32
  }
  func.func @transform_8(%arg0: i32, %arg1: i32) -> (i32, i32) {
    %c0_i32 = arith.constant 0 : i32
    %c0_i32_0 = arith.constant 0 : i32
    %c0_i32_1 = arith.constant 0 : i32
    return %c0_i32, %c0_i32_0 : i32, i32
  }
  func.func @transform_9(%arg0: i32, %arg1: i32) -> (i32, i32) {
    %c0_i32 = arith.constant 0 : i32
    %c0_i32_0 = arith.constant 0 : i32
    return %c0_i32, %arg1 : i32, i32
  }
  func.func @transform_10(%arg0: i32, %arg1: i32) -> (i32, i32) {
    %c0_i32 = arith.constant 0 : i32
    %c0_i32_0 = arith.constant 0 : i32
    return %c0_i32, %arg1 : i32, i32
  }
  func.func @transform_11(%arg0: i32, %arg1: i32) -> (i32, i32) {
    %c0_i32 = arith.constant 0 : i32
    %c0_i32_0 = arith.constant 0 : i32
    return %arg1, %c0_i32 : i32, i32
  }
  func.func @transform_12(%arg0: i32, %arg1: i32) -> (i32, i32) {
    %c0_i32 = arith.constant 0 : i32
    %c0_i32_0 = arith.constant 0 : i32
    %c0_i32_1 = arith.constant 0 : i32
    return %c0_i32, %c0_i32_0 : i32, i32
  }
  func.func @transform_13(%arg0: i32, %arg1: i32) -> (i32, i32, i32) {
    %c0_i32 = arith.constant 0 : i32
    %c0_i32_0 = arith.constant 0 : i32
    %c0_i32_1 = arith.constant 0 : i32
    return %arg0, %c0_i32, %c0_i32_0 : i32, i32, i32
  }
}

module attributes {stable_mosaic.version = 11 : i64} {
  func.func @decoder_block_kernel(%arg0: i32, %arg1: i32, %arg2: memref<1x8x128xbf16, #tpu.memory_space<vmem>>, %arg3: memref<1x128xf32, #tpu.memory_space<vmem>>, %arg4: memref<1x128xf32, #tpu.memory_space<vmem>>, %arg5: memref<128x384xbf16, #tpu.memory_space<vmem>>, %arg6: memref<1x384xf32, #tpu.memory_space<vmem>>, %arg7: memref<128x128xbf16, #tpu.memory_space<vmem>>, %arg8: memref<1x128xf32, #tpu.memory_space<vmem>>, %arg9: memref<1x128xf32, #tpu.memory_space<vmem>>, %arg10: memref<1x128xf32, #tpu.memory_space<vmem>>, %arg11: memref<128x256xbf16, #tpu.memory_space<vmem>>, %arg12: memref<1x256xf32, #tpu.memory_space<vmem>>, %arg13: memref<256x128xbf16, #tpu.memory_space<vmem>>, %arg14: memref<1x128xf32, #tpu.memory_space<vmem>>, %arg15: memref<1x8x128xbf16, #tpu.memory_space<vmem>>, %arg16: memref<8x128xf32, #tpu.memory_space<vmem>>, %arg17: memref<8x128xbf16, #tpu.memory_space<vmem>>, %arg18: memref<8x128xf32, #tpu.memory_space<vmem>>) attributes {dimension_semantics = [#tpu.dimension_semantics<parallel>, #tpu.dimension_semantics<arbitrary>], iteration_bounds = array<i64: 2, 2>, scalar_prefetch = 0 : i64, scratch_operands = 3 : i64, tpu.core_type = #tpu.core_type<tc>, window_params = [{transform_indices = @transform_0, window_bounds = array<i64: 1, 8, 128>}, {pipeline_mode = #tpu.pipeline_mode<synchronous>, transform_indices = @transform_1, window_bounds = array<i64: 1, 128>}, {pipeline_mode = #tpu.pipeline_mode<synchronous>, transform_indices = @transform_2, window_bounds = array<i64: 1, 128>}, {pipeline_mode = #tpu.pipeline_mode<synchronous>, transform_indices = @transform_3, window_bounds = array<i64: 128, 384>}, {pipeline_mode = #tpu.pipeline_mode<synchronous>, transform_indices = @transform_4, window_bounds = array<i64: 1, 384>}, {pipeline_mode = #tpu.pipeline_mode<synchronous>, transform_indices = @transform_5, window_bounds = array<i64: 128, 128>}, {pipeline_mode = #tpu.pipeline_mode<synchronous>, transform_indices = @transform_6, window_bounds = array<i64: 1, 128>}, {pipeline_mode = #tpu.pipeline_mode<synchronous>, transform_indices = @transform_7, window_bounds = array<i64: 1, 128>}, {pipeline_mode = #tpu.pipeline_mode<synchronous>, transform_indices = @transform_8, window_bounds = array<i64: 1, 128>}, {transform_indices = @transform_9, window_bounds = array<i64: 128, 256>}, {transform_indices = @transform_10, window_bounds = array<i64: 1, 256>}, {transform_indices = @transform_11, window_bounds = array<i64: 256, 128>}, {pipeline_mode = #tpu.pipeline_mode<synchronous>, transform_indices = @transform_12, window_bounds = array<i64: 1, 128>}, {transform_indices = @transform_13, window_bounds = array<i64: 1, 8, 128>}]} {
    %c0_i32 = arith.constant 0 : i32
    %0 = arith.cmpi eq, %arg1, %c0_i32 : i32
    %1 = arith.extui %0 : i1 to i32
    %c0_i32_0 = arith.constant 0 : i32
    %2 = arith.cmpi ne, %1, %c0_i32_0 : i32
    scf.if %2 {
      %c0_17 = arith.constant 0 : index
      %c0_18 = arith.constant 0 : index
      %c0_19 = arith.constant 0 : index
      %26 = vector.load %arg2[%c0_17, %c0_18, %c0_19] : memref<1x8x128xbf16, #tpu.memory_space<vmem>>, vector<1x8x128xbf16>
      %27 = vector.shape_cast %26 : vector<1x8x128xbf16> to vector<8x128xbf16>
      %28 = arith.extf %27 : vector<8x128xbf16> to vector<8x128xf32>
      %c0_20 = arith.constant 0 : index
      %c0_21 = arith.constant 0 : index
      %29 = vector.load %arg3[%c0_20, %c0_21] : memref<1x128xf32, #tpu.memory_space<vmem>>, vector<1x128xf32>
      %c0_22 = arith.constant 0 : index
      %c0_23 = arith.constant 0 : index
      %30 = vector.load %arg4[%c0_22, %c0_23] : memref<1x128xf32, #tpu.memory_space<vmem>>, vector<1x128xf32>
      %cst_24 = arith.constant dense<0.000000e+00> : vector<8xf32>
      %31 = vector.multi_reduction <add>, %28, %cst_24 [1] : vector<8x128xf32> to vector<8xf32>
      %32 = vector.shape_cast %31 : vector<8xf32> to vector<8x1xf32>
      %cst_25 = arith.constant 1.280000e+02 : f32
      %33 = vector.broadcast %cst_25 : f32 to vector<8x1xf32>
      %34 = arith.divf %32, %33 : vector<8x1xf32>
      %35 = vector.broadcast %34 : vector<8x1xf32> to vector<8x128xf32>
      %36 = arith.subf %28, %35 : vector<8x128xf32>
      %37 = arith.mulf %36, %36 : vector<8x128xf32>
      %cst_26 = arith.constant dense<0.000000e+00> : vector<8xf32>
      %38 = vector.multi_reduction <add>, %37, %cst_26 [1] : vector<8x128xf32> to vector<8xf32>
      %39 = vector.shape_cast %38 : vector<8xf32> to vector<8x1xf32>
      %cst_27 = arith.constant 1.280000e+02 : f32
      %40 = vector.broadcast %cst_27 : f32 to vector<8x1xf32>
      %41 = arith.divf %39, %40 : vector<8x1xf32>
      %42 = vector.broadcast %34 : vector<8x1xf32> to vector<8x128xf32>
      %43 = arith.subf %28, %42 : vector<8x128xf32>
      %cst_28 = arith.constant 9.99999974E-6 : f32
      %44 = vector.broadcast %cst_28 : f32 to vector<8x1xf32>
      %45 = arith.addf %41, %44 : vector<8x1xf32>
      %46 = math.rsqrt %45 : vector<8x1xf32>
      %47 = vector.broadcast %46 : vector<8x1xf32> to vector<8x128xf32>
      %48 = arith.mulf %43, %47 : vector<8x128xf32>
      %49 = vector.broadcast %29 : vector<1x128xf32> to vector<8x128xf32>
      %50 = arith.mulf %48, %49 : vector<8x128xf32>
      %51 = vector.broadcast %30 : vector<1x128xf32> to vector<8x128xf32>
      %52 = arith.addf %50, %51 : vector<8x128xf32>
      %53 = arith.truncf %52 : vector<8x128xf32> to vector<8x128xbf16>
      %c0_29 = arith.constant 0 : index
      %c0_30 = arith.constant 0 : index
      %54 = vector.load %arg5[%c0_29, %c0_30] : memref<128x384xbf16, #tpu.memory_space<vmem>>, vector<128x384xbf16>
      %cst_31 = arith.constant dense<0.000000e+00> : vector<8x384xf32>
      %55 = tpu.matmul %53, %54, %cst_31 {dimension_numbers = #tpu.dot_dimension_numbers<[1], [0], [0], [1], [0, 0, 1, 1], [], []>} : vector<8x128xbf16>, vector<128x384xbf16>, vector<8x384xf32> -> vector<8x384xf32>
      %c0_32 = arith.constant 0 : index
      %c0_33 = arith.constant 0 : index
      %56 = vector.load %arg6[%c0_32, %c0_33] : memref<1x384xf32, #tpu.memory_space<vmem>>, vector<1x384xf32>
      %57 = vector.broadcast %56 : vector<1x384xf32> to vector<8x384xf32>
      %58 = arith.addf %55, %57 : vector<8x384xf32>
      %59 = vector.shape_cast %58 : vector<8x384xf32> to vector<8x4x96xf32>
      %60 = tpu.transpose %59, [1, 0, 2] : vector<8x4x96xf32> -> vector<4x8x96xf32>
      %61 = vector.extract_strided_slice %60 {offsets = [0, 0, 0], sizes = [4, 8, 32], strides = [1, 1, 1]} : vector<4x8x96xf32> to vector<4x8x32xf32>
      %cst_34 = arith.constant 0.176776692 : f32
      %62 = vector.broadcast %cst_34 : f32 to vector<4x8x32xf32>
      %63 = arith.mulf %61, %62 : vector<4x8x32xf32>
      %64 = vector.extract_strided_slice %60 {offsets = [0, 0, 32], sizes = [4, 8, 32], strides = [1, 1, 1]} : vector<4x8x96xf32> to vector<4x8x32xf32>
      %65 = vector.extract_strided_slice %60 {offsets = [0, 0, 64], sizes = [4, 8, 32], strides = [1, 1, 1]} : vector<4x8x96xf32> to vector<4x8x32xf32>
      %66 = tpu.iota {dimensions = array<i32: 0>} : vector<8x8xi32>
      %67 = tpu.iota {dimensions = array<i32: 1>} : vector<8x8xi32>
      %68 = arith.cmpi sge, %66, %67 : vector<8x8xi32>
      %69 = arith.truncf %63 : vector<4x8x32xf32> to vector<4x8x32xbf16>
      %70 = arith.truncf %64 : vector<4x8x32xf32> to vector<4x8x32xbf16>
      "tpu.trace_start"() <{level = 10 : i32, message = "htd,hsd->hts"}> : () -> ()
      %cst_35 = arith.constant dense<0.000000e+00> : vector<4x8x8xf32>
      %71 = tpu.matmul %69, %70, %cst_35 {dimension_numbers = #tpu.dot_dimension_numbers<[2], [2], [1], [1], [0, 0, 0, 1, 1, 1], [0], [0]>} : vector<4x8x32xbf16>, vector<4x8x32xbf16>, vector<4x8x8xf32> -> vector<4x8x8xf32>
      "tpu.trace_stop"() : () -> ()
      %72 = vector.shape_cast %68 : vector<8x8xi1> to vector<1x8x8xi1>
      %cst_36 = arith.constant -1.000000e+30 : f32
      %73 = vector.shape_cast %72 : vector<1x8x8xi1> to vector<1x8x8xi1>
      %74 = vector.broadcast %73 : vector<1x8x8xi1> to vector<4x8x8xi1>
      %75 = vector.broadcast %cst_36 : f32 to vector<4x8x8xf32>
      %76 = arith.select %74, %71, %75 : vector<4x8x8xi1>, vector<4x8x8xf32>
      %cst_37 = arith.constant dense<0xFF800000> : vector<4x8xf32>
      %77 = vector.multi_reduction <maximumf>, %76, %cst_37 [2] : vector<4x8x8xf32> to vector<4x8xf32>
      %78 = vector.shape_cast %77 : vector<4x8xf32> to vector<4x8x1xf32>
      %79 = vector.broadcast %78 : vector<4x8x1xf32> to vector<4x8x8xf32>
      %80 = arith.subf %76, %79 : vector<4x8x8xf32>
      %81 = math.exp %80 : vector<4x8x8xf32>
      %cst_38 = arith.constant dense<0.000000e+00> : vector<4x8xf32>
      %82 = vector.multi_reduction <add>, %81, %cst_38 [2] : vector<4x8x8xf32> to vector<4x8xf32>
      %83 = vector.shape_cast %82 : vector<4x8xf32> to vector<4x8x1xf32>
      %84 = tpu.reciprocal %83 {approx = true} : vector<4x8x1xf32> -> vector<4x8x1xf32>
      %85 = vector.broadcast %84 : vector<4x8x1xf32> to vector<4x8x8xf32>
      %86 = arith.mulf %81, %85 : vector<4x8x8xf32>
      %87 = arith.truncf %86 : vector<4x8x8xf32> to vector<4x8x8xbf16>
      %88 = arith.truncf %65 : vector<4x8x32xf32> to vector<4x8x32xbf16>
      "tpu.trace_start"() <{level = 10 : i32, message = "hts,hsd->htd"}> : () -> ()
      %cst_39 = arith.constant dense<0.000000e+00> : vector<4x8x32xf32>
      %89 = tpu.matmul %87, %88, %cst_39 {dimension_numbers = #tpu.dot_dimension_numbers<[2], [1], [1], [2], [0, 0, 0, 1, 1, 2], [0], [0]>} : vector<4x8x8xbf16>, vector<4x8x32xbf16>, vector<4x8x32xf32> -> vector<4x8x32xf32>
      "tpu.trace_stop"() : () -> ()
      %90 = arith.truncf %89 : vector<4x8x32xf32> to vector<4x8x32xbf16>
      %91 = tpu.transpose %90, [1, 0, 2] : vector<4x8x32xbf16> -> vector<8x4x32xbf16>
      %92 = vector.shape_cast %91 : vector<8x4x32xbf16> to vector<8x128xbf16>
      %c0_40 = arith.constant 0 : index
      %c0_41 = arith.constant 0 : index
      %93 = vector.load %arg7[%c0_40, %c0_41] : memref<128x128xbf16, #tpu.memory_space<vmem>>, vector<128x128xbf16>
      %cst_42 = arith.constant dense<0.000000e+00> : vector<8x128xf32>
      %94 = tpu.matmul %92, %93, %cst_42 {dimension_numbers = #tpu.dot_dimension_numbers<[1], [0], [0], [1], [0, 0, 1, 1], [], []>} : vector<8x128xbf16>, vector<128x128xbf16>, vector<8x128xf32> -> vector<8x128xf32>
      %c0_43 = arith.constant 0 : index
      %c0_44 = arith.constant 0 : index
      %95 = vector.load %arg8[%c0_43, %c0_44] : memref<1x128xf32, #tpu.memory_space<vmem>>, vector<1x128xf32>
      %96 = vector.broadcast %95 : vector<1x128xf32> to vector<8x128xf32>
      %97 = arith.addf %94, %96 : vector<8x128xf32>
      %98 = arith.addf %28, %97 : vector<8x128xf32>
      %c0_45 = arith.constant 0 : index
      %c0_46 = arith.constant 0 : index
      %99 = vector.load %arg16[%c0_45, %c0_46] : memref<8x128xf32, #tpu.memory_space<vmem>>, vector<8x128xf32>
      tpu.vector_store %arg16[%c0_45, %c0_46], %98 {strides = array<i32>} : memref<8x128xf32, #tpu.memory_space<vmem>>, vector<8x128xf32>,
      %c0_47 = arith.constant 0 : index
      %c0_48 = arith.constant 0 : index
      %100 = vector.load %arg9[%c0_47, %c0_48] : memref<1x128xf32, #tpu.memory_space<vmem>>, vector<1x128xf32>
      %c0_49 = arith.constant 0 : index
      %c0_50 = arith.constant 0 : index
      %101 = vector.load %arg10[%c0_49, %c0_50] : memref<1x128xf32, #tpu.memory_space<vmem>>, vector<1x128xf32>
      %cst_51 = arith.constant dense<0.000000e+00> : vector<8xf32>
      %102 = vector.multi_reduction <add>, %98, %cst_51 [1] : vector<8x128xf32> to vector<8xf32>
      %103 = vector.shape_cast %102 : vector<8xf32> to vector<8x1xf32>
      %cst_52 = arith.constant 1.280000e+02 : f32
      %104 = vector.broadcast %cst_52 : f32 to vector<8x1xf32>
      %105 = arith.divf %103, %104 : vector<8x1xf32>
      %106 = vector.broadcast %105 : vector<8x1xf32> to vector<8x128xf32>
      %107 = arith.subf %98, %106 : vector<8x128xf32>
      %108 = arith.mulf %107, %107 : vector<8x128xf32>
      %cst_53 = arith.constant dense<0.000000e+00> : vector<8xf32>
      %109 = vector.multi_reduction <add>, %108, %cst_53 [1] : vector<8x128xf32> to vector<8xf32>
      %110 = vector.shape_cast %109 : vector<8xf32> to vector<8x1xf32>
      %cst_54 = arith.constant 1.280000e+02 : f32
      %111 = vector.broadcast %cst_54 : f32 to vector<8x1xf32>
      %112 = arith.divf %110, %111 : vector<8x1xf32>
      %113 = vector.broadcast %105 : vector<8x1xf32> to vector<8x128xf32>
      %114 = arith.subf %98, %113 : vector<8x128xf32>
      %cst_55 = arith.constant 9.99999974E-6 : f32
      %115 = vector.broadcast %cst_55 : f32 to vector<8x1xf32>
      %116 = arith.addf %112, %115 : vector<8x1xf32>
      %117 = math.rsqrt %116 : vector<8x1xf32>
      %118 = vector.broadcast %117 : vector<8x1xf32> to vector<8x128xf32>
      %119 = arith.mulf %114, %118 : vector<8x128xf32>
      %120 = vector.broadcast %100 : vector<1x128xf32> to vector<8x128xf32>
      %121 = arith.mulf %119, %120 : vector<8x128xf32>
      %122 = vector.broadcast %101 : vector<1x128xf32> to vector<8x128xf32>
      %123 = arith.addf %121, %122 : vector<8x128xf32>
      %124 = arith.truncf %123 : vector<8x128xf32> to vector<8x128xbf16>
      %c0_56 = arith.constant 0 : index
      %c0_57 = arith.constant 0 : index
      %125 = vector.load %arg17[%c0_56, %c0_57] : memref<8x128xbf16, #tpu.memory_space<vmem>>, vector<8x128xbf16>
      tpu.vector_store %arg17[%c0_56, %c0_57], %124 {strides = array<i32>} : memref<8x128xbf16, #tpu.memory_space<vmem>>, vector<8x128xbf16>,
      %cst_58 = arith.constant 0.000000e+00 : f32
      %126 = vector.broadcast %cst_58 : f32 to vector<8x128xf32>
      %c0_59 = arith.constant 0 : index
      %c0_60 = arith.constant 0 : index
      %127 = vector.load %arg18[%c0_59, %c0_60] : memref<8x128xf32, #tpu.memory_space<vmem>>, vector<8x128xf32>
      tpu.vector_store %arg18[%c0_59, %c0_60], %126 {strides = array<i32>} : memref<8x128xf32, #tpu.memory_space<vmem>>, vector<8x128xf32>,
    } else {
    }
    %c0 = arith.constant 0 : index
    %c0_1 = arith.constant 0 : index
    %3 = vector.load %arg17[%c0, %c0_1] : memref<8x128xbf16, #tpu.memory_space<vmem>>, vector<8x128xbf16>
    %c0_2 = arith.constant 0 : index
    %c0_3 = arith.constant 0 : index
    %4 = vector.load %arg11[%c0_2, %c0_3] : memref<128x256xbf16, #tpu.memory_space<vmem>>, vector<128x256xbf16>
    %cst = arith.constant dense<0.000000e+00> : vector<8x256xf32>
    %5 = tpu.matmul %3, %4, %cst {dimension_numbers = #tpu.dot_dimension_numbers<[1], [0], [0], [1], [0, 0, 1, 1], [], []>} : vector<8x128xbf16>, vector<128x256xbf16>, vector<8x256xf32> -> vector<8x256xf32>
    %c0_4 = arith.constant 0 : index
    %c0_5 = arith.constant 0 : index
    %6 = vector.load %arg12[%c0_4, %c0_5] : memref<1x256xf32, #tpu.memory_space<vmem>>, vector<1x256xf32>
    %7 = vector.broadcast %6 : vector<1x256xf32> to vector<8x256xf32>
    %8 = arith.addf %5, %7 : vector<8x256xf32>
    %cst_6 = arith.constant 5.000000e-01 : f32
    %9 = vector.broadcast %cst_6 : f32 to vector<8x256xf32>
    %10 = arith.mulf %9, %8 : vector<8x256xf32>
    %cst_7 = arith.constant 0.707106769 : f32
    %11 = vector.broadcast %cst_7 : f32 to vector<8x256xf32>
    %12 = arith.mulf %8, %11 : vector<8x256xf32>
    %13 = math.erf %12 : vector<8x256xf32>
    %cst_8 = arith.constant 1.000000e+00 : f32
    %14 = vector.broadcast %cst_8 : f32 to vector<8x256xf32>
    %15 = arith.addf %14, %13 : vector<8x256xf32>
    %16 = arith.mulf %10, %15 : vector<8x256xf32>
    %c0_9 = arith.constant 0 : index
    %c0_10 = arith.constant 0 : index
    %17 = vector.load %arg18[%c0_9, %c0_10] : memref<8x128xf32, #tpu.memory_space<vmem>>, vector<8x128xf32>
    %18 = arith.truncf %16 : vector<8x256xf32> to vector<8x256xbf16>
    %c0_11 = arith.constant 0 : index
    %c0_12 = arith.constant 0 : index
    %19 = vector.load %arg13[%c0_11, %c0_12] : memref<256x128xbf16, #tpu.memory_space<vmem>>, vector<256x128xbf16>
    %cst_13 = arith.constant dense<0.000000e+00> : vector<8x128xf32>
    %20 = tpu.matmul %18, %19, %cst_13 {dimension_numbers = #tpu.dot_dimension_numbers<[1], [0], [0], [1], [0, 0, 1, 1], [], []>} : vector<8x256xbf16>, vector<256x128xbf16>, vector<8x128xf32> -> vector<8x128xf32>
    %21 = arith.addf %17, %20 : vector<8x128xf32>
    %c0_14 = arith.constant 0 : index
    %c0_15 = arith.constant 0 : index
    %22 = vector.load %arg18[%c0_14, %c0_15] : memref<8x128xf32, #tpu.memory_space<vmem>>, vector<8x128xf32>
    tpu.vector_store %arg18[%c0_14, %c0_15], %21 {strides = array<i32>} : memref<8x128xf32, #tpu.memory_space<vmem>>, vector<8x128xf32>,
    %c1_i32 = arith.constant 1 : i32
    %23 = arith.cmpi eq, %arg1, %c1_i32 : i32
    %24 = arith.extui %23 : i1 to i32
    %c0_i32_16 = arith.constant 0 : i32
    %25 = arith.cmpi ne, %24, %c0_i32_16 : i32
    scf.if %25 {
      %c0_17 = arith.constant 0 : index
      %c0_18 = arith.constant 0 : index
      %26 = vector.load %arg16[%c0_17, %c0_18] : memref<8x128xf32, #tpu.memory_space<vmem>>, vector<8x128xf32>
      %c0_19 = arith.constant 0 : index
      %c0_20 = arith.constant 0 : index
      %27 = vector.load %arg18[%c0_19, %c0_20] : memref<8x128xf32, #tpu.memory_space<vmem>>, vector<8x128xf32>
      %28 = arith.addf %26, %27 : vector<8x128xf32>
      %c0_21 = arith.constant 0 : index
      %c0_22 = arith.constant 0 : index
      %29 = vector.load %arg14[%c0_21, %c0_22] : memref<1x128xf32, #tpu.memory_space<vmem>>, vector<1x128xf32>
      %30 = vector.broadcast %29 : vector<1x128xf32> to vector<8x128xf32>
      %31 = arith.addf %28, %30 : vector<8x128xf32>
      %32 = arith.truncf %31 : vector<8x128xf32> to vector<8x128xbf16>
      %c0_23 = arith.constant 0 : index
      %c0_24 = arith.constant 0 : index
      %c0_25 = arith.constant 0 : index
      %33 = vector.load %arg15[%c0_23, %c0_24, %c0_25] : memref<1x8x128xbf16, #tpu.memory_space<vmem>>, vector<1x8x128xbf16>
      %34 = vector.shape_cast %33 : vector<1x8x128xbf16> to vector<8x128xbf16>
      %35 = vector.shape_cast %32 : vector<8x128xbf16> to vector<1x8x128xbf16>
      tpu.vector_store %arg15[%c0_23, %c0_24, %c0_25], %35 {strides = array<i32>} : memref<1x8x128xbf16, #tpu.memory_space<vmem>>, vector<1x8x128xbf16>,
    } else {
    }
    return
  }
  func.func @transform_0(%arg0: i32, %arg1: i32) -> (i32, i32, i32) {
    %c0_i32 = arith.constant 0 : i32
    %c0_i32_0 = arith.constant 0 : i32
    %c0_i32_1 = arith.constant 0 : i32
    return %arg0, %c0_i32, %c0_i32_0 : i32, i32, i32
  }
  func.func @transform_1(%arg0: i32, %arg1: i32) -> (i32, i32) {
    %c0_i32 = arith.constant 0 : i32
    %c0_i32_0 = arith.constant 0 : i32
    %c0_i32_1 = arith.constant 0 : i32
    return %c0_i32, %c0_i32_0 : i32, i32
  }
  func.func @transform_2(%arg0: i32, %arg1: i32) -> (i32, i32) {
    %c0_i32 = arith.constant 0 : i32
    %c0_i32_0 = arith.constant 0 : i32
    %c0_i32_1 = arith.constant 0 : i32
    return %c0_i32, %c0_i32_0 : i32, i32
  }
  func.func @transform_3(%arg0: i32, %arg1: i32) -> (i32, i32) {
    %c0_i32 = arith.constant 0 : i32
    %c0_i32_0 = arith.constant 0 : i32
    %c0_i32_1 = arith.constant 0 : i32
    return %c0_i32, %c0_i32_0 : i32, i32
  }
  func.func @transform_4(%arg0: i32, %arg1: i32) -> (i32, i32) {
    %c0_i32 = arith.constant 0 : i32
    %c0_i32_0 = arith.constant 0 : i32
    %c0_i32_1 = arith.constant 0 : i32
    return %c0_i32, %c0_i32_0 : i32, i32
  }
  func.func @transform_5(%arg0: i32, %arg1: i32) -> (i32, i32) {
    %c0_i32 = arith.constant 0 : i32
    %c0_i32_0 = arith.constant 0 : i32
    %c0_i32_1 = arith.constant 0 : i32
    return %c0_i32, %c0_i32_0 : i32, i32
  }
  func.func @transform_6(%arg0: i32, %arg1: i32) -> (i32, i32) {
    %c0_i32 = arith.constant 0 : i32
    %c0_i32_0 = arith.constant 0 : i32
    %c0_i32_1 = arith.constant 0 : i32
    return %c0_i32, %c0_i32_0 : i32, i32
  }
  func.func @transform_7(%arg0: i32, %arg1: i32) -> (i32, i32) {
    %c0_i32 = arith.constant 0 : i32
    %c0_i32_0 = arith.constant 0 : i32
    %c0_i32_1 = arith.constant 0 : i32
    return %c0_i32, %c0_i32_0 : i32, i32
  }
  func.func @transform_8(%arg0: i32, %arg1: i32) -> (i32, i32) {
    %c0_i32 = arith.constant 0 : i32
    %c0_i32_0 = arith.constant 0 : i32
    %c0_i32_1 = arith.constant 0 : i32
    return %c0_i32, %c0_i32_0 : i32, i32
  }
  func.func @transform_9(%arg0: i32, %arg1: i32) -> (i32, i32) {
    %c0_i32 = arith.constant 0 : i32
    %c0_i32_0 = arith.constant 0 : i32
    return %c0_i32, %arg1 : i32, i32
  }
  func.func @transform_10(%arg0: i32, %arg1: i32) -> (i32, i32) {
    %c0_i32 = arith.constant 0 : i32
    %c0_i32_0 = arith.constant 0 : i32
    return %c0_i32, %arg1 : i32, i32
  }
  func.func @transform_11(%arg0: i32, %arg1: i32) -> (i32, i32) {
    %c0_i32 = arith.constant 0 : i32
    %c0_i32_0 = arith.constant 0 : i32
    return %arg1, %c0_i32 : i32, i32
  }
  func.func @transform_12(%arg0: i32, %arg1: i32) -> (i32, i32) {
    %c0_i32 = arith.constant 0 : i32
    %c0_i32_0 = arith.constant 0 : i32
    %c0_i32_1 = arith.constant 0 : i32
    return %c0_i32, %c0_i32_0 : i32, i32
  }
  func.func @transform_13(%arg0: i32, %arg1: i32) -> (i32, i32, i32) {
    %c0_i32 = arith.constant 0 : i32
    %c0_i32_0 = arith.constant 0 : i32
    %c0_i32_1 = arith.constant 0 : i32
    return %arg0, %c0_i32, %c0_i32_0 : i32, i32, i32
  }
}

</mosaic_0001>

<llo_original>
// kernel: tpu_custom_call.1
$region0: #{tpu_custom_call.1}
  #allocation0 [shape = 'u32[]', space=smem, size = 0x4, offset = 0x4, fixed_abs, tag = 'smem constant byte address 0x4 - core index']
  #allocation1 [shape = 'u32[72,128]{1,0:T(1,128)}', space=vmem, size = 0x9000, scoped, tag = 'internal scratch']
  #allocation2 [shape = 'f32[8,128]{1,0:T(8,128)}', space=vmem, size = 0x1000, scoped, tag = 'scratch operand']
  #allocation3 [shape = 'bf16[8,128]{1,0:T(8,128)(2,1)}', space=vmem, size = 0x800, scoped, tag = 'scratch operand']
  #allocation4 [shape = 'f32[8,128]{1,0:T(8,128)}', space=vmem, size = 0x1000, scoped, tag = 'scratch operand']
  %s0 = inlined_call_operand.hbm [shape: bf16[2,8,128], index: 0, kind: input, shape index: {}]
  %s1 = inlined_call_operand.hbm [shape: f32[1,128], index: 1, kind: input, shape index: {}]
  %s2 = inlined_call_operand.hbm [shape: f32[1,128], index: 2, kind: input, shape index: {}]
  %s3 = inlined_call_operand.hbm [shape: bf16[128,384], index: 3, kind: input, shape index: {}]
  %s4 = inlined_call_operand.vmem [shape: f32[1,384], index: 4, kind: input, shape index: {}]
  %s5 = inlined_call_operand.hbm [shape: bf16[128,128], index: 5, kind: input, shape index: {}]
  %s6 = inlined_call_operand.hbm [shape: f32[1,128], index: 6, kind: input, shape index: {}]
  %s7 = inlined_call_operand.hbm [shape: f32[1,128], index: 7, kind: input, shape index: {}]
  %s8 = inlined_call_operand.hbm [shape: f32[1,128], index: 8, kind: input, shape index: {}]
  %s9 = inlined_call_operand.hbm [shape: bf16[128,512], index: 9, kind: input, shape index: {}]
  %s10 = inlined_call_operand.vmem [shape: f32[1,512], index: 10, kind: input, shape index: {}]
  %s11 = inlined_call_operand.hbm [shape: bf16[512,128], index: 11, kind: input, shape index: {}]
  %s12 = inlined_call_operand.vmem [shape: f32[1,128], index: 12, kind: input, shape index: {}]
  %s13 = inlined_call_operand.hbm [shape: bf16[2,8,128], index: 13, kind: output, shape index: {}]
  %s14 = sld [smem:[#allocation0]]
  $region133: #{tpu_custom_call.1} parent=0
    _
  %s16 = ssub.s32 1, %s14
  %s17 = scalar_select 0, %s16, %s14
  $region1: #{tpu_custom_call.1} parent=0
    #allocation5 [shape = 'u8[4096]{0}', space=vmem, size = 0x1000, scoped, tag = 'input window, operand 0']
    #allocation6 [shape = 's32[2]{0}', space=sflag, size = 0x8, scoped, tag = 'scoped memory for tpu_custom_call.1']
    #allocation7 [shape = 's32[2]{0}', space=sflag, size = 0x8, scoped, tag = 'scoped memory for tpu_custom_call.1']
    #allocation8 [shape = 'u8[512]{0}', space=vmem, size = 0x400, scoped, tag = 'input window, operand 1, single buffered']
    #allocation9 [shape = 's32[1]{0}', space=sflag, size = 0x4, scoped, tag = 'scoped memory for tpu_custom_call.1']
    #allocation10 [shape = 'u8[512]{0}', space=vmem, size = 0x400, scoped, tag = 'input window, operand 2, single buffered']
    #allocation11 [shape = 'u8[98304]{0}', space=vmem, size = 0x18000, scoped, tag = 'input window, operand 3, single buffered']
    #allocation12 [shape = 's32[1]{0}', space=sflag, size = 0x4, scoped, tag = 'scoped memory for tpu_custom_call.1']
    #allocation13 [shape = 'u8[32768]{0}', space=vmem, size = 0x8000, scoped, tag = 'input window, operand 5, single buffered']
    #allocation14 [shape = 'u8[512]{0}', space=vmem, size = 0x400, scoped, tag = 'input window, operand 6, single buffered']
    #allocation15 [shape = 's32[1]{0}', space=sflag, size = 0x4, scoped, tag = 'scoped memory for tpu_custom_call.1']
    #allocation16 [shape = 'u8[512]{0}', space=vmem, size = 0x400, scoped, tag = 'input window, operand 7, single buffered']
    #allocation17 [shape = 'u8[512]{0}', space=vmem, size = 0x400, scoped, tag = 'input window, operand 8, single buffered']
    #allocation18 [shape = 's32[1]{0}', space=sflag, size = 0x4, scoped, tag = 'scoped memory for tpu_custom_call.1']
    #allocation19 [shape = 'u8[131072]{0}', space=vmem, size = 0x20000, scoped, tag = 'input window, operand 9']
    #allocation20 [shape = 'u8[131072]{0}', space=vmem, size = 0x20000, scoped, tag = 'input window, operand 11']
    #allocation21 [shape = 'u8[4096]{0}', space=vmem, size = 0x1000, scoped, tag = 'output window, operand 0']
    %18 = vsyncpa [#allocation6], 0
    %s19 = scalar_lea.sflag [#allocation6], 1
    %20 = vsyncpa %s19, 0
    %21 = vsyncpa [#allocation9], 0
    %22 = vsyncpa [#allocation12], 0
    %23 = vsyncpa [#allocation15], 0
    %24 = vsyncpa [#allocation18], 0
    %25 = vsyncpa [#allocation7], 0
    %s26 = scalar_lea.sflag [#allocation7], 1
    %27 = vsyncpa %s26, 0
    loop: start=0, step=1, limit=6
    $region2: #{tpu_custom_call.1} parent=1 // loop_pre_header
      _
    $region3: #{tpu_custom_call.1} parent=1 // loop_header
      %s29 = sphi 0, %s33
      %p30 = scmp.ge.s32.totalorder %s29, 6
      %s36 = sphi 0, %s48
      %s37 = sphi 0, %s44
      %s38 = sphi 0, %s36
      %s39 = sphi 0, %s37
      %s40 = sphi 0, %s38
      %s41 = sphi 0, %s39
      %s51 = sphi 0, %s53
      %s54 = sphi 0, %s51
      %s55 = sphi 0, %s54
      %s71 = sphi 0, %s55
      %s75 = sphi 0, %s75
      %s77 = sphi 0, %s75
      %s78 = sphi 0, %s77
      %s92 = sphi 0, %s78
      %s96 = sphi 0, %s96
      %s98 = sphi 0, %s96
      %s99 = sphi 0, %s98
      %s113 = sphi 0, %s99
      %s117 = sphi 0, %s117
      %s119 = sphi 0, %s117
      %s120 = sphi 0, %s119
      %s134 = sphi 0, %s120
      %s138 = sphi 0, %s138
      %s140 = sphi 0, %s138
      %s141 = sphi 0, %s140
      %s155 = sphi 0, %s141
      %s159 = sphi 0, %s159
      %s161 = sphi 0, %s159
      %s162 = sphi 0, %s161
      %s176 = sphi 0, %s162
      %s180 = sphi 0, %s180
      %s182 = sphi 0, %s180
      %s183 = sphi 0, %s182
      %s197 = sphi 0, %s183
      %s201 = sphi 0, %s201
      %s203 = sphi 0, %s201
      %s204 = sphi 0, %s203
      %s218 = sphi 0, %s204
      %s222 = sphi 0, %s222
      %s224 = sphi 0, %s222
      %s225 = sphi 0, %s224
      %s239 = sphi 0, %s225
      %s245 = sphi 0, %s247
      %s248 = sphi 0, %s245
      %s249 = sphi 0, %s248
      %s265 = sphi 0, %s249
      %s271 = sphi 0, %s273
      %s274 = sphi 0, %s271
      %s275 = sphi 0, %s274
      %s291 = sphi 0, %s275
      %s297 = sphi 0, %s299
      %s300 = sphi 0, %s297
      %s301 = sphi 0, %s300
      %s317 = sphi 0, %s301
      %s321 = sphi 0, %s321
      %s323 = sphi 0, %s321
      %s324 = sphi 0, %s323
      %s338 = sphi 0, %s324
      %s344 = sphi 0, %s346
      %s347 = sphi 0, %s344
      %s348 = sphi 0, %s347
      %s364 = sphi 0, %s348
    $region4: #{tpu_custom_call.1} parent=1 // loop_header_branch
      %32 = sbr.rel (%p30) target = $region8
    $region5: #{tpu_custom_call.1} parent=1 // loop_body
      %s34 = ssub.s32 %s29, 1
      %s35 = ssub.s32 %s29, 2
      %s42 = sadd.s32 1, %s37
      %p43 = scmp.ge.s32.totalorder %s42, 2
      %s44 = scalar_select %p43, 0, %s42
      %s45 = sadd.s32 1, %s36
      %s46 = scalar_select %p43, %s45, %s36
      %p47 = scmp.ge.s32.totalorder %s46, 2
      %s48 = scalar_select %p47, 0, %s46
      %s49 = ssub.s32 %s36, %s48
      %p50 = scmp.eq.s32.totalorder %s49, 0
      %s52 = sadd.s32 %s51, 1
      %s53 = scalar_select %p50, %s51, %s52
      %p56 = pneg %p50
      %p57 = scmp.eq.s32.totalorder %s29, 3
      %p58 = por %p56, %p57
      %p59 = scmp.ne.s32.totalorder %s51, %s54
      %p60 = scmp.eq.s32.totalorder %s29, 0
      %p61 = por %p59, %p60
      %p62 = scmp.ne.s32.totalorder %s51, %s54
      %p63 = scmp.eq.s32.totalorder %s34, 3
      %p64 = por %p62, %p63
      %p65 = scmp.ne.s32.totalorder %s54, %s55
      %p66 = scmp.eq.s32.totalorder %s34, 0
      %p67 = por %p65, %p66
      %p68 = scmp.ne.s32.totalorder %s54, %s55
      %p69 = scmp.eq.s32.totalorder %s35, 3
      %p70 = por %p68, %p69
      %p72 = scmp.ne.s32.totalorder %s55, %s71
      %p73 = scmp.eq.s32.totalorder %s35, 0
      %p74 = por %p72, %p73
      %s76 = sadd.s32 %s75, 1
      %p79 = scmp.eq.s32.totalorder %s29, 3
      %p80 = scmp.ne.s32.totalorder %s75, %s77
      %p81 = scmp.eq.s32.totalorder %s29, 0
      %p82 = por %p80, %p81
      %p83 = scmp.ne.s32.totalorder %s75, %s77
      %p84 = scmp.eq.s32.totalorder %s34, 3
      %p85 = por %p83, %p84
      %p86 = scmp.ne.s32.totalorder %s77, %s78
      %p87 = scmp.eq.s32.totalorder %s34, 0
      %p88 = por %p86, %p87
      %p89 = scmp.ne.s32.totalorder %s77, %s78
      %p90 = scmp.eq.s32.totalorder %s35, 3
      %p91 = por %p89, %p90
      %p93 = scmp.ne.s32.totalorder %s78, %s92
      %p94 = scmp.eq.s32.totalorder %s35, 0
      %p95 = por %p93, %p94
      %s97 = sadd.s32 %s96, 1
      %p100 = scmp.eq.s32.totalorder %s29, 3
      %p101 = scmp.ne.s32.totalorder %s96, %s98
      %p102 = scmp.eq.s32.totalorder %s29, 0
      %p103 = por %p101, %p102
      %p104 = scmp.ne.s32.totalorder %s96, %s98
      %p105 = scmp.eq.s32.totalorder %s34, 3
      %p106 = por %p104, %p105
      %p107 = scmp.ne.s32.totalorder %s98, %s99
      %p108 = scmp.eq.s32.totalorder %s34, 0
      %p109 = por %p107, %p108
      %p110 = scmp.ne.s32.totalorder %s98, %s99
      %p111 = scmp.eq.s32.totalorder %s35, 3
      %p112 = por %p110, %p111
      %p114 = scmp.ne.s32.totalorder %s99, %s113
      %p115 = scmp.eq.s32.totalorder %s35, 0
      %p116 = por %p114, %p115
      %s118 = sadd.s32 %s117, 1
      %p121 = scmp.eq.s32.totalorder %s29, 3
      %p122 = scmp.ne.s32.totalorder %s117, %s119
      %p123 = scmp.eq.s32.totalorder %s29, 0
      %p124 = por %p122, %p123
      %p125 = scmp.ne.s32.totalorder %s117, %s119
      %p126 = scmp.eq.s32.totalorder %s34, 3
      %p127 = por %p125, %p126
      %p128 = scmp.ne.s32.totalorder %s119, %s120
      %p129 = scmp.eq.s32.totalorder %s34, 0
      %p130 = por %p128, %p129
      %p131 = scmp.ne.s32.totalorder %s119, %s120
      %p132 = scmp.eq.s32.totalorder %s35, 3
      %p133 = por %p131, %p132
      %p135 = scmp.ne.s32.totalorder %s120, %s134
      %p136 = scmp.eq.s32.totalorder %s35, 0
      %p137 = por %p135, %p136
      %s139 = sadd.s32 %s138, 1
      %p142 = scmp.eq.s32.totalorder %s29, 3
      %p143 = scmp.ne.s32.totalorder %s138, %s140
      %p144 = scmp.eq.s32.totalorder %s29, 0
      %p145 = por %p143, %p144
      %p146 = scmp.ne.s32.totalorder %s138, %s140
      %p147 = scmp.eq.s32.totalorder %s34, 3
      %p148 = por %p146, %p147
      %p149 = scmp.ne.s32.totalorder %s140, %s141
      %p150 = scmp.eq.s32.totalorder %s34, 0
      %p151 = por %p149, %p150
      %p152 = scmp.ne.s32.totalorder %s140, %s141
      %p153 = scmp.eq.s32.totalorder %s35, 3
      %p154 = por %p152, %p153
      %p156 = scmp.ne.s32.totalorder %s141, %s155
      %p157 = scmp.eq.s32.totalorder %s35, 0
      %p158 = por %p156, %p157
      %s160 = sadd.s32 %s159, 1
      %p163 = scmp.eq.s32.totalorder %s29, 3
      %p164 = scmp.ne.s32.totalorder %s159, %s161
      %p165 = scmp.eq.s32.totalorder %s29, 0
      %p166 = por %p164, %p165
      %p167 = scmp.ne.s32.totalorder %s159, %s161
      %p168 = scmp.eq.s32.totalorder %s34, 3
      %p169 = por %p167, %p168
      %p170 = scmp.ne.s32.totalorder %s161, %s162
      %p171 = scmp.eq.s32.totalorder %s34, 0
      %p172 = por %p170, %p171
      %p173 = scmp.ne.s32.totalorder %s161, %s162
      %p174 = scmp.eq.s32.totalorder %s35, 3
      %p175 = por %p173, %p174
      %p177 = scmp.ne.s32.totalorder %s162, %s176
      %p178 = scmp.eq.s32.totalorder %s35, 0
      %p179 = por %p177, %p178
      %s181 = sadd.s32 %s180, 1
      %p184 = scmp.eq.s32.totalorder %s29, 3
      %p185 = scmp.ne.s32.totalorder %s180, %s182
      %p186 = scmp.eq.s32.totalorder %s29, 0
      %p187 = por %p185, %p186
      %p188 = scmp.ne.s32.totalorder %s180, %s182
      %p189 = scmp.eq.s32.totalorder %s34, 3
      %p190 = por %p188, %p189
      %p191 = scmp.ne.s32.totalorder %s182, %s183
      %p192 = scmp.eq.s32.totalorder %s34, 0
      %p193 = por %p191, %p192
      %p194 = scmp.ne.s32.totalorder %s182, %s183
      %p195 = scmp.eq.s32.totalorder %s35, 3
      %p196 = por %p194, %p195
      %p198 = scmp.ne.s32.totalorder %s183, %s197
      %p199 = scmp.eq.s32.totalorder %s35, 0
      %p200 = por %p198, %p199
      %s202 = sadd.s32 %s201, 1
      %p205 = scmp.eq.s32.totalorder %s29, 3
      %p206 = scmp.ne.s32.totalorder %s201, %s203
      %p207 = scmp.eq.s32.totalorder %s29, 0
      %p208 = por %p206, %p207
      %p209 = scmp.ne.s32.totalorder %s201, %s203
      %p210 = scmp.eq.s32.totalorder %s34, 3
      %p211 = por %p209, %p210
      %p212 = scmp.ne.s32.totalorder %s203, %s204
      %p213 = scmp.eq.s32.totalorder %s34, 0
      %p214 = por %p212, %p213
      %p215 = scmp.ne.s32.totalorder %s203, %s204
      %p216 = scmp.eq.s32.totalorder %s35, 3
      %p217 = por %p215, %p216
      %p219 = scmp.ne.s32.totalorder %s204, %s218
      %p220 = scmp.eq.s32.totalorder %s35, 0
      %p221 = por %p219, %p220
      %s223 = sadd.s32 %s222, 1
      %p226 = scmp.eq.s32.totalorder %s29, 3
      %p227 = scmp.ne.s32.totalorder %s222, %s224
      %p228 = scmp.eq.s32.totalorder %s29, 0
      %p229 = por %p227, %p228
      %p230 = scmp.ne.s32.totalorder %s222, %s224
      %p231 = scmp.eq.s32.totalorder %s34, 3
      %p232 = por %p230, %p231
      %p233 = scmp.ne.s32.totalorder %s224, %s225
      %p234 = scmp.eq.s32.totalorder %s34, 0
      %p235 = por %p233, %p234
      %p236 = scmp.ne.s32.totalorder %s224, %s225
      %p237 = scmp.eq.s32.totalorder %s35, 3
      %p238 = por %p236, %p237
      %p240 = scmp.ne.s32.totalorder %s225, %s239
      %p241 = scmp.eq.s32.totalorder %s35, 0
      %p242 = por %p240, %p241
      %s243 = ssub.s32 %s37, %s44
      %p244 = scmp.eq.s32.totalorder %s243, 0
      %s246 = sadd.s32 %s245, 1
      %s247 = scalar_select %p244, %s245, %s246
      %p250 = pneg %p244
      %p251 = scmp.eq.s32.totalorder %s29, 3
      %p252 = por %p250, %p251
      %p253 = scmp.ne.s32.totalorder %s245, %s248
      %p254 = scmp.eq.s32.totalorder %s29, 0
      %p255 = por %p253, %p254
      %p256 = scmp.ne.s32.totalorder %s245, %s248
      %p257 = scmp.eq.s32.totalorder %s34, 3
      %p258 = por %p256, %p257
      %p259 = scmp.ne.s32.totalorder %s248, %s249
      %p260 = scmp.eq.s32.totalorder %s34, 0
      %p261 = por %p259, %p260
      %p262 = scmp.ne.s32.totalorder %s248, %s249
      %p263 = scmp.eq.s32.totalorder %s35, 3
      %p264 = por %p262, %p263
      %p266 = scmp.ne.s32.totalorder %s249, %s265
      %p267 = scmp.eq.s32.totalorder %s35, 0
      %p268 = por %p266, %p267
      %s269 = ssub.s32 %s37, %s44
      %p270 = scmp.eq.s32.totalorder %s269, 0
      %s272 = sadd.s32 %s271, 1
      %s273 = scalar_select %p270, %s271, %s272
      %p276 = pneg %p270
      %p277 = scmp.eq.s32.totalorder %s29, 3
      %p278 = por %p276, %p277
      %p279 = scmp.ne.s32.totalorder %s271, %s274
      %p280 = scmp.eq.s32.totalorder %s29, 0
      %p281 = por %p279, %p280
      %p282 = scmp.ne.s32.totalorder %s271, %s274
      %p283 = scmp.eq.s32.totalorder %s34, 3
      %p284 = por %p282, %p283
      %p285 = scmp.ne.s32.totalorder %s274, %s275
      %p286 = scmp.eq.s32.totalorder %s34, 0
      %p287 = por %p285, %p286
      %p288 = scmp.ne.s32.totalorder %s274, %s275
      %p289 = scmp.eq.s32.totalorder %s35, 3
      %p290 = por %p288, %p289
      %p292 = scmp.ne.s32.totalorder %s275, %s291
      %p293 = scmp.eq.s32.totalorder %s35, 0
      %p294 = por %p292, %p293
      %s295 = ssub.s32 %s37, %s44
      %p296 = scmp.eq.s32.totalorder %s295, 0
      %s298 = sadd.s32 %s297, 1
      %s299 = scalar_select %p296, %s297, %s298
      %p302 = pneg %p296
      %p303 = scmp.eq.s32.totalorder %s29, 3
      %p304 = por %p302, %p303
      %p305 = scmp.ne.s32.totalorder %s297, %s300
      %p306 = scmp.eq.s32.totalorder %s29, 0
      %p307 = por %p305, %p306
      %p308 = scmp.ne.s32.totalorder %s297, %s300
      %p309 = scmp.eq.s32.totalorder %s34, 3
      %p310 = por %p308, %p309
      %p311 = scmp.ne.s32.totalorder %s300, %s301
      %p312 = scmp.eq.s32.totalorder %s34, 0
      %p313 = por %p311, %p312
      %p314 = scmp.ne.s32.totalorder %s300, %s301
      %p315 = scmp.eq.s32.totalorder %s35, 3
      %p316 = por %p314, %p315
      %p318 = scmp.ne.s32.totalorder %s301, %s317
      %p319 = scmp.eq.s32.totalorder %s35, 0
      %p320 = por %p318, %p319
      %s322 = sadd.s32 %s321, 1
      %p325 = scmp.eq.s32.totalorder %s29, 3
      %p326 = scmp.ne.s32.totalorder %s321, %s323
      %p327 = scmp.eq.s32.totalorder %s29, 0
      %p328 = por %p326, %p327
      %p329 = scmp.ne.s32.totalorder %s321, %s323
      %p330 = scmp.eq.s32.totalorder %s34, 3
      %p331 = por %p329, %p330
      %p332 = scmp.ne.s32.totalorder %s323, %s324
      %p333 = scmp.eq.s32.totalorder %s34, 0
      %p334 = por %p332, %p333
      %p335 = scmp.ne.s32.totalorder %s323, %s324
      %p336 = scmp.eq.s32.totalorder %s35, 3
      %p337 = por %p335, %p336
      %p339 = scmp.ne.s32.totalorder %s324, %s338
      %p340 = scmp.eq.s32.totalorder %s35, 0
      %p341 = por %p339, %p340
      %s342 = ssub.s32 %s36, %s48
      %p343 = scmp.eq.s32.totalorder %s342, 0
      %s345 = sadd.s32 %s344, 1
      %s346 = scalar_select %p343, %s344, %s345
      %p349 = pneg %p343
      %p350 = scmp.eq.s32.totalorder %s29, 3
      %p351 = por %p349, %p350
      %p352 = scmp.ne.s32.totalorder %s344, %s347
      %p353 = scmp.eq.s32.totalorder %s29, 0
      %p354 = por %p352, %p353
      %p355 = scmp.ne.s32.totalorder %s344, %s347
      %p356 = scmp.eq.s32.totalorder %s34, 3
      %p357 = por %p355, %p356
      %p358 = scmp.ne.s32.totalorder %s347, %s348
      %p359 = scmp.eq.s32.totalorder %s34, 0
      %p360 = por %p358, %p359
      %p361 = scmp.ne.s32.totalorder %s347, %s348
      %p362 = scmp.eq.s32.totalorder %s35, 3
      %p363 = por %p361, %p362
      %p365 = scmp.ne.s32.totalorder %s348, %s364
      %p366 = scmp.eq.s32.totalorder %s35, 0
      %p367 = por %p365, %p366
      %p368 = scmp.le.s32.totalorder 1, %s29
      %p369 = scmp.lt.s32.totalorder %s29, 5
      %p370 = pnand %p368, %p369
      %p371 = pneg %p370
      // Predicated region
      $region9: #{tpu_custom_call.1} parent=5 // pred_check
        _
      $region10: #{tpu_custom_call.1} parent=5 // pred_check_branch
        %373 = sbr.rel (%p370) target = $region12
      $region11: #{tpu_custom_call.1} parent=5 // pred_region
        %s374 = ssub.s32 %s29, 1
        // Predicated region
        $region13: #{tpu_custom_call.1} parent=11 // pred_check
          %p375 = pneg %p88
        $region14: #{tpu_custom_call.1} parent=11 // pred_check_branch
          %377 = sbr.rel (%p375) target = $region16
        $region15: #{tpu_custom_call.1} parent=11 // pred_region
          %379 = vsyncadd [#allocation9], 0
          %s381 = sshll.u32 %s1, 4
          %s382 = int_to_ptr.hbm [resolvable:$true] %s381
          %s383 = sshll.u32 [#allocation8], 4
          %s384 = int_to_ptr.vmem [resolvable:$true] %s383
          %386 = dma.hbm_to_vmem [thread:$0]  %s382, 16, %s384, [#allocation9]
        $region16: #{tpu_custom_call.1} parent=11 // pred_fallthru
          _
        // Predicated region
        $region17: #{tpu_custom_call.1} parent=11 // pred_check
          %p387 = pneg %p109
        $region18: #{tpu_custom_call.1} parent=11 // pred_check_branch
          %389 = sbr.rel (%p387) target = $region20
        $region19: #{tpu_custom_call.1} parent=11 // pred_region
          %391 = vsyncadd [#allocation9], 0
          %s393 = sshll.u32 %s2, 4
          %s394 = int_to_ptr.hbm [resolvable:$true] %s393
          %s395 = sshll.u32 [#allocation10], 4
          %s396 = int_to_ptr.vmem [resolvable:$true] %s395
          %398 = dma.hbm_to_vmem [thread:$0]  %s394, 16, %s396, [#allocation9]
        $region20: #{tpu_custom_call.1} parent=11 // pred_fallthru
          _
        // Predicated region
        $region21: #{tpu_custom_call.1} parent=11 // pred_check
          %p399 = pneg %p130
        $region22: #{tpu_custom_call.1} parent=11 // pred_check_branch
          %401 = sbr.rel (%p399) target = $region24
        $region23: #{tpu_custom_call.1} parent=11 // pred_region
          %403 = vsyncadd [#allocation12], 0
          %s404 = sshll.u32 %s3, 4
          %s405 = int_to_ptr.hbm [resolvable:$true] %s404
          %s406 = sshll.u32 [#allocation11], 4
          %s407 = int_to_ptr.vmem [resolvable:$true] %s406
          %412 = dma.hbm_to_vmem [thread:$0]  %s405, 3072, %s407, [#allocation12], 192, 192, 12
        $region24: #{tpu_custom_call.1} parent=11 // pred_fallthru
          _
        // Predicated region
        $region25: #{tpu_custom_call.1} parent=11 // pred_check
          %p413 = pneg %p151
        $region26: #{tpu_custom_call.1} parent=11 // pred_check_branch
          %415 = sbr.rel (%p413) target = $region28
        $region27: #{tpu_custom_call.1} parent=11 // pred_region
          _
        $region28: #{tpu_custom_call.1} parent=11 // pred_fallthru
          _
        // Predicated region
        $region29: #{tpu_custom_call.1} parent=11 // pred_check
          %p416 = pneg %p172
        $region30: #{tpu_custom_call.1} parent=11 // pred_check_branch
          %418 = sbr.rel (%p416) target = $region32
        $region31: #{tpu_custom_call.1} parent=11 // pred_region
          %420 = vsyncadd [#allocation12], 0
          %s421 = sshll.u32 %s5, 4
          %s422 = int_to_ptr.hbm [resolvable:$true] %s421
          %s423 = sshll.u32 [#allocation13], 4
          %s424 = int_to_ptr.vmem [resolvable:$true] %s423
          %429 = dma.hbm_to_vmem [thread:$0]  %s422, 1024, %s424, [#allocation12], 64, 64, 4
        $region32: #{tpu_custom_call.1} parent=11 // pred_fallthru
          _
        // Predicated region
        $region33: #{tpu_custom_call.1} parent=11 // pred_check
          %p430 = pneg %p193
        $region34: #{tpu_custom_call.1} parent=11 // pred_check_branch
          %432 = sbr.rel (%p430) target = $region36
        $region35: #{tpu_custom_call.1} parent=11 // pred_region
          %434 = vsyncadd [#allocation15], 0
          %s436 = sshll.u32 %s6, 4
          %s437 = int_to_ptr.hbm [resolvable:$true] %s436
          %s438 = sshll.u32 [#allocation14], 4
          %s439 = int_to_ptr.vmem [resolvable:$true] %s438
          %441 = dma.hbm_to_vmem [thread:$0]  %s437, 16, %s439, [#allocation15]
        $region36: #{tpu_custom_call.1} parent=11 // pred_fallthru
          _
        // Predicated region
        $region37: #{tpu_custom_call.1} parent=11 // pred_check
          %p442 = pneg %p214
        $region38: #{tpu_custom_call.1} parent=11 // pred_check_branch
          %444 = sbr.rel (%p442) target = $region40
        $region39: #{tpu_custom_call.1} parent=11 // pred_region
          %446 = vsyncadd [#allocation15], 0
          %s448 = sshll.u32 %s7, 4
          %s449 = int_to_ptr.hbm [resolvable:$true] %s448
          %s450 = sshll.u32 [#allocation16], 4
          %s451 = int_to_ptr.vmem [resolvable:$true] %s450
          %453 = dma.hbm_to_vmem [thread:$0]  %s449, 16, %s451, [#allocation15]
        $region40: #{tpu_custom_call.1} parent=11 // pred_fallthru
          _
        // Predicated region
        $region41: #{tpu_custom_call.1} parent=11 // pred_check
          %p454 = pneg %p235
        $region42: #{tpu_custom_call.1} parent=11 // pred_check_branch
          %456 = sbr.rel (%p454) target = $region44
        $region43: #{tpu_custom_call.1} parent=11 // pred_region
          %458 = vsyncadd [#allocation18], 0
          %s460 = sshll.u32 %s8, 4
          %s461 = int_to_ptr.hbm [resolvable:$true] %s460
          %s462 = sshll.u32 [#allocation17], 4
          %s463 = int_to_ptr.vmem [resolvable:$true] %s462
          %465 = dma.hbm_to_vmem [thread:$0]  %s461, 16, %s463, [#allocation18]
        $region44: #{tpu_custom_call.1} parent=11 // pred_fallthru
          _
        // Predicated region
        $region45: #{tpu_custom_call.1} parent=11 // pred_check
          %p466 = pneg %p334
        $region46: #{tpu_custom_call.1} parent=11 // pred_check_branch
          %468 = sbr.rel (%p466) target = $region48
        $region47: #{tpu_custom_call.1} parent=11 // pred_region
          _
        $region48: #{tpu_custom_call.1} parent=11 // pred_fallthru
          _
      $region12: #{tpu_custom_call.1} parent=5 // pred_fallthru
        _
      %p469 = scmp.lt.s32.totalorder %s29, 4
      // Predicated region
      $region49: #{tpu_custom_call.1} parent=5 // pred_check
        %p470 = pneg %p469
      $region50: #{tpu_custom_call.1} parent=5 // pred_check_branch
        %472 = sbr.rel (%p470) target = $region52
      $region51: #{tpu_custom_call.1} parent=5 // pred_region
        // Predicated region
        $region53: #{tpu_custom_call.1} parent=51 // pred_check
          %p473 = pneg %p61
        $region54: #{tpu_custom_call.1} parent=51 // pred_check_branch
          %475 = sbr.rel (%p473) target = $region56
        $region55: #{tpu_custom_call.1} parent=51 // pred_region
          %s476 = sand.u32 %s29, 1
          %s477 = scalar_lea.sflag [#allocation6], %s476
          %s478 = sand.u32 %s51, 1
          %s479 = smul.addr %s478, 4
          %s480 = scalar_lea.vmem [#allocation5], %s479
          %482 = vsyncadd %s477, 0
          %s483 = smul.addr %s36, 4
          %s484 = scalar_lea.hbm %s0, %s483
          %s486 = sshll.u32 %s484, 4
          %s487 = int_to_ptr.hbm [resolvable:$true] %s486
          %s488 = sshll.u32 %s480, 4
          %s489 = int_to_ptr.vmem [resolvable:$true] %s488
          %491 = dma.hbm_to_vmem [thread:$0]  %s487, 64, %s489, %s477
        $region56: #{tpu_custom_call.1} parent=51 // pred_fallthru
          _
        // Predicated region
        $region57: #{tpu_custom_call.1} parent=51 // pred_check
          %p492 = pneg %p255
        $region58: #{tpu_custom_call.1} parent=51 // pred_check_branch
          %494 = sbr.rel (%p492) target = $region60
        $region59: #{tpu_custom_call.1} parent=51 // pred_region
          %s495 = sand.u32 %s29, 1
          %s496 = scalar_lea.sflag [#allocation6], %s495
          %s497 = sand.u32 %s245, 1
          %s498 = smul.addr %s497, 128
          %s499 = scalar_lea.vmem [#allocation19], %s498
          %s500 = smul.u32 2, %s37
          %502 = vsyncadd %s496, 0
          %s503 = smul.addr %s500, 4
          %s504 = scalar_lea.hbm %s9, %s503
          %s505 = sshll.u32 %s504, 4
          %s506 = int_to_ptr.hbm [resolvable:$true] %s505
          %s507 = sshll.u32 %s499, 4
          %s508 = int_to_ptr.vmem [resolvable:$true] %s507
          %513 = dma.hbm_to_vmem [thread:$0]  %s506, 2048, %s508, %s496, 256, 128, 8
        $region60: #{tpu_custom_call.1} parent=51 // pred_fallthru
          _
        // Predicated region
        $region61: #{tpu_custom_call.1} parent=51 // pred_check
          %p514 = pneg %p281
        $region62: #{tpu_custom_call.1} parent=51 // pred_check_branch
          %516 = sbr.rel (%p514) target = $region64
        $region63: #{tpu_custom_call.1} parent=51 // pred_region
          %s517 = smul.u32 2, %s37
          %p518 = scmp.lt.s32.totalorder %s517, 3
          %s519 = scalar_select %p518, %s517, 3
          %s520 = scalar_lea.vmem %s10, %s519
          %s521 = smul.u32 2, %s37
        $region64: #{tpu_custom_call.1} parent=51 // pred_fallthru
          _
        // Predicated region
        $region65: #{tpu_custom_call.1} parent=51 // pred_check
          %p522 = pneg %p307
        $region66: #{tpu_custom_call.1} parent=51 // pred_check_branch
          %524 = sbr.rel (%p522) target = $region68
        $region67: #{tpu_custom_call.1} parent=51 // pred_region
          %s525 = sand.u32 %s29, 1
          %s526 = scalar_lea.sflag [#allocation6], %s525
          %s527 = sand.u32 %s297, 1
          %s528 = smul.addr %s527, 128
          %s529 = scalar_lea.vmem [#allocation20], %s528
          %s530 = smul.u32 32, %s37
          %532 = vsyncadd %s526, 0
          %s533 = smul.addr %s530, 4
          %s534 = scalar_lea.hbm %s11, %s533
          %s535 = sshll.u32 %s534, 4
          %s536 = int_to_ptr.hbm [resolvable:$true] %s535
          %s537 = sshll.u32 %s529, 4
          %s538 = int_to_ptr.vmem [resolvable:$true] %s537
          %543 = dma.hbm_to_vmem [thread:$0]  %s536, 2048, %s538, %s526, 64, 64, 4
        $region68: #{tpu_custom_call.1} parent=51 // pred_fallthru
          _
      $region52: #{tpu_custom_call.1} parent=5 // pred_fallthru
        _
      %p544 = scmp.le.s32.totalorder 1, %s29
      %p545 = scmp.lt.s32.totalorder %s29, 5
      %p546 = pnand %p544, %p545
      %p547 = pneg %p546
      // Predicated region
      $region69: #{tpu_custom_call.1} parent=5 // pred_check
        _
      $region70: #{tpu_custom_call.1} parent=5 // pred_check_branch
        %549 = sbr.rel (%p546) target = $region72
      $region71: #{tpu_custom_call.1} parent=5 // pred_region
        %s550 = ssub.s32 %s29, 1
        %s551 = sand.u32 %s34, 1
        %s552 = scalar_lea.sflag [#allocation6], %s551
        %s553 = sand.u32 %s54, 1
        %s554 = smul.addr %s553, 4
        %s555 = scalar_lea.vmem [#allocation5], %s554
        // Predicated region
        $region73: #{tpu_custom_call.1} parent=71 // pred_check
          %p556 = pneg %p67
        $region74: #{tpu_custom_call.1} parent=71 // pred_check_branch
          %558 = sbr.rel (%p556) target = $region76
        $region75: #{tpu_custom_call.1} parent=71 // pred_region
          %560 = dma.done %s552, 64
        $region76: #{tpu_custom_call.1} parent=71 // pred_fallthru
          _
        // Predicated region
        $region77: #{tpu_custom_call.1} parent=71 // pred_check
          %p561 = pneg %p88
        $region78: #{tpu_custom_call.1} parent=71 // pred_check_branch
          %563 = sbr.rel (%p561) target = $region80
        $region79: #{tpu_custom_call.1} parent=71 // pred_region
          %565 = dma.done [#allocation9], 16
        $region80: #{tpu_custom_call.1} parent=71 // pred_fallthru
          _
        // Predicated region
        $region81: #{tpu_custom_call.1} parent=71 // pred_check
          %p566 = pneg %p109
        $region82: #{tpu_custom_call.1} parent=71 // pred_check_branch
          %568 = sbr.rel (%p566) target = $region84
        $region83: #{tpu_custom_call.1} parent=71 // pred_region
          %570 = dma.done [#allocation9], 16
        $region84: #{tpu_custom_call.1} parent=71 // pred_fallthru
          _
        // Predicated region
        $region85: #{tpu_custom_call.1} parent=71 // pred_check
          %p571 = pneg %p130
        $region86: #{tpu_custom_call.1} parent=71 // pred_check_branch
          %573 = sbr.rel (%p571) target = $region88
        $region87: #{tpu_custom_call.1} parent=71 // pred_region
          %575 = dma.done [#allocation12], 3072
        $region88: #{tpu_custom_call.1} parent=71 // pred_fallthru
          _
        // Predicated region
        $region89: #{tpu_custom_call.1} parent=71 // pred_check
          %p576 = pneg %p172
        $region90: #{tpu_custom_call.1} parent=71 // pred_check_branch
          %578 = sbr.rel (%p576) target = $region92
        $region91: #{tpu_custom_call.1} parent=71 // pred_region
          %580 = dma.done [#allocation12], 1024
        $region92: #{tpu_custom_call.1} parent=71 // pred_fallthru
          _
        // Predicated region
        $region93: #{tpu_custom_call.1} parent=71 // pred_check
          %p581 = pneg %p193
        $region94: #{tpu_custom_call.1} parent=71 // pred_check_branch
          %583 = sbr.rel (%p581) target = $region96
        $region95: #{tpu_custom_call.1} parent=71 // pred_region
          %585 = dma.done [#allocation15], 16
        $region96: #{tpu_custom_call.1} parent=71 // pred_fallthru
          _
        // Predicated region
        $region97: #{tpu_custom_call.1} parent=71 // pred_check
          %p586 = pneg %p214
        $region98: #{tpu_custom_call.1} parent=71 // pred_check_branch
          %588 = sbr.rel (%p586) target = $region100
        $region99: #{tpu_custom_call.1} parent=71 // pred_region
          %590 = dma.done [#allocation15], 16
        $region100: #{tpu_custom_call.1} parent=71 // pred_fallthru
          _
        // Predicated region
        $region101: #{tpu_custom_call.1} parent=71 // pred_check
          %p591 = pneg %p235
        $region102: #{tpu_custom_call.1} parent=71 // pred_check_branch
          %593 = sbr.rel (%p591) target = $region104
        $region103: #{tpu_custom_call.1} parent=71 // pred_region
          %595 = dma.done [#allocation18], 16
        $region104: #{tpu_custom_call.1} parent=71 // pred_fallthru
          _
        %s596 = sand.u32 %s34, 1
        %s597 = scalar_lea.sflag [#allocation6], %s596
        %s598 = sand.u32 %s248, 1
        %s599 = smul.addr %s598, 128
        %s600 = scalar_lea.vmem [#allocation19], %s599
        // Predicated region
        $region105: #{tpu_custom_call.1} parent=71 // pred_check
          %p601 = pneg %p261
        $region106: #{tpu_custom_call.1} parent=71 // pred_check_branch
          %603 = sbr.rel (%p601) target = $region108
        $region107: #{tpu_custom_call.1} parent=71 // pred_region
          %605 = dma.done %s597, 2048
        $region108: #{tpu_custom_call.1} parent=71 // pred_fallthru
          _
        %s606 = sand.u32 %s34, 1
        %s607 = scalar_lea.sflag [#allocation6], %s606
        %s608 = sand.u32 %s300, 1
        %s609 = smul.addr %s608, 128
        %s610 = scalar_lea.vmem [#allocation20], %s609
        // Predicated region
        $region109: #{tpu_custom_call.1} parent=71 // pred_check
          %p611 = pneg %p313
        $region110: #{tpu_custom_call.1} parent=71 // pred_check_branch
          %613 = sbr.rel (%p611) target = $region112
        $region111: #{tpu_custom_call.1} parent=71 // pred_region
          %615 = dma.done %s607, 2048
        $region112: #{tpu_custom_call.1} parent=71 // pred_fallthru
          _
        %s616 = sand.u32 %s34, 1
        %s617 = scalar_lea.sflag [#allocation6], %s616
        %s618 = sand.u32 %s54, 1
        %s619 = smul.addr %s618, 4
        %s620 = scalar_lea.vmem [#allocation5], %s619
        %p621 = pneg %p67
        %p622 = pneg %p64
        %p623 = pneg %p88
        %p624 = pneg %p85
        %p625 = pneg %p109
        %p626 = pneg %p106
        %p627 = pneg %p130
        %p628 = pneg %p127
        %p629 = pneg %p151
        %p630 = pneg %p148
        %p631 = pneg %p172
        %p632 = pneg %p169
        %p633 = pneg %p193
        %p634 = pneg %p190
        %p635 = pneg %p214
        %p636 = pneg %p211
        %p637 = pneg %p235
        %p638 = pneg %p232
        %s639 = sand.u32 %s34, 1
        %s640 = scalar_lea.sflag [#allocation6], %s639
        %s641 = sand.u32 %s248, 1
        %s642 = smul.addr %s641, 128
        %s643 = scalar_lea.vmem [#allocation19], %s642
        %p644 = pneg %p261
        %p645 = pneg %p258
        %s646 = smul.u32 2, %s39
        %p647 = scmp.lt.s32.totalorder %s646, 3
        %s648 = scalar_select %p647, %s646, 3
        %s649 = scalar_lea.vmem %s10, %s648
        %p650 = pneg %p287
        %p651 = pneg %p284
        %s652 = sand.u32 %s34, 1
        %s653 = scalar_lea.sflag [#allocation6], %s652
        %s654 = sand.u32 %s300, 1
        %s655 = smul.addr %s654, 128
        %s656 = scalar_lea.vmem [#allocation20], %s655
        %p657 = pneg %p313
        %p658 = pneg %p310
        %p659 = pneg %p334
        %p660 = pneg %p331
        %p661 = pneg %p360
        %p662 = pneg %p357
        %s663 = sand.u32 %s347, 1
        %s664 = scalar_lea.sflag [#allocation7], %s663
        %s665 = sand.u32 %s347, 1
        %s666 = smul.addr %s665, 4
        %s667 = scalar_lea.vmem [#allocation21], %s666
        %s668 = smul.u32 2, %s39
        %s669 = smul.u32 2, %s39
        %p670 = scmp.lt.s32.totalorder %s669, 3
        %s671 = scalar_select %p670, %s669, 3
        %s672 = scalar_lea.vmem %s10, %s671
        %s673 = smul.u32 2, %s39
        %s674 = smul.u32 32, %s39
        %p676 = scmp.eq.s32.totalorder %s39, 0
        // Predicated region
        $region113: #{tpu_custom_call.1} parent=71 // pred_check
          %p677 = pneg %p676
        $region114: #{tpu_custom_call.1} parent=71 // pred_check_branch
          %679 = sbr.rel (%p677) target = $region116
        $region115: #{tpu_custom_call.1} parent=71 // pred_region
          %v680 = vld [vmem:[%s555] sm:$0xf]
          %v681 = vunpack.c.l.bf16 %v680
          %v682 = vld [vmem:[#allocation8] sm:$0x1]
          %v683 = vld [vmem:[#allocation10] sm:$0x1]
          %684 = vadd.xlane.f32.xlu0 %v681
          %v685 = vpop.xlane.xlu0 %684
          %v686 = vrcp.pop 128.0
          %v687 = vmul.f32 128.0, %v686
          %v688 = vsub.f32 1.0, %v687
          %v689 = vmul.f32 %v686, %v688
          %v690 = vadd.f32 %v686, %v689
          %vm691 = vweird.f32 %v686
          %v692 = vsel %vm691, %v686, %v690
          %v693 = vmul.f32 %v685, %v692
          %v694 = vsub.f32 %v681, %v693
          %v695 = vmul.f32 %v694, %v694
          %696 = vadd.xlane.f32.xlu0 %v695
          %v697 = vpop.xlane.xlu0 %696
          %v698 = vmul.f32 %v697, %v692
          %v699 = vadd.f32 %v698, 1e-05
          %v700 = vrsqrt.pop %v699
          %v701 = vmul.f32 %v700, %v699
          %v702 = vmul.f32 %v701, %v700
          %v703 = vmul.f32 0.5, %v702
          %v704 = vsub.f32 1.5, %v703
          %v705 = vmul.f32 %v700, %v704
          %vm706 = vweird.f32 %v699
          %vm707 = vweird.f32 %v700
          %vm708 = vmor %vm706, %vm707
          %v709 = vsel %vm708, %v700, %v705
          %v710 = vmul.f32 %v694, %v709
          %v712 = vperm.slane %v682, 0
          %v714 = vmul.f32 %v710, %v712
          %v716 = vperm.slane %v683, 0
          %v718 = vadd.f32 %v714, %v716
          %v719 = vpack.c.bf16 %v718, %v718
          %v720 = vld [vmem:[#allocation11] sm:$0xff]
          %v721 = vld [vmem:[#allocation11 + $0x8] sm:$0xf]
          %v722 = vld [vmem:[#allocation11 + $0xc] sm:$0xff]
          %v723 = vld [vmem:[#allocation11 + $0x14] sm:$0xf]
          %v724 = vld [vmem:[#allocation11 + $0x18] sm:$0xff]
          %v725 = vld [vmem:[#allocation11 + $0x20] sm:$0xf]
          %v726 = vld [vmem:[#allocation11 + $0x24] sm:$0xff]
          %v727 = vld [vmem:[#allocation11 + $0x2c] sm:$0xf]
          %v728 = vld [vmem:[#allocation11 + $0x30] sm:$0xff]
          %v729 = vld [vmem:[#allocation11 + $0x38] sm:$0xf]
          %v730 = vld [vmem:[#allocation11 + $0x3c] sm:$0xff]
          %v731 = vld [vmem:[#allocation11 + $0x44] sm:$0xf]
          %v732 = vld [vmem:[#allocation11 + $0x48] sm:$0xff]
          %v733 = vld [vmem:[#allocation11 + $0x50] sm:$0xf]
          %v734 = vld [vmem:[#allocation11 + $0x54] sm:$0xff]
          %v735 = vld [vmem:[#allocation11 + $0x5c] sm:$0xf]
          %v736 = vld [vmem:[#allocation11 + $0x60] sm:$0xff]
          %v737 = vld [vmem:[#allocation11 + $0x68] sm:$0xf]
          %v738 = vld [vmem:[#allocation11 + $0x6c] sm:$0xff]
          %v739 = vld [vmem:[#allocation11 + $0x74] sm:$0xf]
          %v740 = vld [vmem:[#allocation11 + $0x78] sm:$0xff]
          %v741 = vld [vmem:[#allocation11 + $0x80] sm:$0xf]
          %v742 = vld [vmem:[#allocation11 + $0x84] sm:$0xff]
          %v743 = vld [vmem:[#allocation11 + $0x8c] sm:$0xf]
          %v744 = vld [vmem:[#allocation11 + $0x90] sm:$0xff]
          %v745 = vld [vmem:[#allocation11 + $0x98] sm:$0xf]
          %v746 = vld [vmem:[#allocation11 + $0x9c] sm:$0xff]
          %v747 = vld [vmem:[#allocation11 + $0xa4] sm:$0xf]
          %v748 = vld [vmem:[#allocation11 + $0xa8] sm:$0xff]
          %v749 = vld [vmem:[#allocation11 + $0xb0] sm:$0xf]
          %v750 = vld [vmem:[#allocation11 + $0xb4] sm:$0xff]
          %v751 = vld [vmem:[#allocation11 + $0xbc] sm:$0xf]
          %v752 = vld [vmem:[%s4] sm:$0x7]
          %v754 = vperm.slane %v752, 0
          %v755 = vperm.slane %v752, 1
          %v756 = vperm.slane %v752, 2
          %v792 = vunpack.c.l.b16 %v720
          %v793 = vunpack.c.h.b16 %v720
          %v794 = vunpack.c.l.b16 %v721
          %v795 = vunpack.c.l.b16 %v722
          %v796 = vunpack.c.h.b16 %v722
          %v797 = vunpack.c.l.b16 %v723
          %v798 = vunpack.c.l.b16 %v724
          %v799 = vunpack.c.h.b16 %v724
          %v800 = vunpack.c.l.b16 %v725
          %v801 = vunpack.c.l.b16 %v726
          %v802 = vunpack.c.h.b16 %v726
          %v803 = vunpack.c.l.b16 %v727
          %v804 = vunpack.c.l.b16 %v728
          %v805 = vunpack.c.h.b16 %v728
          %v806 = vunpack.c.l.b16 %v729
          %v807 = vunpack.c.l.b16 %v730
          %v808 = vunpack.c.h.b16 %v730
          %v809 = vunpack.c.l.b16 %v731
          %v810 = vunpack.c.l.b16 %v732
          %v811 = vunpack.c.h.b16 %v732
          %v812 = vunpack.c.l.b16 %v733
          %v813 = vunpack.c.l.b16 %v734
          %v814 = vunpack.c.h.b16 %v734
          %v815 = vunpack.c.l.b16 %v735
          %v816 = vunpack.c.l.b16 %v736
          %v817 = vunpack.c.h.b16 %v736
          %v818 = vunpack.c.l.b16 %v737
          %v819 = vunpack.c.l.b16 %v738
          %v820 = vunpack.c.h.b16 %v738
          %v821 = vunpack.c.l.b16 %v739
          %v822 = vunpack.c.l.b16 %v740
          %v823 = vunpack.c.h.b16 %v740
          %v824 = vunpack.c.l.b16 %v741
          %v825 = vunpack.c.l.b16 %v742
          %v826 = vunpack.c.h.b16 %v742
          %v827 = vunpack.c.l.b16 %v743
          %v828 = vunpack.c.l.b16 %v744
          %v829 = vunpack.c.h.b16 %v744
          %v830 = vunpack.c.l.b16 %v745
          %v831 = vunpack.c.l.b16 %v746
          %v832 = vunpack.c.h.b16 %v746
          %v833 = vunpack.c.l.b16 %v747
          %v834 = vunpack.c.l.b16 %v748
          %v835 = vunpack.c.h.b16 %v748
          %v836 = vunpack.c.l.b16 %v749
          %v837 = vunpack.c.l.b16 %v750
          %v838 = vunpack.c.h.b16 %v750
          %v839 = vunpack.c.l.b16 %v751
          %v840 = vpack.c.b16 %v795, %v792
          %v841 = vpack.c.b16 %v796, %v793
          %v842 = vpack.c.b16 %v797, %v794
          %v843 = vpack.c.b16 %v801, %v798
          %v844 = vpack.c.b16 %v802, %v799
          %v845 = vpack.c.b16 %v803, %v800
          %v846 = vpack.c.b16 %v807, %v804
          %v847 = vpack.c.b16 %v808, %v805
          %v848 = vpack.c.b16 %v809, %v806
          %v849 = vpack.c.b16 %v813, %v810
          %v850 = vpack.c.b16 %v814, %v811
          %v851 = vpack.c.b16 %v815, %v812
          %v852 = vpack.c.b16 %v819, %v816
          %v853 = vpack.c.b16 %v820, %v817
          %v854 = vpack.c.b16 %v821, %v818
          %v855 = vpack.c.b16 %v825, %v822
          %v856 = vpack.c.b16 %v826, %v823
          %v857 = vpack.c.b16 %v827, %v824
          %v858 = vpack.c.b16 %v831, %v828
          %v859 = vpack.c.b16 %v832, %v829
          %v860 = vpack.c.b16 %v833, %v830
          %v861 = vpack.c.b16 %v837, %v834
          %v862 = vpack.c.b16 %v838, %v835
          %v863 = vpack.c.b16 %v839, %v836
          %888 = vmatpush.bf16.msra.mxu0 %v861
          %889 = vmatpush.bf16.msra.mxu0 %v858
          %890 = vmatpush.bf16.msra.mxu0 %v855
          %891 = vmatpush.bf16.msra.mxu0 %v852
          %892 = vmatpush.bf16.msra.mxu0 %v849
          %893 = vmatpush.bf16.msra.mxu0 %v846
          %894 = vmatpush.bf16.msra.mxu0 %v843
          %895 = vmatpush.bf16.msra.mxu0 %v840
          %896 = vmatmul.bf16.gmra.mxu0 %v719
          %v897 = vpop.f32.mrf.mxu0
          %v898 = vadd.f32 %v754, %v897
          %v899 = vpop.f32.mrf.mxu0
          %900 = vdwg.mxu0
          %901 = vmatpush.bf16.msra.mxu0 %v862
          %902 = vmatpush.bf16.msra.mxu0 %v859
          %903 = vmatpush.bf16.msra.mxu0 %v856
          %904 = vmatpush.bf16.msra.mxu0 %v853
          %905 = vmatpush.bf16.msra.mxu0 %v850
          %906 = vmatpush.bf16.msra.mxu0 %v847
          %907 = vmatpush.bf16.msra.mxu0 %v844
          %908 = vmatpush.bf16.msra.mxu0 %v841
          %909 = vmatmul.bf16.gmra.mxu0 %v719
          %v910 = vpop.f32.mrf.mxu0
          %v911 = vadd.f32 %v755, %v910
          %v912 = vpop.f32.mrf.mxu0
          %913 = vdwg.mxu0
          %914 = vmatpush.bf16.msra.mxu0 %v863
          %915 = vmatpush.bf16.msra.mxu0 %v860
          %916 = vmatpush.bf16.msra.mxu0 %v857
          %917 = vmatpush.bf16.msra.mxu0 %v854
          %918 = vmatpush.bf16.msra.mxu0 %v851
          %919 = vmatpush.bf16.msra.mxu0 %v848
          %920 = vmatpush.bf16.msra.mxu0 %v845
          %921 = vmatpush.bf16.msra.mxu0 %v842
          %922 = vmatmul.bf16.gmra.mxu0 %v719
          %v923 = vpop.f32.mrf.mxu0
          %v924 = vadd.f32 %v756, %v923
          %v925 = vpop.f32.mrf.mxu0
          %926 = vdwg.mxu0
          %929 = vrot.lane.b32.xlu0 %v898, 32
          %v930 = vpop.permute.xlu0 %929
          %931 = vrot.lane.b32.xlu0 %v911, 32
          %v932 = vpop.permute.xlu0 %931
          %vm933 = vcmask 261120
          %v934 = vsel %vm933, %v930, %v932
          %937 = vrot.lane.b32.xlu0 %v911, 64
          %v938 = vpop.permute.xlu0 %937
          %939 = vrot.lane.b32.xlu0 %v924, 64
          %v940 = vpop.permute.xlu0 %939
          %vm941 = vcmask 523264
          %v942 = vsel %vm941, %v938, %v940
          %944 = vrot.lane.b32.xlu0 %v924, 96
          %v945 = vpop.permute.xlu0 %944
          %v947 = vrot.slane %v942, 4
          %vm948 = vcmask 1047556
          %v949 = vsel %vm948, %v947, %v898
          %v950 = vrot.slane %v898, 4
          %v951 = vsel %vm948, %v942, %v950
          %v953 = vunpack.c.l.s4 1983009808
          %v954 = vunpack.c.0.s8 %v953
          %v955 = vperm.slane %v949, %v954
          %v957 = vunpack.c.l.s4 1983009808
          %v958 = vunpack.c.0.s8 %v957
          %v959 = vperm.slane %v951, %v958
          %v960 = vrot.slane %v945, 4
          %v961 = vsel %vm948, %v960, %v934
          %v962 = vrot.slane %v934, 4
          %v963 = vsel %vm948, %v945, %v962
          %v965 = vunpack.c.l.s4 1983009808
          %v966 = vunpack.c.0.s8 %v965
          %v967 = vperm.slane %v961, %v966
          %v969 = vunpack.c.l.s4 1983009808
          %v970 = vunpack.c.0.s8 %v969
          %v971 = vperm.slane %v963, %v970
          %v972 = vrot.slane %v967, 4
          %v973 = vsel %vm948, %v972, %v955
          %v974 = vrot.slane %v955, 4
          %v975 = vsel %vm948, %v967, %v974
          %v977 = vunpack.c.l.s4 1934713408
          %v978 = vunpack.c.0.s8 %v977
          %v979 = vperm.slane %v973, %v978
          %v981 = vunpack.c.l.s4 1934713408
          %v982 = vunpack.c.0.s8 %v981
          %v983 = vperm.slane %v975, %v982
          %v984 = vrot.slane %v971, 4
          %v985 = vsel %vm948, %v984, %v959
          %v986 = vrot.slane %v959, 4
          %v987 = vsel %vm948, %v971, %v986
          %v989 = vunpack.c.l.s4 1934713408
          %v990 = vunpack.c.0.s8 %v989
          %v991 = vperm.slane %v985, %v990
          %v993 = vunpack.c.l.s4 1934713408
          %v994 = vunpack.c.0.s8 %v993
          %v995 = vperm.slane %v987, %v994
          %v996 = vrot.slane %v979, 4
          %v997 = vsel %vm948, 0.0, %v996
          %v998 = vrot.slane %v983, 4
          %v999 = vsel %vm948, 0.0, %v998
          %v1000 = vrot.slane %v991, 4
          %v1001 = vsel %vm948, 0.0, %v1000
          %v1002 = vrot.slane %v995, 4
          %v1003 = vsel %vm948, 0.0, %v1002
          %v1004 = vsel %vm948, %v998, %v979
          %v1006 = vunpack.c.l.s4 1983009808
          %v1007 = vunpack.c.0.s8 %v1006
          %v1008 = vperm.slane %v1004, %v1007
          %v1009 = vrot.slane %v999, 4
          %v1010 = vsel %vm948, %v1009, %v997
          %v1012 = vunpack.c.l.s4 1983009808
          %v1013 = vunpack.c.0.s8 %v1012
          %v1014 = vperm.slane %v1010, %v1013
          %v1015 = vsel %vm948, %v1002, %v991
          %v1017 = vunpack.c.l.s4 1983009808
          %v1018 = vunpack.c.0.s8 %v1017
          %v1019 = vperm.slane %v1015, %v1018
          %v1020 = vrot.slane %v1003, 4
          %v1021 = vsel %vm948, %v1020, %v1001
          %v1023 = vunpack.c.l.s4 1983009808
          %v1024 = vunpack.c.0.s8 %v1023
          %v1025 = vperm.slane %v1021, %v1024
          %v1026 = vrot.slane %v1014, 4
          %v1027 = vsel %vm948, %v1026, %v1008
          %v1028 = vrot.slane %v1008, 4
          %v1029 = vsel %vm948, %v1014, %v1028
          %v1031 = vunpack.c.l.s4 1934713408
          %v1032 = vunpack.c.0.s8 %v1031
          %v1033 = vperm.slane %v1027, %v1032
          %v1035 = vunpack.c.l.s4 1934713408
          %v1036 = vunpack.c.0.s8 %v1035
          %v1037 = vperm.slane %v1029, %v1036
          %v1038 = vrot.slane %v1025, 4
          %v1039 = vsel %vm948, %v1038, %v1019
          %v1040 = vrot.slane %v1019, 4
          %v1041 = vsel %vm948, %v1025, %v1040
          %v1043 = vunpack.c.l.s4 1934713408
          %v1044 = vunpack.c.0.s8 %v1043
          %v1045 = vperm.slane %v1039, %v1044
          %v1047 = vunpack.c.l.s4 1934713408
          %v1048 = vunpack.c.0.s8 %v1047
          %v1049 = vperm.slane %v1041, %v1048
          %v1050 = vrot.slane %v1045, 4
          %v1051 = vsel %vm948, %v1050, %v1033
          %v1052 = vrot.slane %v1033, 4
          %v1053 = vsel %vm948, %v1045, %v1052
          %v1054 = vrot.slane %v1049, 4
          %v1055 = vsel %vm948, %v1054, %v1037
          %v1056 = vrot.slane %v1037, 4
          %v1057 = vsel %vm948, %v1049, %v1056
          %v1058 = vmul.f32 %v1051, 0.17677669
          %v1059 = vmul.f32 %v1053, 0.17677669
          %v1060 = vmul.f32 %v1055, 0.17677669
          %v1061 = vmul.f32 %v1057, 0.17677669
          %v1062 = vlaneseq
          %v1063 = vshrl.u32 %v1062, 7
          %v1064 = vlaneseq
          %v1065 = vand.u32 %v1064, 127
          %vm1066 = vcmp.ge.s32.totalorder %v1063, %v1065
          %v1067 = vpack.c.bf16 %v1058, %v1058
          %v1068 = vpack.c.bf16 %v1059, %v1059
          %v1069 = vpack.c.bf16 %v1060, %v1060
          %v1070 = vpack.c.bf16 %v1061, %v1061
          %v1071 = vpack.c.bf16 %v1051, %v1051
          %v1072 = vpack.c.bf16 %v1053, %v1053
          %v1073 = vpack.c.bf16 %v1055, %v1055
          %v1074 = vpack.c.bf16 %v1057, %v1057
          %v1076 = vunpack.c.l.b16 %v1071
          %v1077 = vpack.c.b16 %v1076, %v1076
          %1078 = vrot.lane.b32.xlu0 %v1077, 96
          %v1079 = vpop.permute.xlu0 %1078
          %v1081 = vsel %vm933, %v1067, 0
          %v1084 = vsel %vm933, %v1079, 0
          %1086 = vmatpush.bf16.xpose.msra.mxu0 0
          %1087 = vmatpush.bf16.xpose.msra.mxu0 0
          %1088 = vmatpush.bf16.xpose.msra.mxu0 0
          %1089 = vmatpush.bf16.xpose.msra.mxu0 0
          %1090 = vmatpush.bf16.xpose.msra.mxu0 0
          %1091 = vmatpush.bf16.xpose.msra.mxu0 0
          %1092 = vmatpush.bf16.xpose.msra.mxu0 0
          %1093 = vmatpush.bf16.xpose.msra.mxu0 %v1084
          %1094 = vmatmul.bf16.gmra.mxu0 %v1081
          %v1095 = vpop.f32.mrf.mxu0
          %v1096 = vadd.f32 0.0, %v1095
          %v1097 = vpop.f32.mrf.mxu0
          %1098 = vdwg.mxu0
          %v1100 = vunpack.c.l.b16 %v1072
          %v1101 = vpack.c.b16 %v1100, %v1100
          %1102 = vrot.lane.b32.xlu0 %v1101, 96
          %v1103 = vpop.permute.xlu0 %1102
          %v1105 = vsel %vm933, %v1068, 0
          %v1108 = vsel %vm933, %v1103, 0
          %1110 = vmatpush.bf16.xpose.msra.mxu0 0
          %1111 = vmatpush.bf16.xpose.msra.mxu0 0
          %1112 = vmatpush.bf16.xpose.msra.mxu0 0
          %1113 = vmatpush.bf16.xpose.msra.mxu0 0
          %1114 = vmatpush.bf16.xpose.msra.mxu0 0
          %1115 = vmatpush.bf16.xpose.msra.mxu0 0
          %1116 = vmatpush.bf16.xpose.msra.mxu0 0
          %1117 = vmatpush.bf16.xpose.msra.mxu0 %v1108
          %1118 = vmatmul.bf16.gmra.mxu0 %v1105
          %v1119 = vpop.f32.mrf.mxu0
          %v1120 = vadd.f32 0.0, %v1119
          %v1121 = vpop.f32.mrf.mxu0
          %1122 = vdwg.mxu0
          %v1124 = vunpack.c.l.b16 %v1073
          %v1125 = vpack.c.b16 %v1124, %v1124
          %1126 = vrot.lane.b32.xlu0 %v1125, 96
          %v1127 = vpop.permute.xlu0 %1126
          %v1129 = vsel %vm933, %v1069, 0
          %v1132 = vsel %vm933, %v1127, 0
          %1134 = vmatpush.bf16.xpose.msra.mxu0 0
          %1135 = vmatpush.bf16.xpose.msra.mxu0 0
          %1136 = vmatpush.bf16.xpose.msra.mxu0 0
          %1137 = vmatpush.bf16.xpose.msra.mxu0 0
          %1138 = vmatpush.bf16.xpose.msra.mxu0 0
          %1139 = vmatpush.bf16.xpose.msra.mxu0 0
          %1140 = vmatpush.bf16.xpose.msra.mxu0 0
          %1141 = vmatpush.bf16.xpose.msra.mxu0 %v1132
          %1142 = vmatmul.bf16.gmra.mxu0 %v1129
          %v1143 = vpop.f32.mrf.mxu0
          %v1144 = vadd.f32 0.0, %v1143
          %v1145 = vpop.f32.mrf.mxu0
          %1146 = vdwg.mxu0
          %v1148 = vunpack.c.l.b16 %v1074
          %v1149 = vpack.c.b16 %v1148, %v1148
          %1150 = vrot.lane.b32.xlu0 %v1149, 96
          %v1151 = vpop.permute.xlu0 %1150
          %v1153 = vsel %vm933, %v1070, 0
          %v1156 = vsel %vm933, %v1151, 0
          %1158 = vmatpush.bf16.xpose.msra.mxu0 0
          %1159 = vmatpush.bf16.xpose.msra.mxu0 0
          %1160 = vmatpush.bf16.xpose.msra.mxu0 0
          %1161 = vmatpush.bf16.xpose.msra.mxu0 0
          %1162 = vmatpush.bf16.xpose.msra.mxu0 0
          %1163 = vmatpush.bf16.xpose.msra.mxu0 0
          %1164 = vmatpush.bf16.xpose.msra.mxu0 0
          %1165 = vmatpush.bf16.xpose.msra.mxu0 %v1156
          %1166 = vmatmul.bf16.gmra.mxu0 %v1153
          %v1167 = vpop.f32.mrf.mxu0
          %v1168 = vadd.f32 0.0, %v1167
          %v1169 = vpop.f32.mrf.mxu0
          %1170 = vdwg.mxu0
          %v1171 = vsel %vm1066, 1, 0
          %vm1172 = vcmp.eq.s32.totalorder %v1171, 1
          %v1173 = vsel %vm1172, %v1096, -1e+30
          %v1174 = vsel %vm1172, %v1120, -1e+30
          %v1175 = vsel %vm1172, %v1144, -1e+30
          %v1176 = vsel %vm1172, %v1168, -1e+30
          %vm1177 = vcmask 64512
          %v1178 = vsel %vm1177, %v1173, -inf
          %1179 = vmax.xlane.f32.xlu0 %v1178
          %v1180 = vpop.xlane.xlu0 %1179
          %v1181 = vsel %vm1177, %v1174, -inf
          %1182 = vmax.xlane.f32.xlu0 %v1181
          %v1183 = vpop.xlane.xlu0 %1182
          %v1184 = vsel %vm1177, %v1175, -inf
          %1185 = vmax.xlane.f32.xlu0 %v1184
          %v1186 = vpop.xlane.xlu0 %1185
          %v1187 = vsel %vm1177, %v1176, -inf
          %1188 = vmax.xlane.f32.xlu0 %v1187
          %v1189 = vpop.xlane.xlu0 %1188
          %v1190 = vsub.f32 %v1173, %v1180
          %v1191 = vsub.f32 %v1174, %v1183
          %v1192 = vsub.f32 %v1175, %v1186
          %v1193 = vsub.f32 %v1176, %v1189
          %v1194 = vmul.f32 %v1190, 1.442695
          %v1195 = vpow.pop %v1194
          %v1196 = vmul.f32 %v1191, 1.442695
          %v1197 = vpow.pop %v1196
          %v1198 = vmul.f32 %v1192, 1.442695
          %v1199 = vpow.pop %v1198
          %v1200 = vmul.f32 %v1193, 1.442695
          %v1201 = vpow.pop %v1200
          %v1202 = vsel %vm1177, %v1195, 0.0
          %1203 = vadd.xlane.f32.xlu0 %v1202
          %v1204 = vpop.xlane.xlu0 %1203
          %v1205 = vsel %vm1177, %v1197, 0.0
          %1206 = vadd.xlane.f32.xlu0 %v1205
          %v1207 = vpop.xlane.xlu0 %1206
          %v1208 = vsel %vm1177, %v1199, 0.0
          %1209 = vadd.xlane.f32.xlu0 %v1208
          %v1210 = vpop.xlane.xlu0 %1209
          %v1211 = vsel %vm1177, %v1201, 0.0
          %1212 = vadd.xlane.f32.xlu0 %v1211
          %v1213 = vpop.xlane.xlu0 %1212
          %v1214 = vrcp.pop %v1204
          %v1215 = vrcp.pop %v1207
          %v1216 = vrcp.pop %v1210
          %v1217 = vrcp.pop %v1213
          %v1218 = vmul.f32 %v1195, %v1214
          %v1219 = vmul.f32 %v1197, %v1215
          %v1220 = vmul.f32 %v1199, %v1216
          %v1221 = vmul.f32 %v1201, %v1217
          %v1222 = vpack.c.bf16 %v1218, %v1218
          %v1223 = vpack.c.bf16 %v1219, %v1219
          %v1224 = vpack.c.bf16 %v1220, %v1220
          %v1225 = vpack.c.bf16 %v1221, %v1221
          %1226 = vrot.lane.b32.xlu0 %v1077, 64
          %v1227 = vpop.permute.xlu0 %1226
          %v1229 = vsel %vm1177, %v1222, 0
          %vm1231 = vcmask 1043456
          %v1233 = vsel %vm1231, %v1227, 0
          %1235 = vmatpush.bf16.msra.mxu0 0
          %1236 = vmatpush.bf16.msra.mxu0 0
          %1237 = vmatpush.bf16.msra.mxu0 0
          %1238 = vmatpush.bf16.msra.mxu0 0
          %1239 = vmatpush.bf16.msra.mxu0 0
          %1240 = vmatpush.bf16.msra.mxu0 0
          %1241 = vmatpush.bf16.msra.mxu0 0
          %1242 = vmatpush.bf16.msra.mxu0 %v1233
          %1243 = vmatmul.bf16.gmra.mxu0 %v1229
          %v1244 = vpop.f32.mrf.mxu0
          %v1245 = vadd.f32 0.0, %v1244
          %v1246 = vpop.f32.mrf.mxu0
          %1247 = vdwg.mxu0
          %1248 = vrot.lane.b32.xlu0 %v1101, 64
          %v1249 = vpop.permute.xlu0 %1248
          %v1251 = vsel %vm1177, %v1223, 0
          %v1254 = vsel %vm1231, %v1249, 0
          %1256 = vmatpush.bf16.msra.mxu0 0
          %1257 = vmatpush.bf16.msra.mxu0 0
          %1258 = vmatpush.bf16.msra.mxu0 0
          %1259 = vmatpush.bf16.msra.mxu0 0
          %1260 = vmatpush.bf16.msra.mxu0 0
          %1261 = vmatpush.bf16.msra.mxu0 0
          %1262 = vmatpush.bf16.msra.mxu0 0
          %1263 = vmatpush.bf16.msra.mxu0 %v1254
          %1264 = vmatmul.bf16.gmra.mxu0 %v1251
          %v1265 = vpop.f32.mrf.mxu0
          %v1266 = vadd.f32 0.0, %v1265
          %v1267 = vpop.f32.mrf.mxu0
          %1268 = vdwg.mxu0
          %1269 = vrot.lane.b32.xlu0 %v1125, 64
          %v1270 = vpop.permute.xlu0 %1269
          %v1272 = vsel %vm1177, %v1224, 0
          %v1275 = vsel %vm1231, %v1270, 0
          %1277 = vmatpush.bf16.msra.mxu0 0
          %1278 = vmatpush.bf16.msra.mxu0 0
          %1279 = vmatpush.bf16.msra.mxu0 0
          %1280 = vmatpush.bf16.msra.mxu0 0
          %1281 = vmatpush.bf16.msra.mxu0 0
          %1282 = vmatpush.bf16.msra.mxu0 0
          %1283 = vmatpush.bf16.msra.mxu0 0
          %1284 = vmatpush.bf16.msra.mxu0 %v1275
          %1285 = vmatmul.bf16.gmra.mxu0 %v1272
          %v1286 = vpop.f32.mrf.mxu0
          %v1287 = vadd.f32 0.0, %v1286
          %v1288 = vpop.f32.mrf.mxu0
          %1289 = vdwg.mxu0
          %1290 = vrot.lane.b32.xlu0 %v1149, 64
          %v1291 = vpop.permute.xlu0 %1290
          %v1293 = vsel %vm1177, %v1225, 0
          %v1296 = vsel %vm1231, %v1291, 0
          %1298 = vmatpush.bf16.msra.mxu0 0
          %1299 = vmatpush.bf16.msra.mxu0 0
          %1300 = vmatpush.bf16.msra.mxu0 0
          %1301 = vmatpush.bf16.msra.mxu0 0
          %1302 = vmatpush.bf16.msra.mxu0 0
          %1303 = vmatpush.bf16.msra.mxu0 0
          %1304 = vmatpush.bf16.msra.mxu0 0
          %1305 = vmatpush.bf16.msra.mxu0 %v1296
          %1306 = vmatmul.bf16.gmra.mxu0 %v1293
          %v1307 = vpop.f32.mrf.mxu0
          %v1308 = vadd.f32 0.0, %v1307
          %v1309 = vpop.f32.mrf.mxu0
          %1310 = vdwg.mxu0
          %v1311 = vpack.c.bf16 %v1245, %v1245
          %v1312 = vpack.c.bf16 %v1266, %v1266
          %v1313 = vpack.c.bf16 %v1287, %v1287
          %v1314 = vpack.c.bf16 %v1308, %v1308
          %v1317 = vpack.i.b16 %v1312, %v1311
          %v1318 = vshrl.u32 %v1311, 16
          %v1319 = vshrl.u32 %v1312, 16
          %v1320 = vpack.i.b16 %v1319, %v1318
          %v1323 = vpack.i.b16 %v1314, %v1313
          %v1324 = vshrl.u32 %v1313, 16
          %v1325 = vshrl.u32 %v1314, 16
          %v1326 = vpack.i.b16 %v1325, %v1324
          %v1329 = vunpack.c.l.s4 1983009808
          %v1330 = vunpack.c.0.s8 %v1329
          %v1331 = vperm.slane %v1317, %v1330
          %v1334 = vunpack.c.l.s4 1983009808
          %v1335 = vunpack.c.0.s8 %v1334
          %v1336 = vperm.slane %v1323, %v1335
          %v1337 = vrot.slane %v1336, 4
          %vm1338 = vcmask 1047556
          %v1339 = vsel %vm1338, %v1337, %v1331
          %v1340 = vrot.slane %v1331, 4
          %v1341 = vsel %vm1338, %v1336, %v1340
          %v1343 = vunpack.c.l.s4 1934713408
          %v1344 = vunpack.c.0.s8 %v1343
          %v1345 = vperm.slane %v1339, %v1344
          %v1347 = vunpack.c.l.s4 1934713408
          %v1348 = vunpack.c.0.s8 %v1347
          %v1349 = vperm.slane %v1341, %v1348
          %v1350 = vrot.slane %v1345, 4
          %v1351 = vsel %vm1338, 0, %v1350
          %v1352 = vrot.slane %v1349, 4
          %v1353 = vsel %vm1338, 0, %v1352
          %v1356 = vunpack.c.l.s4 1983009808
          %v1357 = vunpack.c.0.s8 %v1356
          %v1358 = vperm.slane %v1320, %v1357
          %v1361 = vunpack.c.l.s4 1983009808
          %v1362 = vunpack.c.0.s8 %v1361
          %v1363 = vperm.slane %v1326, %v1362
          %v1364 = vrot.slane %v1363, 4
          %v1365 = vsel %vm1338, %v1364, %v1358
          %v1366 = vrot.slane %v1358, 4
          %v1367 = vsel %vm1338, %v1363, %v1366
          %v1369 = vunpack.c.l.s4 1934713408
          %v1370 = vunpack.c.0.s8 %v1369
          %v1371 = vperm.slane %v1365, %v1370
          %v1373 = vunpack.c.l.s4 1934713408
          %v1374 = vunpack.c.0.s8 %v1373
          %v1375 = vperm.slane %v1367, %v1374
          %v1376 = vrot.slane %v1371, 4
          %v1377 = vsel %vm1338, 0, %v1376
          %v1378 = vrot.slane %v1375, 4
          %v1379 = vsel %vm1338, 0, %v1378
          %v1380 = vsel %vm1338, %v1352, %v1345
          %v1382 = vunpack.c.l.s4 1983009808
          %v1383 = vunpack.c.0.s8 %v1382
          %v1384 = vperm.slane %v1380, %v1383
          %v1385 = vrot.slane %v1353, 4
          %v1386 = vsel %vm1338, %v1385, %v1351
          %v1388 = vunpack.c.l.s4 1983009808
          %v1389 = vunpack.c.0.s8 %v1388
          %v1390 = vperm.slane %v1386, %v1389
          %v1391 = vrot.slane %v1390, 4
          %v1392 = vsel %vm1338, %v1391, %v1384
          %v1394 = vunpack.c.l.s4 1934713408
          %v1395 = vunpack.c.0.s8 %v1394
          %v1396 = vperm.slane %v1392, %v1395
          %v1397 = vrot.slane %v1396, 4
          %v1398 = vsel %vm1338, 0, %v1397
          %v1399 = vsel %vm1338, %v1378, %v1371
          %v1401 = vunpack.c.l.s4 1983009808
          %v1402 = vunpack.c.0.s8 %v1401
          %v1403 = vperm.slane %v1399, %v1402
          %v1404 = vrot.slane %v1379, 4
          %v1405 = vsel %vm1338, %v1404, %v1377
          %v1407 = vunpack.c.l.s4 1983009808
          %v1408 = vunpack.c.0.s8 %v1407
          %v1409 = vperm.slane %v1405, %v1408
          %v1410 = vrot.slane %v1409, 4
          %v1411 = vsel %vm1338, %v1410, %v1403
          %v1413 = vunpack.c.l.s4 1934713408
          %v1414 = vunpack.c.0.s8 %v1413
          %v1415 = vperm.slane %v1411, %v1414
          %v1416 = vrot.slane %v1415, 4
          %v1417 = vsel %vm1338, 0, %v1416
          %v1420 = vpack.i.b16 %v1415, %v1396
          %v1421 = vshrl.u32 %v1396, 16
          %v1422 = vshrl.u32 %v1415, 16
          %v1423 = vpack.i.b16 %v1422, %v1421
          %v1426 = vpack.i.b16 %v1417, %v1398
          %v1427 = vshrl.u32 %v1398, 16
          %v1428 = vshrl.u32 %v1417, 16
          %v1429 = vpack.i.b16 %v1428, %v1427
          %v1430 = vunpack.c.l.b16 %v1423
          %v1431 = vpack.c.b16 %v1430, %v1430
          %1432 = vrot.lane.b32.xlu0 %v1431, 32
          %v1433 = vpop.permute.xlu0 %1432
          %v1434 = vunpack.c.l.b16 %v1426
          %v1435 = vpack.c.b16 %v1434, %v1434
          %1436 = vrot.lane.b32.xlu0 %v1435, 64
          %v1437 = vpop.permute.xlu0 %1436
          %v1438 = vunpack.c.l.b16 %v1429
          %v1439 = vpack.c.b16 %v1438, %v1438
          %1440 = vrot.lane.b32.xlu0 %v1439, 96
          %v1441 = vpop.permute.xlu0 %1440
          %v1444 = vsel %vm933, %v1420, %v1433
          %v1446 = vsel %vm941, %v1444, %v1437
          %vm1447 = vcmask 785408
          %v1449 = vsel %vm1447, %v1446, %v1441
          %v1451 = vld [vmem:[#allocation13] sm:$0xf]
          %v1452 = vld [vmem:[#allocation13 + $0x4] sm:$0xf]
          %v1453 = vld [vmem:[#allocation13 + $0x8] sm:$0xf]
          %v1454 = vld [vmem:[#allocation13 + $0xc] sm:$0xf]
          %v1455 = vld [vmem:[#allocation13 + $0x10] sm:$0xf]
          %v1456 = vld [vmem:[#allocation13 + $0x14] sm:$0xf]
          %v1457 = vld [vmem:[#allocation13 + $0x18] sm:$0xf]
          %v1458 = vld [vmem:[#allocation13 + $0x1c] sm:$0xf]
          %v1459 = vld [vmem:[#allocation13 + $0x20] sm:$0xf]
          %v1460 = vld [vmem:[#allocation13 + $0x24] sm:$0xf]
          %v1461 = vld [vmem:[#allocation13 + $0x28] sm:$0xf]
          %v1462 = vld [vmem:[#allocation13 + $0x2c] sm:$0xf]
          %v1463 = vld [vmem:[#allocation13 + $0x30] sm:$0xf]
          %v1464 = vld [vmem:[#allocation13 + $0x34] sm:$0xf]
          %v1465 = vld [vmem:[#allocation13 + $0x38] sm:$0xf]
          %v1466 = vld [vmem:[#allocation13 + $0x3c] sm:$0xf]
          %v1467 = vld [vmem:[#allocation14] sm:$0x1]
          %v1469 = vperm.slane %v1467, 0
          %v1487 = vunpack.c.l.b16 %v1451
          %v1488 = vunpack.c.l.b16 %v1452
          %v1489 = vunpack.c.l.b16 %v1453
          %v1490 = vunpack.c.l.b16 %v1454
          %v1491 = vunpack.c.l.b16 %v1455
          %v1492 = vunpack.c.l.b16 %v1456
          %v1493 = vunpack.c.l.b16 %v1457
          %v1494 = vunpack.c.l.b16 %v1458
          %v1495 = vunpack.c.l.b16 %v1459
          %v1496 = vunpack.c.l.b16 %v1460
          %v1497 = vunpack.c.l.b16 %v1461
          %v1498 = vunpack.c.l.b16 %v1462
          %v1499 = vunpack.c.l.b16 %v1463
          %v1500 = vunpack.c.l.b16 %v1464
          %v1501 = vunpack.c.l.b16 %v1465
          %v1502 = vunpack.c.l.b16 %v1466
          %v1503 = vpack.c.b16 %v1488, %v1487
          %v1504 = vpack.c.b16 %v1490, %v1489
          %v1505 = vpack.c.b16 %v1492, %v1491
          %v1506 = vpack.c.b16 %v1494, %v1493
          %v1507 = vpack.c.b16 %v1496, %v1495
          %v1508 = vpack.c.b16 %v1498, %v1497
          %v1509 = vpack.c.b16 %v1500, %v1499
          %v1510 = vpack.c.b16 %v1502, %v1501
          %1519 = vmatpush.bf16.msra.mxu0 %v1510
          %1520 = vmatpush.bf16.msra.mxu0 %v1509
          %1521 = vmatpush.bf16.msra.mxu0 %v1508
          %1522 = vmatpush.bf16.msra.mxu0 %v1507
          %1523 = vmatpush.bf16.msra.mxu0 %v1506
          %1524 = vmatpush.bf16.msra.mxu0 %v1505
          %1525 = vmatpush.bf16.msra.mxu0 %v1504
          %1526 = vmatpush.bf16.msra.mxu0 %v1503
          %1527 = vmatmul.bf16.gmra.mxu0 %v1449
          %v1528 = vpop.f32.mrf.mxu0
          %v1529 = vadd.f32 %v1469, %v1528
          %v1530 = vpop.f32.mrf.mxu0
          %1531 = vdwg.mxu0
          %v1532 = vadd.f32 %v681, %v1529
          %1533 = vst [vmem:[#allocation2] sm:$0xff] %v1532
          %v1534 = vld [vmem:[#allocation16] sm:$0x1]
          %v1535 = vld [vmem:[#allocation17] sm:$0x1]
          %1536 = vadd.xlane.f32.xlu0 %v1532
          %v1537 = vpop.xlane.xlu0 %1536
          %v1538 = vmul.f32 %v1537, %v692
          %v1539 = vsub.f32 %v1532, %v1538
          %v1540 = vmul.f32 %v1539, %v1539
          %1541 = vadd.xlane.f32.xlu0 %v1540
          %v1542 = vpop.xlane.xlu0 %1541
          %v1543 = vmul.f32 %v1542, %v692
          %v1544 = vadd.f32 %v1543, 1e-05
          %v1545 = vrsqrt.pop %v1544
          %v1546 = vmul.f32 %v1545, %v1544
          %v1547 = vmul.f32 %v1546, %v1545
          %v1548 = vmul.f32 0.5, %v1547
          %v1549 = vsub.f32 1.5, %v1548
          %v1550 = vmul.f32 %v1545, %v1549
          %vm1551 = vweird.f32 %v1544
          %vm1552 = vweird.f32 %v1545
          %vm1553 = vmor %vm1551, %vm1552
          %v1554 = vsel %vm1553, %v1545, %v1550
          %v1555 = vmul.f32 %v1539, %v1554
          %v1557 = vperm.slane %v1534, 0
          %v1559 = vmul.f32 %v1555, %v1557
          %v1561 = vperm.slane %v1535, 0
          %v1563 = vadd.f32 %v1559, %v1561
          %v1564 = vpack.c.bf16 %v1563, %v1563
          %1565 = vst [vmem:[#allocation3] sm:$0xf] %v1564
          %1566 = vst [vmem:[#allocation4] sm:$0xff] 0.0
        $region116: #{tpu_custom_call.1} parent=71 // pred_fallthru
          _
        %v1567 = vld [vmem:[#allocation3] sm:$0xf]
        %v1568 = vld [vmem:[%s600] sm:$0xff]
        %v1569 = vld [vmem:[%s600 + $0x8] sm:$0xff]
        %v1570 = vld [vmem:[%s600 + $0x10] sm:$0xff]
        %v1571 = vld [vmem:[%s600 + $0x18] sm:$0xff]
        %v1572 = vld [vmem:[%s600 + $0x20] sm:$0xff]
        %v1573 = vld [vmem:[%s600 + $0x28] sm:$0xff]
        %v1574 = vld [vmem:[%s600 + $0x30] sm:$0xff]
        %v1575 = vld [vmem:[%s600 + $0x38] sm:$0xff]
        %v1576 = vld [vmem:[%s600 + $0x40] sm:$0xff]
        %v1577 = vld [vmem:[%s600 + $0x48] sm:$0xff]
        %v1578 = vld [vmem:[%s600 + $0x50] sm:$0xff]
        %v1579 = vld [vmem:[%s600 + $0x58] sm:$0xff]
        %v1580 = vld [vmem:[%s600 + $0x60] sm:$0xff]
        %v1581 = vld [vmem:[%s600 + $0x68] sm:$0xff]
        %v1582 = vld [vmem:[%s600 + $0x70] sm:$0xff]
        %v1583 = vld [vmem:[%s600 + $0x78] sm:$0xff]
        %v1584 = vld [vmem:[%s672] sm:$0x3]
        %v1586 = vperm.slane %v1584, 0
        %v1587 = vperm.slane %v1584, 1
        %v1606 = vunpack.c.l.b16 %v1568
        %v1607 = vunpack.c.h.b16 %v1568
        %v1608 = vunpack.c.l.b16 %v1569
        %v1609 = vunpack.c.h.b16 %v1569
        %v1610 = vunpack.c.l.b16 %v1570
        %v1611 = vunpack.c.h.b16 %v1570
        %v1612 = vunpack.c.l.b16 %v1571
        %v1613 = vunpack.c.h.b16 %v1571
        %v1614 = vunpack.c.l.b16 %v1572
        %v1615 = vunpack.c.h.b16 %v1572
        %v1616 = vunpack.c.l.b16 %v1573
        %v1617 = vunpack.c.h.b16 %v1573
        %v1618 = vunpack.c.l.b16 %v1574
        %v1619 = vunpack.c.h.b16 %v1574
        %v1620 = vunpack.c.l.b16 %v1575
        %v1621 = vunpack.c.h.b16 %v1575
        %v1622 = vunpack.c.l.b16 %v1576
        %v1623 = vunpack.c.h.b16 %v1576
        %v1624 = vunpack.c.l.b16 %v1577
        %v1625 = vunpack.c.h.b16 %v1577
        %v1626 = vunpack.c.l.b16 %v1578
        %v1627 = vunpack.c.h.b16 %v1578
        %v1628 = vunpack.c.l.b16 %v1579
        %v1629 = vunpack.c.h.b16 %v1579
        %v1630 = vunpack.c.l.b16 %v1580
        %v1631 = vunpack.c.h.b16 %v1580
        %v1632 = vunpack.c.l.b16 %v1581
        %v1633 = vunpack.c.h.b16 %v1581
        %v1634 = vunpack.c.l.b16 %v1582
        %v1635 = vunpack.c.h.b16 %v1582
        %v1636 = vunpack.c.l.b16 %v1583
        %v1637 = vunpack.c.h.b16 %v1583
        %v1638 = vpack.c.b16 %v1608, %v1606
        %v1639 = vpack.c.b16 %v1609, %v1607
        %v1640 = vpack.c.b16 %v1612, %v1610
        %v1641 = vpack.c.b16 %v1613, %v1611
        %v1642 = vpack.c.b16 %v1616, %v1614
        %v1643 = vpack.c.b16 %v1617, %v1615
        %v1644 = vpack.c.b16 %v1620, %v1618
        %v1645 = vpack.c.b16 %v1621, %v1619
        %v1646 = vpack.c.b16 %v1624, %v1622
        %v1647 = vpack.c.b16 %v1625, %v1623
        %v1648 = vpack.c.b16 %v1628, %v1626
        %v1649 = vpack.c.b16 %v1629, %v1627
        %v1650 = vpack.c.b16 %v1632, %v1630
        %v1651 = vpack.c.b16 %v1633, %v1631
        %v1652 = vpack.c.b16 %v1636, %v1634
        %v1653 = vpack.c.b16 %v1637, %v1635
        %1670 = vmatpush.bf16.msra.mxu0 %v1652
        %1671 = vmatpush.bf16.msra.mxu0 %v1650
        %1672 = vmatpush.bf16.msra.mxu0 %v1648
        %1673 = vmatpush.bf16.msra.mxu0 %v1646
        %1674 = vmatpush.bf16.msra.mxu0 %v1644
        %1675 = vmatpush.bf16.msra.mxu0 %v1642
        %1676 = vmatpush.bf16.msra.mxu0 %v1640
        %1677 = vmatpush.bf16.msra.mxu0 %v1638
        %1678 = vmatmul.bf16.gmra.mxu0 %v1567
        %v1679 = vpop.f32.mrf.mxu0
        %v1680 = vadd.f32 %v1586, %v1679
        %v1681 = vpop.f32.mrf.mxu0
        %1682 = vdwg.mxu0
        %1683 = vmatpush.bf16.msra.mxu0 %v1653
        %1684 = vmatpush.bf16.msra.mxu0 %v1651
        %1685 = vmatpush.bf16.msra.mxu0 %v1649
        %1686 = vmatpush.bf16.msra.mxu0 %v1647
        %1687 = vmatpush.bf16.msra.mxu0 %v1645
        %1688 = vmatpush.bf16.msra.mxu0 %v1643
        %1689 = vmatpush.bf16.msra.mxu0 %v1641
        %1690 = vmatpush.bf16.msra.mxu0 %v1639
        %1691 = vmatmul.bf16.gmra.mxu0 %v1567
        %v1692 = vpop.f32.mrf.mxu0
        %v1693 = vadd.f32 %v1587, %v1692
        %v1694 = vpop.f32.mrf.mxu0
        %1695 = vdwg.mxu0
        %v1696 = vmul.f32 %v1680, 0.5
        %v1697 = vmul.f32 %v1693, 0.5
        %v1698 = vmul.f32 %v1680, 0.70710677
        %v1699 = vmul.f32 %v1693, 0.70710677
        %v1700 = vmul.f32 %v1698, %v1698
        %v1701 = vmin.f32 16.0, %v1700
        %v1702 = vmul.f32 %v1701, 2.1237322e-06
        %v1703 = vadd.f32 %v1702, 0.00028619796
        %v1704 = vmul.f32 %v1701, %v1703
        %v1705 = vadd.f32 %v1704, 0.0036580483
        %v1706 = vmul.f32 %v1701, %v1705
        %v1707 = vadd.f32 %v1706, 0.05243302
        %v1708 = vmul.f32 %v1701, %v1707
        %v1709 = vadd.f32 %v1708, 0.18741608
        %v1710 = vmul.f32 %v1701, %v1709
        %v1711 = vadd.f32 %v1710, 1.1283791
        %v1712 = vmul.f32 %v1698, %v1711
        %v1713 = vmul.f32 %v1701, 3.8918573e-05
        %v1714 = vadd.f32 %v1713, 0.001143296
        %v1715 = vmul.f32 %v1701, %v1714
        %v1716 = vadd.f32 %v1715, 0.014752088
        %v1717 = vmul.f32 %v1701, %v1716
        %v1718 = vadd.f32 %v1717, 0.112945676
        %v1719 = vmul.f32 %v1701, %v1718
        %v1720 = vadd.f32 %v1719, 0.4994258
        %v1721 = vmul.f32 %v1701, %v1720
        %v1722 = vadd.f32 %v1721, 1.0
        %v1723 = vrcp.pop %v1722
        %v1724 = vmul.f32 %v1722, %v1723
        %v1725 = vsub.f32 1.0, %v1724
        %v1726 = vmul.f32 %v1723, %v1725
        %v1727 = vadd.f32 %v1723, %v1726
        %vm1728 = vweird.f32 %v1722
        %vm1729 = vweird.f32 %v1723
        %vm1730 = vmor %vm1728, %vm1729
        %v1731 = vsel %vm1730, %v1723, %v1727
        %v1732 = vand.u32 2147483647, %v1722
        %vm1733 = vcmp.eq.f32.partialorder %v1732, 8.507059e+37
        %v1734 = vand.u32 %v1722, 2147483648
        %v1735 = vor.u32 1.1754944e-38, %v1734
        %v1736 = vsel %vm1733, %v1735, %v1731
        %v1737 = vmul.f32 %v1712, %v1736
        %v1738 = vmin.f32 %v1737, 1.0
        %v1739 = vmax.f32 %v1738, -1.0
        %v1740 = vmul.f32 %v1699, %v1699
        %v1741 = vmin.f32 16.0, %v1740
        %v1742 = vmul.f32 %v1741, 2.1237322e-06
        %v1743 = vadd.f32 %v1742, 0.00028619796
        %v1744 = vmul.f32 %v1741, %v1743
        %v1745 = vadd.f32 %v1744, 0.0036580483
        %v1746 = vmul.f32 %v1741, %v1745
        %v1747 = vadd.f32 %v1746, 0.05243302
        %v1748 = vmul.f32 %v1741, %v1747
        %v1749 = vadd.f32 %v1748, 0.18741608
        %v1750 = vmul.f32 %v1741, %v1749
        %v1751 = vadd.f32 %v1750, 1.1283791
        %v1752 = vmul.f32 %v1699, %v1751
        %v1753 = vmul.f32 %v1741, 3.8918573e-05
        %v1754 = vadd.f32 %v1753, 0.001143296
        %v1755 = vmul.f32 %v1741, %v1754
        %v1756 = vadd.f32 %v1755, 0.014752088
        %v1757 = vmul.f32 %v1741, %v1756
        %v1758 = vadd.f32 %v1757, 0.112945676
        %v1759 = vmul.f32 %v1741, %v1758
        %v1760 = vadd.f32 %v1759, 0.4994258
        %v1761 = vmul.f32 %v1741, %v1760
        %v1762 = vadd.f32 %v1761, 1.0
        %v1763 = vrcp.pop %v1762
        %v1764 = vmul.f32 %v1762, %v1763
        %v1765 = vsub.f32 1.0, %v1764
        %v1766 = vmul.f32 %v1763, %v1765
        %v1767 = vadd.f32 %v1763, %v1766
        %vm1768 = vweird.f32 %v1762
        %vm1769 = vweird.f32 %v1763
        %vm1770 = vmor %vm1768, %vm1769
        %v1771 = vsel %vm1770, %v1763, %v1767
        %v1772 = vand.u32 2147483647, %v1762
        %vm1773 = vcmp.eq.f32.partialorder %v1772, 8.507059e+37
        %v1774 = vand.u32 %v1762, 2147483648
        %v1775 = vor.u32 1.1754944e-38, %v1774
        %v1776 = vsel %vm1773, %v1775, %v1771
        %v1777 = vmul.f32 %v1752, %v1776
        %v1778 = vmin.f32 %v1777, 1.0
        %v1779 = vmax.f32 %v1778, -1.0
        %v1780 = vadd.f32 %v1739, 1.0
        %v1781 = vadd.f32 %v1779, 1.0
        %v1782 = vmul.f32 %v1696, %v1780
        %v1783 = vmul.f32 %v1697, %v1781
        %v1784 = vld [vmem:[#allocation4] sm:$0xff]
        %v1785 = vpack.c.bf16 %v1782, %v1782
        %v1786 = vpack.c.bf16 %v1783, %v1783
        %v1787 = vld [vmem:[%s610] sm:$0xf]
        %v1788 = vld [vmem:[%s610 + $0x4] sm:$0xf]
        %v1789 = vld [vmem:[%s610 + $0x8] sm:$0xf]
        %v1790 = vld [vmem:[%s610 + $0xc] sm:$0xf]
        %v1791 = vld [vmem:[%s610 + $0x10] sm:$0xf]
        %v1792 = vld [vmem:[%s610 + $0x14] sm:$0xf]
        %v1793 = vld [vmem:[%s610 + $0x18] sm:$0xf]
        %v1794 = vld [vmem:[%s610 + $0x1c] sm:$0xf]
        %v1795 = vld [vmem:[%s610 + $0x20] sm:$0xf]
        %v1796 = vld [vmem:[%s610 + $0x24] sm:$0xf]
        %v1797 = vld [vmem:[%s610 + $0x28] sm:$0xf]
        %v1798 = vld [vmem:[%s610 + $0x2c] sm:$0xf]
        %v1799 = vld [vmem:[%s610 + $0x30] sm:$0xf]
        %v1800 = vld [vmem:[%s610 + $0x34] sm:$0xf]
        %v1801 = vld [vmem:[%s610 + $0x38] sm:$0xf]
        %v1802 = vld [vmem:[%s610 + $0x3c] sm:$0xf]
        %v1803 = vld [vmem:[%s610 + $0x40] sm:$0xf]
        %v1804 = vld [vmem:[%s610 + $0x44] sm:$0xf]
        %v1805 = vld [vmem:[%s610 + $0x48] sm:$0xf]
        %v1806 = vld [vmem:[%s610 + $0x4c] sm:$0xf]
        %v1807 = vld [vmem:[%s610 + $0x50] sm:$0xf]
        %v1808 = vld [vmem:[%s610 + $0x54] sm:$0xf]
        %v1809 = vld [vmem:[%s610 + $0x58] sm:$0xf]
        %v1810 = vld [vmem:[%s610 + $0x5c] sm:$0xf]
        %v1811 = vld [vmem:[%s610 + $0x60] sm:$0xf]
        %v1812 = vld [vmem:[%s610 + $0x64] sm:$0xf]
        %v1813 = vld [vmem:[%s610 + $0x68] sm:$0xf]
        %v1814 = vld [vmem:[%s610 + $0x6c] sm:$0xf]
        %v1815 = vld [vmem:[%s610 + $0x70] sm:$0xf]
        %v1816 = vld [vmem:[%s610 + $0x74] sm:$0xf]
        %v1817 = vld [vmem:[%s610 + $0x78] sm:$0xf]
        %v1818 = vld [vmem:[%s610 + $0x7c] sm:$0xf]
        %v1851 = vunpack.c.l.b16 %v1787
        %v1852 = vunpack.c.l.b16 %v1788
        %v1853 = vunpack.c.l.b16 %v1789
        %v1854 = vunpack.c.l.b16 %v1790
        %v1855 = vunpack.c.l.b16 %v1791
        %v1856 = vunpack.c.l.b16 %v1792
        %v1857 = vunpack.c.l.b16 %v1793
        %v1858 = vunpack.c.l.b16 %v1794
        %v1859 = vunpack.c.l.b16 %v1795
        %v1860 = vunpack.c.l.b16 %v1796
        %v1861 = vunpack.c.l.b16 %v1797
        %v1862 = vunpack.c.l.b16 %v1798
        %v1863 = vunpack.c.l.b16 %v1799
        %v1864 = vunpack.c.l.b16 %v1800
        %v1865 = vunpack.c.l.b16 %v1801
        %v1866 = vunpack.c.l.b16 %v1802
        %v1867 = vunpack.c.l.b16 %v1803
        %v1868 = vunpack.c.l.b16 %v1804
        %v1869 = vunpack.c.l.b16 %v1805
        %v1870 = vunpack.c.l.b16 %v1806
        %v1871 = vunpack.c.l.b16 %v1807
        %v1872 = vunpack.c.l.b16 %v1808
        %v1873 = vunpack.c.l.b16 %v1809
        %v1874 = vunpack.c.l.b16 %v1810
        %v1875 = vunpack.c.l.b16 %v1811
        %v1876 = vunpack.c.l.b16 %v1812
        %v1877 = vunpack.c.l.b16 %v1813
        %v1878 = vunpack.c.l.b16 %v1814
        %v1879 = vunpack.c.l.b16 %v1815
        %v1880 = vunpack.c.l.b16 %v1816
        %v1881 = vunpack.c.l.b16 %v1817
        %v1882 = vunpack.c.l.b16 %v1818
        %v1883 = vpack.c.b16 %v1852, %v1851
        %v1884 = vpack.c.b16 %v1854, %v1853
        %v1885 = vpack.c.b16 %v1856, %v1855
        %v1886 = vpack.c.b16 %v1858, %v1857
        %v1887 = vpack.c.b16 %v1860, %v1859
        %v1888 = vpack.c.b16 %v1862, %v1861
        %v1889 = vpack.c.b16 %v1864, %v1863
        %v1890 = vpack.c.b16 %v1866, %v1865
        %v1891 = vpack.c.b16 %v1868, %v1867
        %v1892 = vpack.c.b16 %v1870, %v1869
        %v1893 = vpack.c.b16 %v1872, %v1871
        %v1894 = vpack.c.b16 %v1874, %v1873
        %v1895 = vpack.c.b16 %v1876, %v1875
        %v1896 = vpack.c.b16 %v1878, %v1877
        %v1897 = vpack.c.b16 %v1880, %v1879
        %v1898 = vpack.c.b16 %v1882, %v1881
        %1915 = vmatpush.bf16.msra.mxu0 %v1890
        %1916 = vmatpush.bf16.msra.mxu0 %v1889
        %1917 = vmatpush.bf16.msra.mxu0 %v1888
        %1918 = vmatpush.bf16.msra.mxu0 %v1887
        %1919 = vmatpush.bf16.msra.mxu0 %v1886
        %1920 = vmatpush.bf16.msra.mxu0 %v1885
        %1921 = vmatpush.bf16.msra.mxu0 %v1884
        %1922 = vmatpush.bf16.msra.mxu0 %v1883
        %1923 = vmatmul.bf16.gmra.mxu0 %v1785
        %v1924 = vpop.f32.mrf.mxu0
        %v1925 = vadd.f32 0.0, %v1924
        %v1926 = vpop.f32.mrf.mxu0
        %1927 = vdwg.mxu0
        %1928 = vmatpush.bf16.msra.mxu0 %v1898
        %1929 = vmatpush.bf16.msra.mxu0 %v1897
        %1930 = vmatpush.bf16.msra.mxu0 %v1896
        %1931 = vmatpush.bf16.msra.mxu0 %v1895
        %1932 = vmatpush.bf16.msra.mxu0 %v1894
        %1933 = vmatpush.bf16.msra.mxu0 %v1893
        %1934 = vmatpush.bf16.msra.mxu0 %v1892
        %1935 = vmatpush.bf16.msra.mxu0 %v1891
        %1936 = vmatmul.bf16.gmra.mxu0 %v1786
        %v1937 = vpop.f32.mrf.mxu0
        %v1938 = vadd.f32 %v1925, %v1937
        %v1939 = vpop.f32.mrf.mxu0
        %1940 = vdwg.mxu0
        %v1941 = vadd.f32 %v1784, %v1938
        %1942 = vst [vmem:[#allocation4] sm:$0xff] %v1941
        %p1943 = scmp.eq.s32.totalorder %s39, 1
        // Predicated region
        $region117: #{tpu_custom_call.1} parent=71 // pred_check
          %p1944 = pneg %p1943
        $region118: #{tpu_custom_call.1} parent=71 // pred_check_branch
          %1946 = sbr.rel (%p1944) target = $region120
        $region119: #{tpu_custom_call.1} parent=71 // pred_region
          %v1947 = vld [vmem:[#allocation2] sm:$0xff]
          %v1948 = vld [vmem:[#allocation4] sm:$0xff]
          %v1949 = vadd.f32 %v1947, %v1948
          %v1950 = vld [vmem:[%s12] sm:$0x1]
          %v1952 = vperm.slane %v1950, 0
          %v1954 = vadd.f32 %v1949, %v1952
          %v1955 = vpack.c.bf16 %v1954, %v1954
          %1956 = vst [vmem:[%s667] sm:$0xf] %v1955
        $region120: #{tpu_custom_call.1} parent=71 // pred_fallthru
          _
        %s1957 = sand.u32 %s347, 1
        %s1958 = scalar_lea.sflag [#allocation7], %s1957
        %s1959 = sand.u32 %s347, 1
        %s1960 = smul.addr %s1959, 4
        %s1961 = scalar_lea.vmem [#allocation21], %s1960
        // Predicated region
        $region121: #{tpu_custom_call.1} parent=71 // pred_check
          %p1962 = pneg %p357
        $region122: #{tpu_custom_call.1} parent=71 // pred_check_branch
          %1964 = sbr.rel (%p1962) target = $region124
        $region123: #{tpu_custom_call.1} parent=71 // pred_region
          %1966 = vsyncadd %s1958, 0
          %s1967 = smul.addr %s38, 4
          %s1968 = scalar_lea.hbm %s13, %s1967
          %s1970 = sshll.u32 %s1961, 4
          %s1971 = int_to_ptr.vmem [resolvable:$true] %s1970
          %s1972 = sshll.u32 %s1968, 4
          %s1973 = int_to_ptr.hbm [resolvable:$true] %s1972
          %1975 = dma.vmem_to_hbm [thread:$0]  %s1971, 64, %s1973, %s1958
        $region124: #{tpu_custom_call.1} parent=71 // pred_fallthru
          _
      $region72: #{tpu_custom_call.1} parent=5 // pred_fallthru
        _
      %p1976 = scmp.le.s32.totalorder 2, %s29
      // Predicated region
      $region125: #{tpu_custom_call.1} parent=5 // pred_check
        %p1977 = pneg %p1976
      $region126: #{tpu_custom_call.1} parent=5 // pred_check_branch
        %1979 = sbr.rel (%p1977) target = $region128
      $region127: #{tpu_custom_call.1} parent=5 // pred_region
        %s1980 = ssub.s32 %s29, 2
        // Predicated region
        $region129: #{tpu_custom_call.1} parent=127 // pred_check
          %p1981 = pneg %p363
        $region130: #{tpu_custom_call.1} parent=127 // pred_check_branch
          %1983 = sbr.rel (%p1981) target = $region132
        $region131: #{tpu_custom_call.1} parent=127 // pred_region
          %s1984 = sand.u32 %s348, 1
          %s1985 = scalar_lea.sflag [#allocation7], %s1984
          %s1986 = sand.u32 %s348, 1
          %s1987 = smul.addr %s1986, 4
          %s1988 = scalar_lea.vmem [#allocation21], %s1987
          %1990 = dma.done %s1985, 64
        $region132: #{tpu_custom_call.1} parent=127 // pred_fallthru
          _
      $region128: #{tpu_custom_call.1} parent=5 // pred_fallthru
        _
    $region6: #{tpu_custom_call.1} parent=1 // loop_footer
      %s33 = sadd.s32 1, %s29
    $region7: #{tpu_custom_call.1} parent=1 // loop_footer_branch
      %28 = sbr.rel target = $region3
    $region8: #{tpu_custom_call.1} parent=1 // loop_exit
      _
    %1991 = vsyncpa [#allocation6], 1
    %s1992 = scalar_lea.sflag [#allocation6], 1
    %1993 = vsyncpa %s1992, 1
    %1994 = vsyncpa [#allocation9], 1
    %1995 = vsyncpa [#allocation12], 1
    %1996 = vsyncpa [#allocation15], 1
    %1997 = vsyncpa [#allocation18], 1
    %1998 = vsyncpa [#allocation7], 1
    %s1999 = scalar_lea.sflag [#allocation7], 1
    %2000 = vsyncpa %s1999, 1

// kernel: tpu_custom_call.1
$region0: #{tpu_custom_call.1}
  #allocation0 [shape = 'u32[]', space=smem, size = 0x4, offset = 0x4, fixed_abs, tag = 'smem constant byte address 0x4 - core index']
  #allocation1 [shape = 'u32[72,128]{1,0:T(1,128)}', space=vmem, size = 0x9000, scoped, tag = 'internal scratch']
  #allocation2 [shape = 'f32[8,128]{1,0:T(8,128)}', space=vmem, size = 0x1000, scoped, tag = 'scratch operand']
  #allocation3 [shape = 'bf16[8,128]{1,0:T(8,128)(2,1)}', space=vmem, size = 0x800, scoped, tag = 'scratch operand']
  #allocation4 [shape = 'f32[8,128]{1,0:T(8,128)}', space=vmem, size = 0x1000, scoped, tag = 'scratch operand']
  %s0 = inlined_call_operand.hbm [shape: bf16[2,8,128], index: 0, kind: input, shape index: {}]
  %s1 = inlined_call_operand.hbm [shape: f32[1,128], index: 1, kind: input, shape index: {}]
  %s2 = inlined_call_operand.hbm [shape: f32[1,128], index: 2, kind: input, shape index: {}]
  %s3 = inlined_call_operand.hbm [shape: bf16[128,384], index: 3, kind: input, shape index: {}]
  %s4 = inlined_call_operand.vmem [shape: f32[1,384], index: 4, kind: input, shape index: {}]
  %s5 = inlined_call_operand.hbm [shape: bf16[128,128], index: 5, kind: input, shape index: {}]
  %s6 = inlined_call_operand.hbm [shape: f32[1,128], index: 6, kind: input, shape index: {}]
  %s7 = inlined_call_operand.hbm [shape: f32[1,128], index: 7, kind: input, shape index: {}]
  %s8 = inlined_call_operand.hbm [shape: f32[1,128], index: 8, kind: input, shape index: {}]
  %s9 = inlined_call_operand.hbm [shape: bf16[128,512], index: 9, kind: input, shape index: {}]
  %s10 = inlined_call_operand.vmem [shape: f32[1,512], index: 10, kind: input, shape index: {}]
  %s11 = inlined_call_operand.hbm [shape: bf16[512,128], index: 11, kind: input, shape index: {}]
  %s12 = inlined_call_operand.vmem [shape: f32[1,128], index: 12, kind: input, shape index: {}]
  %s13 = inlined_call_operand.hbm [shape: bf16[2,8,128], index: 13, kind: output, shape index: {}]
  %s14 = sld [smem:[#allocation0]]
  $region133: #{tpu_custom_call.1} parent=0
    _
  %s16 = ssub.s32 1, %s14
  %s17 = scalar_select 0, %s16, %s14
  $region1: #{tpu_custom_call.1} parent=0
    #allocation5 [shape = 'u8[4096]{0}', space=vmem, size = 0x1000, scoped, tag = 'input window, operand 0']
    #allocation6 [shape = 's32[2]{0}', space=sflag, size = 0x8, scoped, tag = 'scoped memory for tpu_custom_call.1']
    #allocation7 [shape = 's32[2]{0}', space=sflag, size = 0x8, scoped, tag = 'scoped memory for tpu_custom_call.1']
    #allocation8 [shape = 'u8[512]{0}', space=vmem, size = 0x400, scoped, tag = 'input window, operand 1, single buffered']
    #allocation9 [shape = 's32[1]{0}', space=sflag, size = 0x4, scoped, tag = 'scoped memory for tpu_custom_call.1']
    #allocation10 [shape = 'u8[512]{0}', space=vmem, size = 0x400, scoped, tag = 'input window, operand 2, single buffered']
    #allocation11 [shape = 'u8[98304]{0}', space=vmem, size = 0x18000, scoped, tag = 'input window, operand 3, single buffered']
    #allocation12 [shape = 's32[1]{0}', space=sflag, size = 0x4, scoped, tag = 'scoped memory for tpu_custom_call.1']
    #allocation13 [shape = 'u8[32768]{0}', space=vmem, size = 0x8000, scoped, tag = 'input window, operand 5, single buffered']
    #allocation14 [shape = 'u8[512]{0}', space=vmem, size = 0x400, scoped, tag = 'input window, operand 6, single buffered']
    #allocation15 [shape = 's32[1]{0}', space=sflag, size = 0x4, scoped, tag = 'scoped memory for tpu_custom_call.1']
    #allocation16 [shape = 'u8[512]{0}', space=vmem, size = 0x400, scoped, tag = 'input window, operand 7, single buffered']
    #allocation17 [shape = 'u8[512]{0}', space=vmem, size = 0x400, scoped, tag = 'input window, operand 8, single buffered']
    #allocation18 [shape = 's32[1]{0}', space=sflag, size = 0x4, scoped, tag = 'scoped memory for tpu_custom_call.1']
    #allocation19 [shape = 'u8[131072]{0}', space=vmem, size = 0x20000, scoped, tag = 'input window, operand 9']
    #allocation20 [shape = 'u8[131072]{0}', space=vmem, size = 0x20000, scoped, tag = 'input window, operand 11']
    #allocation21 [shape = 'u8[4096]{0}', space=vmem, size = 0x1000, scoped, tag = 'output window, operand 0']
    %18 = vsyncpa [#allocation6], 0
    %s19 = scalar_lea.sflag [#allocation6], 1
    %20 = vsyncpa %s19, 0
    %21 = vsyncpa [#allocation9], 0
    %22 = vsyncpa [#allocation12], 0
    %23 = vsyncpa [#allocation15], 0
    %24 = vsyncpa [#allocation18], 0
    %25 = vsyncpa [#allocation7], 0
    %s26 = scalar_lea.sflag [#allocation7], 1
    %27 = vsyncpa %s26, 0
    loop: start=0, step=1, limit=6
    $region2: #{tpu_custom_call.1} parent=1 // loop_pre_header
      _
    $region3: #{tpu_custom_call.1} parent=1 // loop_header
      %s29 = sphi 0, %s33
      %p30 = scmp.ge.s32.totalorder %s29, 6
      %s36 = sphi 0, %s48
      %s37 = sphi 0, %s44
      %s38 = sphi 0, %s36
      %s39 = sphi 0, %s37
      %s40 = sphi 0, %s38
      %s41 = sphi 0, %s39
      %s51 = sphi 0, %s53
      %s54 = sphi 0, %s51
      %s55 = sphi 0, %s54
      %s71 = sphi 0, %s55
      %s75 = sphi 0, %s75
      %s77 = sphi 0, %s75
      %s78 = sphi 0, %s77
      %s92 = sphi 0, %s78
      %s96 = sphi 0, %s96
      %s98 = sphi 0, %s96
      %s99 = sphi 0, %s98
      %s113 = sphi 0, %s99
      %s117 = sphi 0, %s117
      %s119 = sphi 0, %s117
      %s120 = sphi 0, %s119
      %s134 = sphi 0, %s120
      %s138 = sphi 0, %s138
      %s140 = sphi 0, %s138
      %s141 = sphi 0, %s140
      %s155 = sphi 0, %s141
      %s159 = sphi 0, %s159
      %s161 = sphi 0, %s159
      %s162 = sphi 0, %s161
      %s176 = sphi 0, %s162
      %s180 = sphi 0, %s180
      %s182 = sphi 0, %s180
      %s183 = sphi 0, %s182
      %s197 = sphi 0, %s183
      %s201 = sphi 0, %s201
      %s203 = sphi 0, %s201
      %s204 = sphi 0, %s203
      %s218 = sphi 0, %s204
      %s222 = sphi 0, %s222
      %s224 = sphi 0, %s222
      %s225 = sphi 0, %s224
      %s239 = sphi 0, %s225
      %s245 = sphi 0, %s247
      %s248 = sphi 0, %s245
      %s249 = sphi 0, %s248
      %s265 = sphi 0, %s249
      %s271 = sphi 0, %s273
      %s274 = sphi 0, %s271
      %s275 = sphi 0, %s274
      %s291 = sphi 0, %s275
      %s297 = sphi 0, %s299
      %s300 = sphi 0, %s297
      %s301 = sphi 0, %s300
      %s317 = sphi 0, %s301
      %s321 = sphi 0, %s321
      %s323 = sphi 0, %s321
      %s324 = sphi 0, %s323
      %s338 = sphi 0, %s324
      %s344 = sphi 0, %s346
      %s347 = sphi 0, %s344
      %s348 = sphi 0, %s347
      %s364 = sphi 0, %s348
    $region4: #{tpu_custom_call.1} parent=1 // loop_header_branch
      %32 = sbr.rel (%p30) target = $region8
    $region5: #{tpu_custom_call.1} parent=1 // loop_body
      %s34 = ssub.s32 %s29, 1
      %s35 = ssub.s32 %s29, 2
      %s42 = sadd.s32 1, %s37
      %p43 = scmp.ge.s32.totalorder %s42, 2
      %s44 = scalar_select %p43, 0, %s42
      %s45 = sadd.s32 1, %s36
      %s46 = scalar_select %p43, %s45, %s36
      %p47 = scmp.ge.s32.totalorder %s46, 2
      %s48 = scalar_select %p47, 0, %s46
      %s49 = ssub.s32 %s36, %s48
      %p50 = scmp.eq.s32.totalorder %s49, 0
      %s52 = sadd.s32 %s51, 1
      %s53 = scalar_select %p50, %s51, %s52
      %p56 = pneg %p50
      %p57 = scmp.eq.s32.totalorder %s29, 3
      %p58 = por %p56, %p57
      %p59 = scmp.ne.s32.totalorder %s51, %s54
      %p60 = scmp.eq.s32.totalorder %s29, 0
      %p61 = por %p59, %p60
      %p62 = scmp.ne.s32.totalorder %s51, %s54
      %p63 = scmp.eq.s32.totalorder %s34, 3
      %p64 = por %p62, %p63
      %p65 = scmp.ne.s32.totalorder %s54, %s55
      %p66 = scmp.eq.s32.totalorder %s34, 0
      %p67 = por %p65, %p66
      %p68 = scmp.ne.s32.totalorder %s54, %s55
      %p69 = scmp.eq.s32.totalorder %s35, 3
      %p70 = por %p68, %p69
      %p72 = scmp.ne.s32.totalorder %s55, %s71
      %p73 = scmp.eq.s32.totalorder %s35, 0
      %p74 = por %p72, %p73
      %s76 = sadd.s32 %s75, 1
      %p79 = scmp.eq.s32.totalorder %s29, 3
      %p80 = scmp.ne.s32.totalorder %s75, %s77
      %p81 = scmp.eq.s32.totalorder %s29, 0
      %p82 = por %p80, %p81
      %p83 = scmp.ne.s32.totalorder %s75, %s77
      %p84 = scmp.eq.s32.totalorder %s34, 3
      %p85 = por %p83, %p84
      %p86 = scmp.ne.s32.totalorder %s77, %s78
      %p87 = scmp.eq.s32.totalorder %s34, 0
      %p88 = por %p86, %p87
      %p89 = scmp.ne.s32.totalorder %s77, %s78
      %p90 = scmp.eq.s32.totalorder %s35, 3
      %p91 = por %p89, %p90
      %p93 = scmp.ne.s32.totalorder %s78, %s92
      %p94 = scmp.eq.s32.totalorder %s35, 0
      %p95 = por %p93, %p94
      %s97 = sadd.s32 %s96, 1
      %p100 = scmp.eq.s32.totalorder %s29, 3
      %p101 = scmp.ne.s32.totalorder %s96, %s98
      %p102 = scmp.eq.s32.totalorder %s29, 0
      %p103 = por %p101, %p102
      %p104 = scmp.ne.s32.totalorder %s96, %s98
      %p105 = scmp.eq.s32.totalorder %s34, 3
      %p106 = por %p104, %p105
      %p107 = scmp.ne.s32.totalorder %s98, %s99
      %p108 = scmp.eq.s32.totalorder %s34, 0
      %p109 = por %p107, %p108
      %p110 = scmp.ne.s32.totalorder %s98, %s99
      %p111 = scmp.eq.s32.totalorder %s35, 3
      %p112 = por %p110, %p111
      %p114 = scmp.ne.s32.totalorder %s99, %s113
      %p115 = scmp.eq.s32.totalorder %s35, 0
      %p116 = por %p114, %p115
      %s118 = sadd.s32 %s117, 1
      %p121 = scmp.eq.s32.totalorder %s29, 3
      %p122 = scmp.ne.s32.totalorder %s117, %s119
      %p123 = scmp.eq.s32.totalorder %s29, 0
      %p124 = por %p122, %p123
      %p125 = scmp.ne.s32.totalorder %s117, %s119
      %p126 = scmp.eq.s32.totalorder %s34, 3
      %p127 = por %p125, %p126
      %p128 = scmp.ne.s32.totalorder %s119, %s120
      %p129 = scmp.eq.s32.totalorder %s34, 0
      %p130 = por %p128, %p129
      %p131 = scmp.ne.s32.totalorder %s119, %s120
      %p132 = scmp.eq.s32.totalorder %s35, 3
      %p133 = por %p131, %p132
      %p135 = scmp.ne.s32.totalorder %s120, %s134
      %p136 = scmp.eq.s32.totalorder %s35, 0
      %p137 = por %p135, %p136
      %s139 = sadd.s32 %s138, 1
      %p142 = scmp.eq.s32.totalorder %s29, 3
      %p143 = scmp.ne.s32.totalorder %s138, %s140
      %p144 = scmp.eq.s32.totalorder %s29, 0
      %p145 = por %p143, %p144
      %p146 = scmp.ne.s32.totalorder %s138, %s140
      %p147 = scmp.eq.s32.totalorder %s34, 3
      %p148 = por %p146, %p147
      %p149 = scmp.ne.s32.totalorder %s140, %s141
      %p150 = scmp.eq.s32.totalorder %s34, 0
      %p151 = por %p149, %p150
      %p152 = scmp.ne.s32.totalorder %s140, %s141
      %p153 = scmp.eq.s32.totalorder %s35, 3
      %p154 = por %p152, %p153
      %p156 = scmp.ne.s32.totalorder %s141, %s155
      %p157 = scmp.eq.s32.totalorder %s35, 0
      %p158 = por %p156, %p157
      %s160 = sadd.s32 %s159, 1
      %p163 = scmp.eq.s32.totalorder %s29, 3
      %p164 = scmp.ne.s32.totalorder %s159, %s161
      %p165 = scmp.eq.s32.totalorder %s29, 0
      %p166 = por %p164, %p165
      %p167 = scmp.ne.s32.totalorder %s159, %s161
      %p168 = scmp.eq.s32.totalorder %s34, 3
      %p169 = por %p167, %p168
      %p170 = scmp.ne.s32.totalorder %s161, %s162
      %p171 = scmp.eq.s32.totalorder %s34, 0
      %p172 = por %p170, %p171
      %p173 = scmp.ne.s32.totalorder %s161, %s162
      %p174 = scmp.eq.s32.totalorder %s35, 3
      %p175 = por %p173, %p174
      %p177 = scmp.ne.s32.totalorder %s162, %s176
      %p178 = scmp.eq.s32.totalorder %s35, 0
      %p179 = por %p177, %p178
      %s181 = sadd.s32 %s180, 1
      %p184 = scmp.eq.s32.totalorder %s29, 3
      %p185 = scmp.ne.s32.totalorder %s180, %s182
      %p186 = scmp.eq.s32.totalorder %s29, 0
      %p187 = por %p185, %p186
      %p188 = scmp.ne.s32.totalorder %s180, %s182
      %p189 = scmp.eq.s32.totalorder %s34, 3
      %p190 = por %p188, %p189
      %p191 = scmp.ne.s32.totalorder %s182, %s183
      %p192 = scmp.eq.s32.totalorder %s34, 0
      %p193 = por %p191, %p192
      %p194 = scmp.ne.s32.totalorder %s182, %s183
      %p195 = scmp.eq.s32.totalorder %s35, 3
      %p196 = por %p194, %p195
      %p198 = scmp.ne.s32.totalorder %s183, %s197
      %p199 = scmp.eq.s32.totalorder %s35, 0
      %p200 = por %p198, %p199
      %s202 = sadd.s32 %s201, 1
      %p205 = scmp.eq.s32.totalorder %s29, 3
      %p206 = scmp.ne.s32.totalorder %s201, %s203
      %p207 = scmp.eq.s32.totalorder %s29, 0
      %p208 = por %p206, %p207
      %p209 = scmp.ne.s32.totalorder %s201, %s203
      %p210 = scmp.eq.s32.totalorder %s34, 3
      %p211 = por %p209, %p210
      %p212 = scmp.ne.s32.totalorder %s203, %s204
      %p213 = scmp.eq.s32.totalorder %s34, 0
      %p214 = por %p212, %p213
      %p215 = scmp.ne.s32.totalorder %s203, %s204
      %p216 = scmp.eq.s32.totalorder %s35, 3
      %p217 = por %p215, %p216
      %p219 = scmp.ne.s32.totalorder %s204, %s218
      %p220 = scmp.eq.s32.totalorder %s35, 0
      %p221 = por %p219, %p220
      %s223 = sadd.s32 %s222, 1
      %p226 = scmp.eq.s32.totalorder %s29, 3
      %p227 = scmp.ne.s32.totalorder %s222, %s224
      %p228 = scmp.eq.s32.totalorder %s29, 0
      %p229 = por %p227, %p228
      %p230 = scmp.ne.s32.totalorder %s222, %s224
      %p231 = scmp.eq.s32.totalorder %s34, 3
      %p232 = por %p230, %p231
      %p233 = scmp.ne.s32.totalorder %s224, %s225
      %p234 = scmp.eq.s32.totalorder %s34, 0
      %p235 = por %p233, %p234
      %p236 = scmp.ne.s32.totalorder %s224, %s225
      %p237 = scmp.eq.s32.totalorder %s35, 3
      %p238 = por %p236, %p237
      %p240 = scmp.ne.s32.totalorder %s225, %s239
      %p241 = scmp.eq.s32.totalorder %s35, 0
      %p242 = por %p240, %p241
      %s243 = ssub.s32 %s37, %s44
      %p244 = scmp.eq.s32.totalorder %s243, 0
      %s246 = sadd.s32 %s245, 1
      %s247 = scalar_select %p244, %s245, %s246
      %p250 = pneg %p244
      %p251 = scmp.eq.s32.totalorder %s29, 3
      %p252 = por %p250, %p251
      %p253 = scmp.ne.s32.totalorder %s245, %s248
      %p254 = scmp.eq.s32.totalorder %s29, 0
      %p255 = por %p253, %p254
      %p256 = scmp.ne.s32.totalorder %s245, %s248
      %p257 = scmp.eq.s32.totalorder %s34, 3
      %p258 = por %p256, %p257
      %p259 = scmp.ne.s32.totalorder %s248, %s249
      %p260 = scmp.eq.s32.totalorder %s34, 0
      %p261 = por %p259, %p260
      %p262 = scmp.ne.s32.totalorder %s248, %s249
      %p263 = scmp.eq.s32.totalorder %s35, 3
      %p264 = por %p262, %p263
      %p266 = scmp.ne.s32.totalorder %s249, %s265
      %p267 = scmp.eq.s32.totalorder %s35, 0
      %p268 = por %p266, %p267
      %s269 = ssub.s32 %s37, %s44
      %p270 = scmp.eq.s32.totalorder %s269, 0
      %s272 = sadd.s32 %s271, 1
      %s273 = scalar_select %p270, %s271, %s272
      %p276 = pneg %p270
      %p277 = scmp.eq.s32.totalorder %s29, 3
      %p278 = por %p276, %p277
      %p279 = scmp.ne.s32.totalorder %s271, %s274
      %p280 = scmp.eq.s32.totalorder %s29, 0
      %p281 = por %p279, %p280
      %p282 = scmp.ne.s32.totalorder %s271, %s274
      %p283 = scmp.eq.s32.totalorder %s34, 3
      %p284 = por %p282, %p283
      %p285 = scmp.ne.s32.totalorder %s274, %s275
      %p286 = scmp.eq.s32.totalorder %s34, 0
      %p287 = por %p285, %p286
      %p288 = scmp.ne.s32.totalorder %s274, %s275
      %p289 = scmp.eq.s32.totalorder %s35, 3
      %p290 = por %p288, %p289
      %p292 = scmp.ne.s32.totalorder %s275, %s291
      %p293 = scmp.eq.s32.totalorder %s35, 0
      %p294 = por %p292, %p293
      %s295 = ssub.s32 %s37, %s44
      %p296 = scmp.eq.s32.totalorder %s295, 0
      %s298 = sadd.s32 %s297, 1
      %s299 = scalar_select %p296, %s297, %s298
      %p302 = pneg %p296
      %p303 = scmp.eq.s32.totalorder %s29, 3
      %p304 = por %p302, %p303
      %p305 = scmp.ne.s32.totalorder %s297, %s300
      %p306 = scmp.eq.s32.totalorder %s29, 0
      %p307 = por %p305, %p306
      %p308 = scmp.ne.s32.totalorder %s297, %s300
      %p309 = scmp.eq.s32.totalorder %s34, 3
      %p310 = por %p308, %p309
      %p311 = scmp.ne.s32.totalorder %s300, %s301
      %p312 = scmp.eq.s32.totalorder %s34, 0
      %p313 = por %p311, %p312
      %p314 = scmp.ne.s32.totalorder %s300, %s301
      %p315 = scmp.eq.s32.totalorder %s35, 3
      %p316 = por %p314, %p315
      %p318 = scmp.ne.s32.totalorder %s301, %s317
      %p319 = scmp.eq.s32.totalorder %s35, 0
      %p320 = por %p318, %p319
      %s322 = sadd.s32 %s321, 1
      %p325 = scmp.eq.s32.totalorder %s29, 3
      %p326 = scmp.ne.s32.totalorder %s321, %s323
      %p327 = scmp.eq.s32.totalorder %s29, 0
      %p328 = por %p326, %p327
      %p329 = scmp.ne.s32.totalorder %s321, %s323
      %p330 = scmp.eq.s32.totalorder %s34, 3
      %p331 = por %p329, %p330
      %p332 = scmp.ne.s32.totalorder %s323, %s324
      %p333 = scmp.eq.s32.totalorder %s34, 0
      %p334 = por %p332, %p333
      %p335 = scmp.ne.s32.totalorder %s323, %s324
      %p336 = scmp.eq.s32.totalorder %s35, 3
      %p337 = por %p335, %p336
      %p339 = scmp.ne.s32.totalorder %s324, %s338
      %p340 = scmp.eq.s32.totalorder %s35, 0
      %p341 = por %p339, %p340
      %s342 = ssub.s32 %s36, %s48
      %p343 = scmp.eq.s32.totalorder %s342, 0
      %s345 = sadd.s32 %s344, 1
      %s346 = scalar_select %p343, %s344, %s345
      %p349 = pneg %p343
      %p350 = scmp.eq.s32.totalorder %s29, 3
      %p351 = por %p349, %p350
      %p352 = scmp.ne.s32.totalorder %s344, %s347
      %p353 = scmp.eq.s32.totalorder %s29, 0
      %p354 = por %p352, %p353
      %p355 = scmp.ne.s32.totalorder %s344, %s347
      %p356 = scmp.eq.s32.totalorder %s34, 3
      %p357 = por %p355, %p356
      %p358 = scmp.ne.s32.totalorder %s347, %s348
      %p359 = scmp.eq.s32.totalorder %s34, 0
      %p360 = por %p358, %p359
      %p361 = scmp.ne.s32.totalorder %s347, %s348
      %p362 = scmp.eq.s32.totalorder %s35, 3
      %p363 = por %p361, %p362
      %p365 = scmp.ne.s32.totalorder %s348, %s364
      %p366 = scmp.eq.s32.totalorder %s35, 0
      %p367 = por %p365, %p366
      %p368 = scmp.le.s32.totalorder 1, %s29
      %p369 = scmp.lt.s32.totalorder %s29, 5
      %p370 = pnand %p368, %p369
      %p371 = pneg %p370
      // Predicated region
      $region9: #{tpu_custom_call.1} parent=5 // pred_check
        _
      $region10: #{tpu_custom_call.1} parent=5 // pred_check_branch
        %373 = sbr.rel (%p370) target = $region12
      $region11: #{tpu_custom_call.1} parent=5 // pred_region
        %s374 = ssub.s32 %s29, 1
        // Predicated region
        $region13: #{tpu_custom_call.1} parent=11 // pred_check
          %p375 = pneg %p88
        $region14: #{tpu_custom_call.1} parent=11 // pred_check_branch
          %377 = sbr.rel (%p375) target = $region16
        $region15: #{tpu_custom_call.1} parent=11 // pred_region
          %379 = vsyncadd [#allocation9], 0
          %s381 = sshll.u32 %s1, 4
          %s382 = int_to_ptr.hbm [resolvable:$true] %s381
          %s383 = sshll.u32 [#allocation8], 4
          %s384 = int_to_ptr.vmem [resolvable:$true] %s383
          %386 = dma.hbm_to_vmem [thread:$0]  %s382, 16, %s384, [#allocation9]
        $region16: #{tpu_custom_call.1} parent=11 // pred_fallthru
          _
        // Predicated region
        $region17: #{tpu_custom_call.1} parent=11 // pred_check
          %p387 = pneg %p109
        $region18: #{tpu_custom_call.1} parent=11 // pred_check_branch
          %389 = sbr.rel (%p387) target = $region20
        $region19: #{tpu_custom_call.1} parent=11 // pred_region
          %391 = vsyncadd [#allocation9], 0
          %s393 = sshll.u32 %s2, 4
          %s394 = int_to_ptr.hbm [resolvable:$true] %s393
          %s395 = sshll.u32 [#allocation10], 4
          %s396 = int_to_ptr.vmem [resolvable:$true] %s395
          %398 = dma.hbm_to_vmem [thread:$0]  %s394, 16, %s396, [#allocation9]
        $region20: #{tpu_custom_call.1} parent=11 // pred_fallthru
          _
        // Predicated region
        $region21: #{tpu_custom_call.1} parent=11 // pred_check
          %p399 = pneg %p130
        $region22: #{tpu_custom_call.1} parent=11 // pred_check_branch
          %401 = sbr.rel (%p399) target = $region24
        $region23: #{tpu_custom_call.1} parent=11 // pred_region
          %403 = vsyncadd [#allocation12], 0
          %s404 = sshll.u32 %s3, 4
          %s405 = int_to_ptr.hbm [resolvable:$true] %s404
          %s406 = sshll.u32 [#allocation11], 4
          %s407 = int_to_ptr.vmem [resolvable:$true] %s406
          %412 = dma.hbm_to_vmem [thread:$0]  %s405, 3072, %s407, [#allocation12], 192, 192, 12
        $region24: #{tpu_custom_call.1} parent=11 // pred_fallthru
          _
        // Predicated region
        $region25: #{tpu_custom_call.1} parent=11 // pred_check
          %p413 = pneg %p151
        $region26: #{tpu_custom_call.1} parent=11 // pred_check_branch
          %415 = sbr.rel (%p413) target = $region28
        $region27: #{tpu_custom_call.1} parent=11 // pred_region
          _
        $region28: #{tpu_custom_call.1} parent=11 // pred_fallthru
          _
        // Predicated region
        $region29: #{tpu_custom_call.1} parent=11 // pred_check
          %p416 = pneg %p172
        $region30: #{tpu_custom_call.1} parent=11 // pred_check_branch
          %418 = sbr.rel (%p416) target = $region32
        $region31: #{tpu_custom_call.1} parent=11 // pred_region
          %420 = vsyncadd [#allocation12], 0
          %s421 = sshll.u32 %s5, 4
          %s422 = int_to_ptr.hbm [resolvable:$true] %s421
          %s423 = sshll.u32 [#allocation13], 4
          %s424 = int_to_ptr.vmem [resolvable:$true] %s423
          %429 = dma.hbm_to_vmem [thread:$0]  %s422, 1024, %s424, [#allocation12], 64, 64, 4
        $region32: #{tpu_custom_call.1} parent=11 // pred_fallthru
          _
        // Predicated region
        $region33: #{tpu_custom_call.1} parent=11 // pred_check
          %p430 = pneg %p193
        $region34: #{tpu_custom_call.1} parent=11 // pred_check_branch
          %432 = sbr.rel (%p430) target = $region36
        $region35: #{tpu_custom_call.1} parent=11 // pred_region
          %434 = vsyncadd [#allocation15], 0
          %s436 = sshll.u32 %s6, 4
          %s437 = int_to_ptr.hbm [resolvable:$true] %s436
          %s438 = sshll.u32 [#allocation14], 4
          %s439 = int_to_ptr.vmem [resolvable:$true] %s438
          %441 = dma.hbm_to_vmem [thread:$0]  %s437, 16, %s439, [#allocation15]
        $region36: #{tpu_custom_call.1} parent=11 // pred_fallthru
          _
        // Predicated region
        $region37: #{tpu_custom_call.1} parent=11 // pred_check
          %p442 = pneg %p214
        $region38: #{tpu_custom_call.1} parent=11 // pred_check_branch
          %444 = sbr.rel (%p442) target = $region40
        $region39: #{tpu_custom_call.1} parent=11 // pred_region
          %446 = vsyncadd [#allocation15], 0
          %s448 = sshll.u32 %s7, 4
          %s449 = int_to_ptr.hbm [resolvable:$true] %s448
          %s450 = sshll.u32 [#allocation16], 4
          %s451 = int_to_ptr.vmem [resolvable:$true] %s450
          %453 = dma.hbm_to_vmem [thread:$0]  %s449, 16, %s451, [#allocation15]
        $region40: #{tpu_custom_call.1} parent=11 // pred_fallthru
          _
        // Predicated region
        $region41: #{tpu_custom_call.1} parent=11 // pred_check
          %p454 = pneg %p235
        $region42: #{tpu_custom_call.1} parent=11 // pred_check_branch
          %456 = sbr.rel (%p454) target = $region44
        $region43: #{tpu_custom_call.1} parent=11 // pred_region
          %458 = vsyncadd [#allocation18], 0
          %s460 = sshll.u32 %s8, 4
          %s461 = int_to_ptr.hbm [resolvable:$true] %s460
          %s462 = sshll.u32 [#allocation17], 4
          %s463 = int_to_ptr.vmem [resolvable:$true] %s462
          %465 = dma.hbm_to_vmem [thread:$0]  %s461, 16, %s463, [#allocation18]
        $region44: #{tpu_custom_call.1} parent=11 // pred_fallthru
          _
        // Predicated region
        $region45: #{tpu_custom_call.1} parent=11 // pred_check
          %p466 = pneg %p334
        $region46: #{tpu_custom_call.1} parent=11 // pred_check_branch
          %468 = sbr.rel (%p466) target = $region48
        $region47: #{tpu_custom_call.1} parent=11 // pred_region
          _
        $region48: #{tpu_custom_call.1} parent=11 // pred_fallthru
          _
      $region12: #{tpu_custom_call.1} parent=5 // pred_fallthru
        _
      %p469 = scmp.lt.s32.totalorder %s29, 4
      // Predicated region
      $region49: #{tpu_custom_call.1} parent=5 // pred_check
        %p470 = pneg %p469
      $region50: #{tpu_custom_call.1} parent=5 // pred_check_branch
        %472 = sbr.rel (%p470) target = $region52
      $region51: #{tpu_custom_call.1} parent=5 // pred_region
        // Predicated region
        $region53: #{tpu_custom_call.1} parent=51 // pred_check
          %p473 = pneg %p61
        $region54: #{tpu_custom_call.1} parent=51 // pred_check_branch
          %475 = sbr.rel (%p473) target = $region56
        $region55: #{tpu_custom_call.1} parent=51 // pred_region
          %s476 = sand.u32 %s29, 1
          %s477 = scalar_lea.sflag [#allocation6], %s476
          %s478 = sand.u32 %s51, 1
          %s479 = smul.addr %s478, 4
          %s480 = scalar_lea.vmem [#allocation5], %s479
          %482 = vsyncadd %s477, 0
          %s483 = smul.addr %s36, 4
          %s484 = scalar_lea.hbm %s0, %s483
          %s486 = sshll.u32 %s484, 4
          %s487 = int_to_ptr.hbm [resolvable:$true] %s486
          %s488 = sshll.u32 %s480, 4
          %s489 = int_to_ptr.vmem [resolvable:$true] %s488
          %491 = dma.hbm_to_vmem [thread:$0]  %s487, 64, %s489, %s477
        $region56: #{tpu_custom_call.1} parent=51 // pred_fallthru
          _
        // Predicated region
        $region57: #{tpu_custom_call.1} parent=51 // pred_check
          %p492 = pneg %p255
        $region58: #{tpu_custom_call.1} parent=51 // pred_check_branch
          %494 = sbr.rel (%p492) target = $region60
        $region59: #{tpu_custom_call.1} parent=51 // pred_region
          %s495 = sand.u32 %s29, 1
          %s496 = scalar_lea.sflag [#allocation6], %s495
          %s497 = sand.u32 %s245, 1
          %s498 = smul.addr %s497, 128
          %s499 = scalar_lea.vmem [#allocation19], %s498
          %s500 = smul.u32 2, %s37
          %502 = vsyncadd %s496, 0
          %s503 = smul.addr %s500, 4
          %s504 = scalar_lea.hbm %s9, %s503
          %s505 = sshll.u32 %s504, 4
          %s506 = int_to_ptr.hbm [resolvable:$true] %s505
          %s507 = sshll.u32 %s499, 4
          %s508 = int_to_ptr.vmem [resolvable:$true] %s507
          %513 = dma.hbm_to_vmem [thread:$0]  %s506, 2048, %s508, %s496, 256, 128, 8
        $region60: #{tpu_custom_call.1} parent=51 // pred_fallthru
          _
        // Predicated region
        $region61: #{tpu_custom_call.1} parent=51 // pred_check
          %p514 = pneg %p281
        $region62: #{tpu_custom_call.1} parent=51 // pred_check_branch
          %516 = sbr.rel (%p514) target = $region64
        $region63: #{tpu_custom_call.1} parent=51 // pred_region
          %s517 = smul.u32 2, %s37
          %p518 = scmp.lt.s32.totalorder %s517, 3
          %s519 = scalar_select %p518, %s517, 3
          %s520 = scalar_lea.vmem %s10, %s519
          %s521 = smul.u32 2, %s37
        $region64: #{tpu_custom_call.1} parent=51 // pred_fallthru
          _
        // Predicated region
        $region65: #{tpu_custom_call.1} parent=51 // pred_check
          %p522 = pneg %p307
        $region66: #{tpu_custom_call.1} parent=51 // pred_check_branch
          %524 = sbr.rel (%p522) target = $region68
        $region67: #{tpu_custom_call.1} parent=51 // pred_region
          %s525 = sand.u32 %s29, 1
          %s526 = scalar_lea.sflag [#allocation6], %s525
          %s527 = sand.u32 %s297, 1
          %s528 = smul.addr %s527, 128
          %s529 = scalar_lea.vmem [#allocation20], %s528
          %s530 = smul.u32 32, %s37
          %532 = vsyncadd %s526, 0
          %s533 = smul.addr %s530, 4
          %s534 = scalar_lea.hbm %s11, %s533
          %s535 = sshll.u32 %s534, 4
          %s536 = int_to_ptr.hbm [resolvable:$true] %s535
          %s537 = sshll.u32 %s529, 4
          %s538 = int_to_ptr.vmem [resolvable:$true] %s537
          %543 = dma.hbm_to_vmem [thread:$0]  %s536, 2048, %s538, %s526, 64, 64, 4
        $region68: #{tpu_custom_call.1} parent=51 // pred_fallthru
          _
      $region52: #{tpu_custom_call.1} parent=5 // pred_fallthru
        _
      %p544 = scmp.le.s32.totalorder 1, %s29
      %p545 = scmp.lt.s32.totalorder %s29, 5
      %p546 = pnand %p544, %p545
      %p547 = pneg %p546
      // Predicated region
      $region69: #{tpu_custom_call.1} parent=5 // pred_check
        _
      $region70: #{tpu_custom_call.1} parent=5 // pred_check_branch
        %549 = sbr.rel (%p546) target = $region72
      $region71: #{tpu_custom_call.1} parent=5 // pred_region
        %s550 = ssub.s32 %s29, 1
        %s551 = sand.u32 %s34, 1
        %s552 = scalar_lea.sflag [#allocation6], %s551
        %s553 = sand.u32 %s54, 1
        %s554 = smul.addr %s553, 4
        %s555 = scalar_lea.vmem [#allocation5], %s554
        // Predicated region
        $region73: #{tpu_custom_call.1} parent=71 // pred_check
          %p556 = pneg %p67
        $region74: #{tpu_custom_call.1} parent=71 // pred_check_branch
          %558 = sbr.rel (%p556) target = $region76
        $region75: #{tpu_custom_call.1} parent=71 // pred_region
          %560 = dma.done %s552, 64
        $region76: #{tpu_custom_call.1} parent=71 // pred_fallthru
          _
        // Predicated region
        $region77: #{tpu_custom_call.1} parent=71 // pred_check
          %p561 = pneg %p88
        $region78: #{tpu_custom_call.1} parent=71 // pred_check_branch
          %563 = sbr.rel (%p561) target = $region80
        $region79: #{tpu_custom_call.1} parent=71 // pred_region
          %565 = dma.done [#allocation9], 16
        $region80: #{tpu_custom_call.1} parent=71 // pred_fallthru
          _
        // Predicated region
        $region81: #{tpu_custom_call.1} parent=71 // pred_check
          %p566 = pneg %p109
        $region82: #{tpu_custom_call.1} parent=71 // pred_check_branch
          %568 = sbr.rel (%p566) target = $region84
        $region83: #{tpu_custom_call.1} parent=71 // pred_region
          %570 = dma.done [#allocation9], 16
        $region84: #{tpu_custom_call.1} parent=71 // pred_fallthru
          _
        // Predicated region
        $region85: #{tpu_custom_call.1} parent=71 // pred_check
          %p571 = pneg %p130
        $region86: #{tpu_custom_call.1} parent=71 // pred_check_branch
          %573 = sbr.rel (%p571) target = $region88
        $region87: #{tpu_custom_call.1} parent=71 // pred_region
          %575 = dma.done [#allocation12], 3072
        $region88: #{tpu_custom_call.1} parent=71 // pred_fallthru
          _
        // Predicated region
        $region89: #{tpu_custom_call.1} parent=71 // pred_check
          %p576 = pneg %p172
        $region90: #{tpu_custom_call.1} parent=71 // pred_check_branch
          %578 = sbr.rel (%p576) target = $region92
        $region91: #{tpu_custom_call.1} parent=71 // pred_region
          %580 = dma.done [#allocation12], 1024
        $region92: #{tpu_custom_call.1} parent=71 // pred_fallthru
          _
        // Predicated region
        $region93: #{tpu_custom_call.1} parent=71 // pred_check
          %p581 = pneg %p193
        $region94: #{tpu_custom_call.1} parent=71 // pred_check_branch
          %583 = sbr.rel (%p581) target = $region96
        $region95: #{tpu_custom_call.1} parent=71 // pred_region
          %585 = dma.done [#allocation15], 16
        $region96: #{tpu_custom_call.1} parent=71 // pred_fallthru
          _
        // Predicated region
        $region97: #{tpu_custom_call.1} parent=71 // pred_check
          %p586 = pneg %p214
        $region98: #{tpu_custom_call.1} parent=71 // pred_check_branch
          %588 = sbr.rel (%p586) target = $region100
        $region99: #{tpu_custom_call.1} parent=71 // pred_region
          %590 = dma.done [#allocation15], 16
        $region100: #{tpu_custom_call.1} parent=71 // pred_fallthru
          _
        // Predicated region
        $region101: #{tpu_custom_call.1} parent=71 // pred_check
          %p591 = pneg %p235
        $region102: #{tpu_custom_call.1} parent=71 // pred_check_branch
          %593 = sbr.rel (%p591) target = $region104
        $region103: #{tpu_custom_call.1} parent=71 // pred_region
          %595 = dma.done [#allocation18], 16
        $region104: #{tpu_custom_call.1} parent=71 // pred_fallthru
          _
        %s596 = sand.u32 %s34, 1
        %s597 = scalar_lea.sflag [#allocation6], %s596
        %s598 = sand.u32 %s248, 1
        %s599 = smul.addr %s598, 128
        %s600 = scalar_lea.vmem [#allocation19], %s599
        // Predicated region
        $region105: #{tpu_custom_call.1} parent=71 // pred_check
          %p601 = pneg %p261
        $region106: #{tpu_custom_call.1} parent=71 // pred_check_branch
          %603 = sbr.rel (%p601) target = $region108
        $region107: #{tpu_custom_call.1} parent=71 // pred_region
          %605 = dma.done %s597, 2048
        $region108: #{tpu_custom_call.1} parent=71 // pred_fallthru
          _
        %s606 = sand.u32 %s34, 1
        %s607 = scalar_lea.sflag [#allocation6], %s606
        %s608 = sand.u32 %s300, 1
        %s609 = smul.addr %s608, 128
        %s610 = scalar_lea.vmem [#allocation20], %s609
        // Predicated region
        $region109: #{tpu_custom_call.1} parent=71 // pred_check
          %p611 = pneg %p313
        $region110: #{tpu_custom_call.1} parent=71 // pred_check_branch
          %613 = sbr.rel (%p611) target = $region112
        $region111: #{tpu_custom_call.1} parent=71 // pred_region
          %615 = dma.done %s607, 2048
        $region112: #{tpu_custom_call.1} parent=71 // pred_fallthru
          _
        %s616 = sand.u32 %s34, 1
        %s617 = scalar_lea.sflag [#allocation6], %s616
        %s618 = sand.u32 %s54, 1
        %s619 = smul.addr %s618, 4
        %s620 = scalar_lea.vmem [#allocation5], %s619
        %p621 = pneg %p67
        %p622 = pneg %p64
        %p623 = pneg %p88
        %p624 = pneg %p85
        %p625 = pneg %p109
        %p626 = pneg %p106
        %p627 = pneg %p130
        %p628 = pneg %p127
        %p629 = pneg %p151
        %p630 = pneg %p148
        %p631 = pneg %p172
        %p632 = pneg %p169
        %p633 = pneg %p193
        %p634 = pneg %p190
        %p635 = pneg %p214
        %p636 = pneg %p211
        %p637 = pneg %p235
        %p638 = pneg %p232
        %s639 = sand.u32 %s34, 1
        %s640 = scalar_lea.sflag [#allocation6], %s639
        %s641 = sand.u32 %s248, 1
        %s642 = smul.addr %s641, 128
        %s643 = scalar_lea.vmem [#allocation19], %s642
        %p644 = pneg %p261
        %p645 = pneg %p258
        %s646 = smul.u32 2, %s39
        %p647 = scmp.lt.s32.totalorder %s646, 3
        %s648 = scalar_select %p647, %s646, 3
        %s649 = scalar_lea.vmem %s10, %s648
        %p650 = pneg %p287
        %p651 = pneg %p284
        %s652 = sand.u32 %s34, 1
        %s653 = scalar_lea.sflag [#allocation6], %s652
        %s654 = sand.u32 %s300, 1
        %s655 = smul.addr %s654, 128
        %s656 = scalar_lea.vmem [#allocation20], %s655
        %p657 = pneg %p313
        %p658 = pneg %p310
        %p659 = pneg %p334
        %p660 = pneg %p331
        %p661 = pneg %p360
        %p662 = pneg %p357
        %s663 = sand.u32 %s347, 1
        %s664 = scalar_lea.sflag [#allocation7], %s663
        %s665 = sand.u32 %s347, 1
        %s666 = smul.addr %s665, 4
        %s667 = scalar_lea.vmem [#allocation21], %s666
        %s668 = smul.u32 2, %s39
        %s669 = smul.u32 2, %s39
        %p670 = scmp.lt.s32.totalorder %s669, 3
        %s671 = scalar_select %p670, %s669, 3
        %s672 = scalar_lea.vmem %s10, %s671
        %s673 = smul.u32 2, %s39
        %s674 = smul.u32 32, %s39
        %p676 = scmp.eq.s32.totalorder %s39, 0
        // Predicated region
        $region113: #{tpu_custom_call.1} parent=71 // pred_check
          %p677 = pneg %p676
        $region114: #{tpu_custom_call.1} parent=71 // pred_check_branch
          %679 = sbr.rel (%p677) target = $region116
        $region115: #{tpu_custom_call.1} parent=71 // pred_region
          %v680 = vld [vmem:[%s555] sm:$0xf]
          %v681 = vunpack.c.l.bf16 %v680
          %v682 = vld [vmem:[#allocation8] sm:$0x1]
          %v683 = vld [vmem:[#allocation10] sm:$0x1]
          %684 = vadd.xlane.f32.xlu0 %v681
          %v685 = vpop.xlane.xlu0 %684
          %v686 = vrcp.pop 128.0
          %v687 = vmul.f32 128.0, %v686
          %v688 = vsub.f32 1.0, %v687
          %v689 = vmul.f32 %v686, %v688
          %v690 = vadd.f32 %v686, %v689
          %vm691 = vweird.f32 %v686
          %v692 = vsel %vm691, %v686, %v690
          %v693 = vmul.f32 %v685, %v692
          %v694 = vsub.f32 %v681, %v693
          %v695 = vmul.f32 %v694, %v694
          %696 = vadd.xlane.f32.xlu0 %v695
          %v697 = vpop.xlane.xlu0 %696
          %v698 = vmul.f32 %v697, %v692
          %v699 = vadd.f32 %v698, 1e-05
          %v700 = vrsqrt.pop %v699
          %v701 = vmul.f32 %v700, %v699
          %v702 = vmul.f32 %v701, %v700
          %v703 = vmul.f32 0.5, %v702
          %v704 = vsub.f32 1.5, %v703
          %v705 = vmul.f32 %v700, %v704
          %vm706 = vweird.f32 %v699
          %vm707 = vweird.f32 %v700
          %vm708 = vmor %vm706, %vm707
          %v709 = vsel %vm708, %v700, %v705
          %v710 = vmul.f32 %v694, %v709
          %v712 = vperm.slane %v682, 0
          %v714 = vmul.f32 %v710, %v712
          %v716 = vperm.slane %v683, 0
          %v718 = vadd.f32 %v714, %v716
          %v719 = vpack.c.bf16 %v718, %v718
          %v720 = vld [vmem:[#allocation11] sm:$0xff]
          %v721 = vld [vmem:[#allocation11 + $0x8] sm:$0xf]
          %v722 = vld [vmem:[#allocation11 + $0xc] sm:$0xff]
          %v723 = vld [vmem:[#allocation11 + $0x14] sm:$0xf]
          %v724 = vld [vmem:[#allocation11 + $0x18] sm:$0xff]
          %v725 = vld [vmem:[#allocation11 + $0x20] sm:$0xf]
          %v726 = vld [vmem:[#allocation11 + $0x24] sm:$0xff]
          %v727 = vld [vmem:[#allocation11 + $0x2c] sm:$0xf]
          %v728 = vld [vmem:[#allocation11 + $0x30] sm:$0xff]
          %v729 = vld [vmem:[#allocation11 + $0x38] sm:$0xf]
          %v730 = vld [vmem:[#allocation11 + $0x3c] sm:$0xff]
          %v731 = vld [vmem:[#allocation11 + $0x44] sm:$0xf]
          %v732 = vld [vmem:[#allocation11 + $0x48] sm:$0xff]
          %v733 = vld [vmem:[#allocation11 + $0x50] sm:$0xf]
          %v734 = vld [vmem:[#allocation11 + $0x54] sm:$0xff]
          %v735 = vld [vmem:[#allocation11 + $0x5c] sm:$0xf]
          %v736 = vld [vmem:[#allocation11 + $0x60] sm:$0xff]
          %v737 = vld [vmem:[#allocation11 + $0x68] sm:$0xf]
          %v738 = vld [vmem:[#allocation11 + $0x6c] sm:$0xff]
          %v739 = vld [vmem:[#allocation11 + $0x74] sm:$0xf]
          %v740 = vld [vmem:[#allocation11 + $0x78] sm:$0xff]
          %v741 = vld [vmem:[#allocation11 + $0x80] sm:$0xf]
          %v742 = vld [vmem:[#allocation11 + $0x84] sm:$0xff]
          %v743 = vld [vmem:[#allocation11 + $0x8c] sm:$0xf]
          %v744 = vld [vmem:[#allocation11 + $0x90] sm:$0xff]
          %v745 = vld [vmem:[#allocation11 + $0x98] sm:$0xf]
          %v746 = vld [vmem:[#allocation11 + $0x9c] sm:$0xff]
          %v747 = vld [vmem:[#allocation11 + $0xa4] sm:$0xf]
          %v748 = vld [vmem:[#allocation11 + $0xa8] sm:$0xff]
          %v749 = vld [vmem:[#allocation11 + $0xb0] sm:$0xf]
          %v750 = vld [vmem:[#allocation11 + $0xb4] sm:$0xff]
          %v751 = vld [vmem:[#allocation11 + $0xbc] sm:$0xf]
          %v752 = vld [vmem:[%s4] sm:$0x7]
          %v754 = vperm.slane %v752, 0
          %v755 = vperm.slane %v752, 1
          %v756 = vperm.slane %v752, 2
          %v792 = vunpack.c.l.b16 %v720
          %v793 = vunpack.c.h.b16 %v720
          %v794 = vunpack.c.l.b16 %v721
          %v795 = vunpack.c.l.b16 %v722
          %v796 = vunpack.c.h.b16 %v722
          %v797 = vunpack.c.l.b16 %v723
          %v798 = vunpack.c.l.b16 %v724
          %v799 = vunpack.c.h.b16 %v724
          %v800 = vunpack.c.l.b16 %v725
          %v801 = vunpack.c.l.b16 %v726
          %v802 = vunpack.c.h.b16 %v726
          %v803 = vunpack.c.l.b16 %v727
          %v804 = vunpack.c.l.b16 %v728
          %v805 = vunpack.c.h.b16 %v728
          %v806 = vunpack.c.l.b16 %v729
          %v807 = vunpack.c.l.b16 %v730
          %v808 = vunpack.c.h.b16 %v730
          %v809 = vunpack.c.l.b16 %v731
          %v810 = vunpack.c.l.b16 %v732
          %v811 = vunpack.c.h.b16 %v732
          %v812 = vunpack.c.l.b16 %v733
          %v813 = vunpack.c.l.b16 %v734
          %v814 = vunpack.c.h.b16 %v734
          %v815 = vunpack.c.l.b16 %v735
          %v816 = vunpack.c.l.b16 %v736
          %v817 = vunpack.c.h.b16 %v736
          %v818 = vunpack.c.l.b16 %v737
          %v819 = vunpack.c.l.b16 %v738
          %v820 = vunpack.c.h.b16 %v738
          %v821 = vunpack.c.l.b16 %v739
          %v822 = vunpack.c.l.b16 %v740
          %v823 = vunpack.c.h.b16 %v740
          %v824 = vunpack.c.l.b16 %v741
          %v825 = vunpack.c.l.b16 %v742
          %v826 = vunpack.c.h.b16 %v742
          %v827 = vunpack.c.l.b16 %v743
          %v828 = vunpack.c.l.b16 %v744
          %v829 = vunpack.c.h.b16 %v744
          %v830 = vunpack.c.l.b16 %v745
          %v831 = vunpack.c.l.b16 %v746
          %v832 = vunpack.c.h.b16 %v746
          %v833 = vunpack.c.l.b16 %v747
          %v834 = vunpack.c.l.b16 %v748
          %v835 = vunpack.c.h.b16 %v748
          %v836 = vunpack.c.l.b16 %v749
          %v837 = vunpack.c.l.b16 %v750
          %v838 = vunpack.c.h.b16 %v750
          %v839 = vunpack.c.l.b16 %v751
          %v840 = vpack.c.b16 %v795, %v792
          %v841 = vpack.c.b16 %v796, %v793
          %v842 = vpack.c.b16 %v797, %v794
          %v843 = vpack.c.b16 %v801, %v798
          %v844 = vpack.c.b16 %v802, %v799
          %v845 = vpack.c.b16 %v803, %v800
          %v846 = vpack.c.b16 %v807, %v804
          %v847 = vpack.c.b16 %v808, %v805
          %v848 = vpack.c.b16 %v809, %v806
          %v849 = vpack.c.b16 %v813, %v810
          %v850 = vpack.c.b16 %v814, %v811
          %v851 = vpack.c.b16 %v815, %v812
          %v852 = vpack.c.b16 %v819, %v816
          %v853 = vpack.c.b16 %v820, %v817
          %v854 = vpack.c.b16 %v821, %v818
          %v855 = vpack.c.b16 %v825, %v822
          %v856 = vpack.c.b16 %v826, %v823
          %v857 = vpack.c.b16 %v827, %v824
          %v858 = vpack.c.b16 %v831, %v828
          %v859 = vpack.c.b16 %v832, %v829
          %v860 = vpack.c.b16 %v833, %v830
          %v861 = vpack.c.b16 %v837, %v834
          %v862 = vpack.c.b16 %v838, %v835
          %v863 = vpack.c.b16 %v839, %v836
          %888 = vmatpush.bf16.msra.mxu0 %v861
          %889 = vmatpush.bf16.msra.mxu0 %v858
          %890 = vmatpush.bf16.msra.mxu0 %v855
          %891 = vmatpush.bf16.msra.mxu0 %v852
          %892 = vmatpush.bf16.msra.mxu0 %v849
          %893 = vmatpush.bf16.msra.mxu0 %v846
          %894 = vmatpush.bf16.msra.mxu0 %v843
          %895 = vmatpush.bf16.msra.mxu0 %v840
          %896 = vmatmul.bf16.gmra.mxu0 %v719
          %v897 = vpop.f32.mrf.mxu0
          %v898 = vadd.f32 %v754, %v897
          %v899 = vpop.f32.mrf.mxu0
          %900 = vdwg.mxu0
          %901 = vmatpush.bf16.msra.mxu0 %v862
          %902 = vmatpush.bf16.msra.mxu0 %v859
          %903 = vmatpush.bf16.msra.mxu0 %v856
          %904 = vmatpush.bf16.msra.mxu0 %v853
          %905 = vmatpush.bf16.msra.mxu0 %v850
          %906 = vmatpush.bf16.msra.mxu0 %v847
          %907 = vmatpush.bf16.msra.mxu0 %v844
          %908 = vmatpush.bf16.msra.mxu0 %v841
          %909 = vmatmul.bf16.gmra.mxu0 %v719
          %v910 = vpop.f32.mrf.mxu0
          %v911 = vadd.f32 %v755, %v910
          %v912 = vpop.f32.mrf.mxu0
          %913 = vdwg.mxu0
          %914 = vmatpush.bf16.msra.mxu0 %v863
          %915 = vmatpush.bf16.msra.mxu0 %v860
          %916 = vmatpush.bf16.msra.mxu0 %v857
          %917 = vmatpush.bf16.msra.mxu0 %v854
          %918 = vmatpush.bf16.msra.mxu0 %v851
          %919 = vmatpush.bf16.msra.mxu0 %v848
          %920 = vmatpush.bf16.msra.mxu0 %v845
          %921 = vmatpush.bf16.msra.mxu0 %v842
          %922 = vmatmul.bf16.gmra.mxu0 %v719
          %v923 = vpop.f32.mrf.mxu0
          %v924 = vadd.f32 %v756, %v923
          %v925 = vpop.f32.mrf.mxu0
          %926 = vdwg.mxu0
          %929 = vrot.lane.b32.xlu0 %v898, 32
          %v930 = vpop.permute.xlu0 %929
          %931 = vrot.lane.b32.xlu0 %v911, 32
          %v932 = vpop.permute.xlu0 %931
          %vm933 = vcmask 261120
          %v934 = vsel %vm933, %v930, %v932
          %937 = vrot.lane.b32.xlu0 %v911, 64
          %v938 = vpop.permute.xlu0 %937
          %939 = vrot.lane.b32.xlu0 %v924, 64
          %v940 = vpop.permute.xlu0 %939
          %vm941 = vcmask 523264
          %v942 = vsel %vm941, %v938, %v940
          %944 = vrot.lane.b32.xlu0 %v924, 96
          %v945 = vpop.permute.xlu0 %944
          %v947 = vrot.slane %v942, 4
          %vm948 = vcmask 1047556
          %v949 = vsel %vm948, %v947, %v898
          %v950 = vrot.slane %v898, 4
          %v951 = vsel %vm948, %v942, %v950
          %v953 = vunpack.c.l.s4 1983009808
          %v954 = vunpack.c.0.s8 %v953
          %v955 = vperm.slane %v949, %v954
          %v957 = vunpack.c.l.s4 1983009808
          %v958 = vunpack.c.0.s8 %v957
          %v959 = vperm.slane %v951, %v958
          %v960 = vrot.slane %v945, 4
          %v961 = vsel %vm948, %v960, %v934
          %v962 = vrot.slane %v934, 4
          %v963 = vsel %vm948, %v945, %v962
          %v965 = vunpack.c.l.s4 1983009808
          %v966 = vunpack.c.0.s8 %v965
          %v967 = vperm.slane %v961, %v966
          %v969 = vunpack.c.l.s4 1983009808
          %v970 = vunpack.c.0.s8 %v969
          %v971 = vperm.slane %v963, %v970
          %v972 = vrot.slane %v967, 4
          %v973 = vsel %vm948, %v972, %v955
          %v974 = vrot.slane %v955, 4
          %v975 = vsel %vm948, %v967, %v974
          %v977 = vunpack.c.l.s4 1934713408
          %v978 = vunpack.c.0.s8 %v977
          %v979 = vperm.slane %v973, %v978
          %v981 = vunpack.c.l.s4 1934713408
          %v982 = vunpack.c.0.s8 %v981
          %v983 = vperm.slane %v975, %v982
          %v984 = vrot.slane %v971, 4
          %v985 = vsel %vm948, %v984, %v959
          %v986 = vrot.slane %v959, 4
          %v987 = vsel %vm948, %v971, %v986
          %v989 = vunpack.c.l.s4 1934713408
          %v990 = vunpack.c.0.s8 %v989
          %v991 = vperm.slane %v985, %v990
          %v993 = vunpack.c.l.s4 1934713408
          %v994 = vunpack.c.0.s8 %v993
          %v995 = vperm.slane %v987, %v994
          %v996 = vrot.slane %v979, 4
          %v997 = vsel %vm948, 0.0, %v996
          %v998 = vrot.slane %v983, 4
          %v999 = vsel %vm948, 0.0, %v998
          %v1000 = vrot.slane %v991, 4
          %v1001 = vsel %vm948, 0.0, %v1000
          %v1002 = vrot.slane %v995, 4
          %v1003 = vsel %vm948, 0.0, %v1002
          %v1004 = vsel %vm948, %v998, %v979
          %v1006 = vunpack.c.l.s4 1983009808
          %v1007 = vunpack.c.0.s8 %v1006
          %v1008 = vperm.slane %v1004, %v1007
          %v1009 = vrot.slane %v999, 4
          %v1010 = vsel %vm948, %v1009, %v997
          %v1012 = vunpack.c.l.s4 1983009808
          %v1013 = vunpack.c.0.s8 %v1012
          %v1014 = vperm.slane %v1010, %v1013
          %v1015 = vsel %vm948, %v1002, %v991
          %v1017 = vunpack.c.l.s4 1983009808
          %v1018 = vunpack.c.0.s8 %v1017
          %v1019 = vperm.slane %v1015, %v1018
          %v1020 = vrot.slane %v1003, 4
          %v1021 = vsel %vm948, %v1020, %v1001
          %v1023 = vunpack.c.l.s4 1983009808
          %v1024 = vunpack.c.0.s8 %v1023
          %v1025 = vperm.slane %v1021, %v1024
          %v1026 = vrot.slane %v1014, 4
          %v1027 = vsel %vm948, %v1026, %v1008
          %v1028 = vrot.slane %v1008, 4
          %v1029 = vsel %vm948, %v1014, %v1028
          %v1031 = vunpack.c.l.s4 1934713408
          %v1032 = vunpack.c.0.s8 %v1031
          %v1033 = vperm.slane %v1027, %v1032
          %v1035 = vunpack.c.l.s4 1934713408
          %v1036 = vunpack.c.0.s8 %v1035
          %v1037 = vperm.slane %v1029, %v1036
          %v1038 = vrot.slane %v1025, 4
          %v1039 = vsel %vm948, %v1038, %v1019
          %v1040 = vrot.slane %v1019, 4
          %v1041 = vsel %vm948, %v1025, %v1040
          %v1043 = vunpack.c.l.s4 1934713408
          %v1044 = vunpack.c.0.s8 %v1043
          %v1045 = vperm.slane %v1039, %v1044
          %v1047 = vunpack.c.l.s4 1934713408
          %v1048 = vunpack.c.0.s8 %v1047
          %v1049 = vperm.slane %v1041, %v1048
          %v1050 = vrot.slane %v1045, 4
          %v1051 = vsel %vm948, %v1050, %v1033
          %v1052 = vrot.slane %v1033, 4
          %v1053 = vsel %vm948, %v1045, %v1052
          %v1054 = vrot.slane %v1049, 4
          %v1055 = vsel %vm948, %v1054, %v1037
          %v1056 = vrot.slane %v1037, 4
          %v1057 = vsel %vm948, %v1049, %v1056
          %v1058 = vmul.f32 %v1051, 0.17677669
          %v1059 = vmul.f32 %v1053, 0.17677669
          %v1060 = vmul.f32 %v1055, 0.17677669
          %v1061 = vmul.f32 %v1057, 0.17677669
          %v1062 = vlaneseq
          %v1063 = vshrl.u32 %v1062, 7
          %v1064 = vlaneseq
          %v1065 = vand.u32 %v1064, 127
          %vm1066 = vcmp.ge.s32.totalorder %v1063, %v1065
          %v1067 = vpack.c.bf16 %v1058, %v1058
          %v1068 = vpack.c.bf16 %v1059, %v1059
          %v1069 = vpack.c.bf16 %v1060, %v1060
          %v1070 = vpack.c.bf16 %v1061, %v1061
          %v1071 = vpack.c.bf16 %v1051, %v1051
          %v1072 = vpack.c.bf16 %v1053, %v1053
          %v1073 = vpack.c.bf16 %v1055, %v1055
          %v1074 = vpack.c.bf16 %v1057, %v1057
          %v1076 = vunpack.c.l.b16 %v1071
          %v1077 = vpack.c.b16 %v1076, %v1076
          %1078 = vrot.lane.b32.xlu0 %v1077, 96
          %v1079 = vpop.permute.xlu0 %1078
          %v1081 = vsel %vm933, %v1067, 0
          %v1084 = vsel %vm933, %v1079, 0
          %1086 = vmatpush.bf16.xpose.msra.mxu0 0
          %1087 = vmatpush.bf16.xpose.msra.mxu0 0
          %1088 = vmatpush.bf16.xpose.msra.mxu0 0
          %1089 = vmatpush.bf16.xpose.msra.mxu0 0
          %1090 = vmatpush.bf16.xpose.msra.mxu0 0
          %1091 = vmatpush.bf16.xpose.msra.mxu0 0
          %1092 = vmatpush.bf16.xpose.msra.mxu0 0
          %1093 = vmatpush.bf16.xpose.msra.mxu0 %v1084
          %1094 = vmatmul.bf16.gmra.mxu0 %v1081
          %v1095 = vpop.f32.mrf.mxu0
          %v1096 = vadd.f32 0.0, %v1095
          %v1097 = vpop.f32.mrf.mxu0
          %1098 = vdwg.mxu0
          %v1100 = vunpack.c.l.b16 %v1072
          %v1101 = vpack.c.b16 %v1100, %v1100
          %1102 = vrot.lane.b32.xlu0 %v1101, 96
          %v1103 = vpop.permute.xlu0 %1102
          %v1105 = vsel %vm933, %v1068, 0
          %v1108 = vsel %vm933, %v1103, 0
          %1110 = vmatpush.bf16.xpose.msra.mxu0 0
          %1111 = vmatpush.bf16.xpose.msra.mxu0 0
          %1112 = vmatpush.bf16.xpose.msra.mxu0 0
          %1113 = vmatpush.bf16.xpose.msra.mxu0 0
          %1114 = vmatpush.bf16.xpose.msra.mxu0 0
          %1115 = vmatpush.bf16.xpose.msra.mxu0 0
          %1116 = vmatpush.bf16.xpose.msra.mxu0 0
          %1117 = vmatpush.bf16.xpose.msra.mxu0 %v1108
          %1118 = vmatmul.bf16.gmra.mxu0 %v1105
          %v1119 = vpop.f32.mrf.mxu0
          %v1120 = vadd.f32 0.0, %v1119
          %v1121 = vpop.f32.mrf.mxu0
          %1122 = vdwg.mxu0
          %v1124 = vunpack.c.l.b16 %v1073
          %v1125 = vpack.c.b16 %v1124, %v1124
          %1126 = vrot.lane.b32.xlu0 %v1125, 96
          %v1127 = vpop.permute.xlu0 %1126
          %v1129 = vsel %vm933, %v1069, 0
          %v1132 = vsel %vm933, %v1127, 0
          %1134 = vmatpush.bf16.xpose.msra.mxu0 0
          %1135 = vmatpush.bf16.xpose.msra.mxu0 0
          %1136 = vmatpush.bf16.xpose.msra.mxu0 0
          %1137 = vmatpush.bf16.xpose.msra.mxu0 0
          %1138 = vmatpush.bf16.xpose.msra.mxu0 0
          %1139 = vmatpush.bf16.xpose.msra.mxu0 0
          %1140 = vmatpush.bf16.xpose.msra.mxu0 0
          %1141 = vmatpush.bf16.xpose.msra.mxu0 %v1132
          %1142 = vmatmul.bf16.gmra.mxu0 %v1129
          %v1143 = vpop.f32.mrf.mxu0
          %v1144 = vadd.f32 0.0, %v1143
          %v1145 = vpop.f32.mrf.mxu0
          %1146 = vdwg.mxu0
          %v1148 = vunpack.c.l.b16 %v1074
          %v1149 = vpack.c.b16 %v1148, %v1148
          %1150 = vrot.lane.b32.xlu0 %v1149, 96
          %v1151 = vpop.permute.xlu0 %1150
          %v1153 = vsel %vm933, %v1070, 0
          %v1156 = vsel %vm933, %v1151, 0
          %1158 = vmatpush.bf16.xpose.msra.mxu0 0
          %1159 = vmatpush.bf16.xpose.msra.mxu0 0
          %1160 = vmatpush.bf16.xpose.msra.mxu0 0
          %1161 = vmatpush.bf16.xpose.msra.mxu0 0
          %1162 = vmatpush.bf16.xpose.msra.mxu0 0
          %1163 = vmatpush.bf16.xpose.msra.mxu0 0
          %1164 = vmatpush.bf16.xpose.msra.mxu0 0
          %1165 = vmatpush.bf16.xpose.msra.mxu0 %v1156
          %1166 = vmatmul.bf16.gmra.mxu0 %v1153
          %v1167 = vpop.f32.mrf.mxu0
          %v1168 = vadd.f32 0.0, %v1167
          %v1169 = vpop.f32.mrf.mxu0
          %1170 = vdwg.mxu0
          %v1171 = vsel %vm1066, 1, 0
          %vm1172 = vcmp.eq.s32.totalorder %v1171, 1
          %v1173 = vsel %vm1172, %v1096, -1e+30
          %v1174 = vsel %vm1172, %v1120, -1e+30
          %v1175 = vsel %vm1172, %v1144, -1e+30
          %v1176 = vsel %vm1172, %v1168, -1e+30
          %vm1177 = vcmask 64512
          %v1178 = vsel %vm1177, %v1173, -inf
          %1179 = vmax.xlane.f32.xlu0 %v1178
          %v1180 = vpop.xlane.xlu0 %1179
          %v1181 = vsel %vm1177, %v1174, -inf
          %1182 = vmax.xlane.f32.xlu0 %v1181
          %v1183 = vpop.xlane.xlu0 %1182
          %v1184 = vsel %vm1177, %v1175, -inf
          %1185 = vmax.xlane.f32.xlu0 %v1184
          %v1186 = vpop.xlane.xlu0 %1185
          %v1187 = vsel %vm1177, %v1176, -inf
          %1188 = vmax.xlane.f32.xlu0 %v1187
          %v1189 = vpop.xlane.xlu0 %1188
          %v1190 = vsub.f32 %v1173, %v1180
          %v1191 = vsub.f32 %v1174, %v1183
          %v1192 = vsub.f32 %v1175, %v1186
          %v1193 = vsub.f32 %v1176, %v1189
          %v1194 = vmul.f32 %v1190, 1.442695
          %v1195 = vpow.pop %v1194
          %v1196 = vmul.f32 %v1191, 1.442695
          %v1197 = vpow.pop %v1196
          %v1198 = vmul.f32 %v1192, 1.442695
          %v1199 = vpow.pop %v1198
          %v1200 = vmul.f32 %v1193, 1.442695
          %v1201 = vpow.pop %v1200
          %v1202 = vsel %vm1177, %v1195, 0.0
          %1203 = vadd.xlane.f32.xlu0 %v1202
          %v1204 = vpop.xlane.xlu0 %1203
          %v1205 = vsel %vm1177, %v1197, 0.0
          %1206 = vadd.xlane.f32.xlu0 %v1205
          %v1207 = vpop.xlane.xlu0 %1206
          %v1208 = vsel %vm1177, %v1199, 0.0
          %1209 = vadd.xlane.f32.xlu0 %v1208
          %v1210 = vpop.xlane.xlu0 %1209
          %v1211 = vsel %vm1177, %v1201, 0.0
          %1212 = vadd.xlane.f32.xlu0 %v1211
          %v1213 = vpop.xlane.xlu0 %1212
          %v1214 = vrcp.pop %v1204
          %v1215 = vrcp.pop %v1207
          %v1216 = vrcp.pop %v1210
          %v1217 = vrcp.pop %v1213
          %v1218 = vmul.f32 %v1195, %v1214
          %v1219 = vmul.f32 %v1197, %v1215
          %v1220 = vmul.f32 %v1199, %v1216
          %v1221 = vmul.f32 %v1201, %v1217
          %v1222 = vpack.c.bf16 %v1218, %v1218
          %v1223 = vpack.c.bf16 %v1219, %v1219
          %v1224 = vpack.c.bf16 %v1220, %v1220
          %v1225 = vpack.c.bf16 %v1221, %v1221
          %1226 = vrot.lane.b32.xlu0 %v1077, 64
          %v1227 = vpop.permute.xlu0 %1226
          %v1229 = vsel %vm1177, %v1222, 0
          %vm1231 = vcmask 1043456
          %v1233 = vsel %vm1231, %v1227, 0
          %1235 = vmatpush.bf16.msra.mxu0 0
          %1236 = vmatpush.bf16.msra.mxu0 0
          %1237 = vmatpush.bf16.msra.mxu0 0
          %1238 = vmatpush.bf16.msra.mxu0 0
          %1239 = vmatpush.bf16.msra.mxu0 0
          %1240 = vmatpush.bf16.msra.mxu0 0
          %1241 = vmatpush.bf16.msra.mxu0 0
          %1242 = vmatpush.bf16.msra.mxu0 %v1233
          %1243 = vmatmul.bf16.gmra.mxu0 %v1229
          %v1244 = vpop.f32.mrf.mxu0
          %v1245 = vadd.f32 0.0, %v1244
          %v1246 = vpop.f32.mrf.mxu0
          %1247 = vdwg.mxu0
          %1248 = vrot.lane.b32.xlu0 %v1101, 64
          %v1249 = vpop.permute.xlu0 %1248
          %v1251 = vsel %vm1177, %v1223, 0
          %v1254 = vsel %vm1231, %v1249, 0
          %1256 = vmatpush.bf16.msra.mxu0 0
          %1257 = vmatpush.bf16.msra.mxu0 0
          %1258 = vmatpush.bf16.msra.mxu0 0
          %1259 = vmatpush.bf16.msra.mxu0 0
          %1260 = vmatpush.bf16.msra.mxu0 0
          %1261 = vmatpush.bf16.msra.mxu0 0
          %1262 = vmatpush.bf16.msra.mxu0 0
          %1263 = vmatpush.bf16.msra.mxu0 %v1254
          %1264 = vmatmul.bf16.gmra.mxu0 %v1251
          %v1265 = vpop.f32.mrf.mxu0
          %v1266 = vadd.f32 0.0, %v1265
          %v1267 = vpop.f32.mrf.mxu0
          %1268 = vdwg.mxu0
          %1269 = vrot.lane.b32.xlu0 %v1125, 64
          %v1270 = vpop.permute.xlu0 %1269
          %v1272 = vsel %vm1177, %v1224, 0
          %v1275 = vsel %vm1231, %v1270, 0
          %1277 = vmatpush.bf16.msra.mxu0 0
          %1278 = vmatpush.bf16.msra.mxu0 0
          %1279 = vmatpush.bf16.msra.mxu0 0
          %1280 = vmatpush.bf16.msra.mxu0 0
          %1281 = vmatpush.bf16.msra.mxu0 0
          %1282 = vmatpush.bf16.msra.mxu0 0
          %1283 = vmatpush.bf16.msra.mxu0 0
          %1284 = vmatpush.bf16.msra.mxu0 %v1275
          %1285 = vmatmul.bf16.gmra.mxu0 %v1272
          %v1286 = vpop.f32.mrf.mxu0
          %v1287 = vadd.f32 0.0, %v1286
          %v1288 = vpop.f32.mrf.mxu0
          %1289 = vdwg.mxu0
          %1290 = vrot.lane.b32.xlu0 %v1149, 64
          %v1291 = vpop.permute.xlu0 %1290
          %v1293 = vsel %vm1177, %v1225, 0
          %v1296 = vsel %vm1231, %v1291, 0
          %1298 = vmatpush.bf16.msra.mxu0 0
          %1299 = vmatpush.bf16.msra.mxu0 0
          %1300 = vmatpush.bf16.msra.mxu0 0
          %1301 = vmatpush.bf16.msra.mxu0 0
          %1302 = vmatpush.bf16.msra.mxu0 0
          %1303 = vmatpush.bf16.msra.mxu0 0
          %1304 = vmatpush.bf16.msra.mxu0 0
          %1305 = vmatpush.bf16.msra.mxu0 %v1296
          %1306 = vmatmul.bf16.gmra.mxu0 %v1293
          %v1307 = vpop.f32.mrf.mxu0
          %v1308 = vadd.f32 0.0, %v1307
          %v1309 = vpop.f32.mrf.mxu0
          %1310 = vdwg.mxu0
          %v1311 = vpack.c.bf16 %v1245, %v1245
          %v1312 = vpack.c.bf16 %v1266, %v1266
          %v1313 = vpack.c.bf16 %v1287, %v1287
          %v1314 = vpack.c.bf16 %v1308, %v1308
          %v1317 = vpack.i.b16 %v1312, %v1311
          %v1318 = vshrl.u32 %v1311, 16
          %v1319 = vshrl.u32 %v1312, 16
          %v1320 = vpack.i.b16 %v1319, %v1318
          %v1323 = vpack.i.b16 %v1314, %v1313
          %v1324 = vshrl.u32 %v1313, 16
          %v1325 = vshrl.u32 %v1314, 16
          %v1326 = vpack.i.b16 %v1325, %v1324
          %v1329 = vunpack.c.l.s4 1983009808
          %v1330 = vunpack.c.0.s8 %v1329
          %v1331 = vperm.slane %v1317, %v1330
          %v1334 = vunpack.c.l.s4 1983009808
          %v1335 = vunpack.c.0.s8 %v1334
          %v1336 = vperm.slane %v1323, %v1335
          %v1337 = vrot.slane %v1336, 4
          %vm1338 = vcmask 1047556
          %v1339 = vsel %vm1338, %v1337, %v1331
          %v1340 = vrot.slane %v1331, 4
          %v1341 = vsel %vm1338, %v1336, %v1340
          %v1343 = vunpack.c.l.s4 1934713408
          %v1344 = vunpack.c.0.s8 %v1343
          %v1345 = vperm.slane %v1339, %v1344
          %v1347 = vunpack.c.l.s4 1934713408
          %v1348 = vunpack.c.0.s8 %v1347
          %v1349 = vperm.slane %v1341, %v1348
          %v1350 = vrot.slane %v1345, 4
          %v1351 = vsel %vm1338, 0, %v1350
          %v1352 = vrot.slane %v1349, 4
          %v1353 = vsel %vm1338, 0, %v1352
          %v1356 = vunpack.c.l.s4 1983009808
          %v1357 = vunpack.c.0.s8 %v1356
          %v1358 = vperm.slane %v1320, %v1357
          %v1361 = vunpack.c.l.s4 1983009808
          %v1362 = vunpack.c.0.s8 %v1361
          %v1363 = vperm.slane %v1326, %v1362
          %v1364 = vrot.slane %v1363, 4
          %v1365 = vsel %vm1338, %v1364, %v1358
          %v1366 = vrot.slane %v1358, 4
          %v1367 = vsel %vm1338, %v1363, %v1366
          %v1369 = vunpack.c.l.s4 1934713408
          %v1370 = vunpack.c.0.s8 %v1369
          %v1371 = vperm.slane %v1365, %v1370
          %v1373 = vunpack.c.l.s4 1934713408
          %v1374 = vunpack.c.0.s8 %v1373
          %v1375 = vperm.slane %v1367, %v1374
          %v1376 = vrot.slane %v1371, 4
          %v1377 = vsel %vm1338, 0, %v1376
          %v1378 = vrot.slane %v1375, 4
          %v1379 = vsel %vm1338, 0, %v1378
          %v1380 = vsel %vm1338, %v1352, %v1345
          %v1382 = vunpack.c.l.s4 1983009808
          %v1383 = vunpack.c.0.s8 %v1382
          %v1384 = vperm.slane %v1380, %v1383
          %v1385 = vrot.slane %v1353, 4
          %v1386 = vsel %vm1338, %v1385, %v1351
          %v1388 = vunpack.c.l.s4 1983009808
          %v1389 = vunpack.c.0.s8 %v1388
          %v1390 = vperm.slane %v1386, %v1389
          %v1391 = vrot.slane %v1390, 4
          %v1392 = vsel %vm1338, %v1391, %v1384
          %v1394 = vunpack.c.l.s4 1934713408
          %v1395 = vunpack.c.0.s8 %v1394
          %v1396 = vperm.slane %v1392, %v1395
          %v1397 = vrot.slane %v1396, 4
          %v1398 = vsel %vm1338, 0, %v1397
          %v1399 = vsel %vm1338, %v1378, %v1371
          %v1401 = vunpack.c.l.s4 1983009808
          %v1402 = vunpack.c.0.s8 %v1401
          %v1403 = vperm.slane %v1399, %v1402
          %v1404 = vrot.slane %v1379, 4
          %v1405 = vsel %vm1338, %v1404, %v1377
          %v1407 = vunpack.c.l.s4 1983009808
          %v1408 = vunpack.c.0.s8 %v1407
          %v1409 = vperm.slane %v1405, %v1408
          %v1410 = vrot.slane %v1409, 4
          %v1411 = vsel %vm1338, %v1410, %v1403
          %v1413 = vunpack.c.l.s4 1934713408
          %v1414 = vunpack.c.0.s8 %v1413
          %v1415 = vperm.slane %v1411, %v1414
          %v1416 = vrot.slane %v1415, 4
          %v1417 = vsel %vm1338, 0, %v1416
          %v1420 = vpack.i.b16 %v1415, %v1396
          %v1421 = vshrl.u32 %v1396, 16
          %v1422 = vshrl.u32 %v1415, 16
          %v1423 = vpack.i.b16 %v1422, %v1421
          %v1426 = vpack.i.b16 %v1417, %v1398
          %v1427 = vshrl.u32 %v1398, 16
          %v1428 = vshrl.u32 %v1417, 16
          %v1429 = vpack.i.b16 %v1428, %v1427
          %v1430 = vunpack.c.l.b16 %v1423
          %v1431 = vpack.c.b16 %v1430, %v1430
          %1432 = vrot.lane.b32.xlu0 %v1431, 32
          %v1433 = vpop.permute.xlu0 %1432
          %v1434 = vunpack.c.l.b16 %v1426
          %v1435 = vpack.c.b16 %v1434, %v1434
          %1436 = vrot.lane.b32.xlu0 %v1435, 64
          %v1437 = vpop.permute.xlu0 %1436
          %v1438 = vunpack.c.l.b16 %v1429
          %v1439 = vpack.c.b16 %v1438, %v1438
          %1440 = vrot.lane.b32.xlu0 %v1439, 96
          %v1441 = vpop.permute.xlu0 %1440
          %v1444 = vsel %vm933, %v1420, %v1433
          %v1446 = vsel %vm941, %v1444, %v1437
          %vm1447 = vcmask 785408
          %v1449 = vsel %vm1447, %v1446, %v1441
          %v1451 = vld [vmem:[#allocation13] sm:$0xf]
          %v1452 = vld [vmem:[#allocation13 + $0x4] sm:$0xf]
          %v1453 = vld [vmem:[#allocation13 + $0x8] sm:$0xf]
          %v1454 = vld [vmem:[#allocation13 + $0xc] sm:$0xf]
          %v1455 = vld [vmem:[#allocation13 + $0x10] sm:$0xf]
          %v1456 = vld [vmem:[#allocation13 + $0x14] sm:$0xf]
          %v1457 = vld [vmem:[#allocation13 + $0x18] sm:$0xf]
          %v1458 = vld [vmem:[#allocation13 + $0x1c] sm:$0xf]
          %v1459 = vld [vmem:[#allocation13 + $0x20] sm:$0xf]
          %v1460 = vld [vmem:[#allocation13 + $0x24] sm:$0xf]
          %v1461 = vld [vmem:[#allocation13 + $0x28] sm:$0xf]
          %v1462 = vld [vmem:[#allocation13 + $0x2c] sm:$0xf]
          %v1463 = vld [vmem:[#allocation13 + $0x30] sm:$0xf]
          %v1464 = vld [vmem:[#allocation13 + $0x34] sm:$0xf]
          %v1465 = vld [vmem:[#allocation13 + $0x38] sm:$0xf]
          %v1466 = vld [vmem:[#allocation13 + $0x3c] sm:$0xf]
          %v1467 = vld [vmem:[#allocation14] sm:$0x1]
          %v1469 = vperm.slane %v1467, 0
          %v1487 = vunpack.c.l.b16 %v1451
          %v1488 = vunpack.c.l.b16 %v1452
          %v1489 = vunpack.c.l.b16 %v1453
          %v1490 = vunpack.c.l.b16 %v1454
          %v1491 = vunpack.c.l.b16 %v1455
          %v1492 = vunpack.c.l.b16 %v1456
          %v1493 = vunpack.c.l.b16 %v1457
          %v1494 = vunpack.c.l.b16 %v1458
          %v1495 = vunpack.c.l.b16 %v1459
          %v1496 = vunpack.c.l.b16 %v1460
          %v1497 = vunpack.c.l.b16 %v1461
          %v1498 = vunpack.c.l.b16 %v1462
          %v1499 = vunpack.c.l.b16 %v1463
          %v1500 = vunpack.c.l.b16 %v1464
          %v1501 = vunpack.c.l.b16 %v1465
          %v1502 = vunpack.c.l.b16 %v1466
          %v1503 = vpack.c.b16 %v1488, %v1487
          %v1504 = vpack.c.b16 %v1490, %v1489
          %v1505 = vpack.c.b16 %v1492, %v1491
          %v1506 = vpack.c.b16 %v1494, %v1493
          %v1507 = vpack.c.b16 %v1496, %v1495
          %v1508 = vpack.c.b16 %v1498, %v1497
          %v1509 = vpack.c.b16 %v1500, %v1499
          %v1510 = vpack.c.b16 %v1502, %v1501
          %1519 = vmatpush.bf16.msra.mxu0 %v1510
          %1520 = vmatpush.bf16.msra.mxu0 %v1509
          %1521 = vmatpush.bf16.msra.mxu0 %v1508
          %1522 = vmatpush.bf16.msra.mxu0 %v1507
          %1523 = vmatpush.bf16.msra.mxu0 %v1506
          %1524 = vmatpush.bf16.msra.mxu0 %v1505
          %1525 = vmatpush.bf16.msra.mxu0 %v1504
          %1526 = vmatpush.bf16.msra.mxu0 %v1503
          %1527 = vmatmul.bf16.gmra.mxu0 %v1449
          %v1528 = vpop.f32.mrf.mxu0
          %v1529 = vadd.f32 %v1469, %v1528
          %v1530 = vpop.f32.mrf.mxu0
          %1531 = vdwg.mxu0
          %v1532 = vadd.f32 %v681, %v1529
          %1533 = vst [vmem:[#allocation2] sm:$0xff] %v1532
          %v1534 = vld [vmem:[#allocation16] sm:$0x1]
          %v1535 = vld [vmem:[#allocation17] sm:$0x1]
          %1536 = vadd.xlane.f32.xlu0 %v1532
          %v1537 = vpop.xlane.xlu0 %1536
          %v1538 = vmul.f32 %v1537, %v692
          %v1539 = vsub.f32 %v1532, %v1538
          %v1540 = vmul.f32 %v1539, %v1539
          %1541 = vadd.xlane.f32.xlu0 %v1540
          %v1542 = vpop.xlane.xlu0 %1541
          %v1543 = vmul.f32 %v1542, %v692
          %v1544 = vadd.f32 %v1543, 1e-05
          %v1545 = vrsqrt.pop %v1544
          %v1546 = vmul.f32 %v1545, %v1544
          %v1547 = vmul.f32 %v1546, %v1545
          %v1548 = vmul.f32 0.5, %v1547
          %v1549 = vsub.f32 1.5, %v1548
          %v1550 = vmul.f32 %v1545, %v1549
          %vm1551 = vweird.f32 %v1544
          %vm1552 = vweird.f32 %v1545
          %vm1553 = vmor %vm1551, %vm1552
          %v1554 = vsel %vm1553, %v1545, %v1550
          %v1555 = vmul.f32 %v1539, %v1554
          %v1557 = vperm.slane %v1534, 0
          %v1559 = vmul.f32 %v1555, %v1557
          %v1561 = vperm.slane %v1535, 0
          %v1563 = vadd.f32 %v1559, %v1561
          %v1564 = vpack.c.bf16 %v1563, %v1563
          %1565 = vst [vmem:[#allocation3] sm:$0xf] %v1564
          %1566 = vst [vmem:[#allocation4] sm:$0xff] 0.0
        $region116: #{tpu_custom_call.1} parent=71 // pred_fallthru
          _
        %v1567 = vld [vmem:[#allocation3] sm:$0xf]
        %v1568 = vld [vmem:[%s600] sm:$0xff]
        %v1569 = vld [vmem:[%s600 + $0x8] sm:$0xff]
        %v1570 = vld [vmem:[%s600 + $0x10] sm:$0xff]
        %v1571 = vld [vmem:[%s600 + $0x18] sm:$0xff]
        %v1572 = vld [vmem:[%s600 + $0x20] sm:$0xff]
        %v1573 = vld [vmem:[%s600 + $0x28] sm:$0xff]
        %v1574 = vld [vmem:[%s600 + $0x30] sm:$0xff]
        %v1575 = vld [vmem:[%s600 + $0x38] sm:$0xff]
        %v1576 = vld [vmem:[%s600 + $0x40] sm:$0xff]
        %v1577 = vld [vmem:[%s600 + $0x48] sm:$0xff]
        %v1578 = vld [vmem:[%s600 + $0x50] sm:$0xff]
        %v1579 = vld [vmem:[%s600 + $0x58] sm:$0xff]
        %v1580 = vld [vmem:[%s600 + $0x60] sm:$0xff]
        %v1581 = vld [vmem:[%s600 + $0x68] sm:$0xff]
        %v1582 = vld [vmem:[%s600 + $0x70] sm:$0xff]
        %v1583 = vld [vmem:[%s600 + $0x78] sm:$0xff]
        %v1584 = vld [vmem:[%s672] sm:$0x3]
        %v1586 = vperm.slane %v1584, 0
        %v1587 = vperm.slane %v1584, 1
        %v1606 = vunpack.c.l.b16 %v1568
        %v1607 = vunpack.c.h.b16 %v1568
        %v1608 = vunpack.c.l.b16 %v1569
        %v1609 = vunpack.c.h.b16 %v1569
        %v1610 = vunpack.c.l.b16 %v1570
        %v1611 = vunpack.c.h.b16 %v1570
        %v1612 = vunpack.c.l.b16 %v1571
        %v1613 = vunpack.c.h.b16 %v1571
        %v1614 = vunpack.c.l.b16 %v1572
        %v1615 = vunpack.c.h.b16 %v1572
        %v1616 = vunpack.c.l.b16 %v1573
        %v1617 = vunpack.c.h.b16 %v1573
        %v1618 = vunpack.c.l.b16 %v1574
        %v1619 = vunpack.c.h.b16 %v1574
        %v1620 = vunpack.c.l.b16 %v1575
        %v1621 = vunpack.c.h.b16 %v1575
        %v1622 = vunpack.c.l.b16 %v1576
        %v1623 = vunpack.c.h.b16 %v1576
        %v1624 = vunpack.c.l.b16 %v1577
        %v1625 = vunpack.c.h.b16 %v1577
        %v1626 = vunpack.c.l.b16 %v1578
        %v1627 = vunpack.c.h.b16 %v1578
        %v1628 = vunpack.c.l.b16 %v1579
        %v1629 = vunpack.c.h.b16 %v1579
        %v1630 = vunpack.c.l.b16 %v1580
        %v1631 = vunpack.c.h.b16 %v1580
        %v1632 = vunpack.c.l.b16 %v1581
        %v1633 = vunpack.c.h.b16 %v1581
        %v1634 = vunpack.c.l.b16 %v1582
        %v1635 = vunpack.c.h.b16 %v1582
        %v1636 = vunpack.c.l.b16 %v1583
        %v1637 = vunpack.c.h.b16 %v1583
        %v1638 = vpack.c.b16 %v1608, %v1606
        %v1639 = vpack.c.b16 %v1609, %v1607
        %v1640 = vpack.c.b16 %v1612, %v1610
        %v1641 = vpack.c.b16 %v1613, %v1611
        %v1642 = vpack.c.b16 %v1616, %v1614
        %v1643 = vpack.c.b16 %v1617, %v1615
        %v1644 = vpack.c.b16 %v1620, %v1618
        %v1645 = vpack.c.b16 %v1621, %v1619
        %v1646 = vpack.c.b16 %v1624, %v1622
        %v1647 = vpack.c.b16 %v1625, %v1623
        %v1648 = vpack.c.b16 %v1628, %v1626
        %v1649 = vpack.c.b16 %v1629, %v1627
        %v1650 = vpack.c.b16 %v1632, %v1630
        %v1651 = vpack.c.b16 %v1633, %v1631
        %v1652 = vpack.c.b16 %v1636, %v1634
        %v1653 = vpack.c.b16 %v1637, %v1635
        %1670 = vmatpush.bf16.msra.mxu0 %v1652
        %1671 = vmatpush.bf16.msra.mxu0 %v1650
        %1672 = vmatpush.bf16.msra.mxu0 %v1648
        %1673 = vmatpush.bf16.msra.mxu0 %v1646
        %1674 = vmatpush.bf16.msra.mxu0 %v1644
        %1675 = vmatpush.bf16.msra.mxu0 %v1642
        %1676 = vmatpush.bf16.msra.mxu0 %v1640
        %1677 = vmatpush.bf16.msra.mxu0 %v1638
        %1678 = vmatmul.bf16.gmra.mxu0 %v1567
        %v1679 = vpop.f32.mrf.mxu0
        %v1680 = vadd.f32 %v1586, %v1679
        %v1681 = vpop.f32.mrf.mxu0
        %1682 = vdwg.mxu0
        %1683 = vmatpush.bf16.msra.mxu0 %v1653
        %1684 = vmatpush.bf16.msra.mxu0 %v1651
        %1685 = vmatpush.bf16.msra.mxu0 %v1649
        %1686 = vmatpush.bf16.msra.mxu0 %v1647
        %1687 = vmatpush.bf16.msra.mxu0 %v1645
        %1688 = vmatpush.bf16.msra.mxu0 %v1643
        %1689 = vmatpush.bf16.msra.mxu0 %v1641
        %1690 = vmatpush.bf16.msra.mxu0 %v1639
        %1691 = vmatmul.bf16.gmra.mxu0 %v1567
        %v1692 = vpop.f32.mrf.mxu0
        %v1693 = vadd.f32 %v1587, %v1692
        %v1694 = vpop.f32.mrf.mxu0
        %1695 = vdwg.mxu0
        %v1696 = vmul.f32 %v1680, 0.5
        %v1697 = vmul.f32 %v1693, 0.5
        %v1698 = vmul.f32 %v1680, 0.70710677
        %v1699 = vmul.f32 %v1693, 0.70710677
        %v1700 = vmul.f32 %v1698, %v1698
        %v1701 = vmin.f32 16.0, %v1700
        %v1702 = vmul.f32 %v1701, 2.1237322e-06
        %v1703 = vadd.f32 %v1702, 0.00028619796
        %v1704 = vmul.f32 %v1701, %v1703
        %v1705 = vadd.f32 %v1704, 0.0036580483
        %v1706 = vmul.f32 %v1701, %v1705
        %v1707 = vadd.f32 %v1706, 0.05243302
        %v1708 = vmul.f32 %v1701, %v1707
        %v1709 = vadd.f32 %v1708, 0.18741608
        %v1710 = vmul.f32 %v1701, %v1709
        %v1711 = vadd.f32 %v1710, 1.1283791
        %v1712 = vmul.f32 %v1698, %v1711
        %v1713 = vmul.f32 %v1701, 3.8918573e-05
        %v1714 = vadd.f32 %v1713, 0.001143296
        %v1715 = vmul.f32 %v1701, %v1714
        %v1716 = vadd.f32 %v1715, 0.014752088
        %v1717 = vmul.f32 %v1701, %v1716
        %v1718 = vadd.f32 %v1717, 0.112945676
        %v1719 = vmul.f32 %v1701, %v1718
        %v1720 = vadd.f32 %v1719, 0.4994258
        %v1721 = vmul.f32 %v1701, %v1720
        %v1722 = vadd.f32 %v1721, 1.0
        %v1723 = vrcp.pop %v1722
        %v1724 = vmul.f32 %v1722, %v1723
        %v1725 = vsub.f32 1.0, %v1724
        %v1726 = vmul.f32 %v1723, %v1725
        %v1727 = vadd.f32 %v1723, %v1726
        %vm1728 = vweird.f32 %v1722
        %vm1729 = vweird.f32 %v1723
        %vm1730 = vmor %vm1728, %vm1729
        %v1731 = vsel %vm1730, %v1723, %v1727
        %v1732 = vand.u32 2147483647, %v1722
        %vm1733 = vcmp.eq.f32.partialorder %v1732, 8.507059e+37
        %v1734 = vand.u32 %v1722, 2147483648
        %v1735 = vor.u32 1.1754944e-38, %v1734
        %v1736 = vsel %vm1733, %v1735, %v1731
        %v1737 = vmul.f32 %v1712, %v1736
        %v1738 = vmin.f32 %v1737, 1.0
        %v1739 = vmax.f32 %v1738, -1.0
        %v1740 = vmul.f32 %v1699, %v1699
        %v1741 = vmin.f32 16.0, %v1740
        %v1742 = vmul.f32 %v1741, 2.1237322e-06
        %v1743 = vadd.f32 %v1742, 0.00028619796
        %v1744 = vmul.f32 %v1741, %v1743
        %v1745 = vadd.f32 %v1744, 0.0036580483
        %v1746 = vmul.f32 %v1741, %v1745
        %v1747 = vadd.f32 %v1746, 0.05243302
        %v1748 = vmul.f32 %v1741, %v1747
        %v1749 = vadd.f32 %v1748, 0.18741608
        %v1750 = vmul.f32 %v1741, %v1749
        %v1751 = vadd.f32 %v1750, 1.1283791
        %v1752 = vmul.f32 %v1699, %v1751
        %v1753 = vmul.f32 %v1741, 3.8918573e-05
        %v1754 = vadd.f32 %v1753, 0.001143296
        %v1755 = vmul.f32 %v1741, %v1754
        %v1756 = vadd.f32 %v1755, 0.014752088
        %v1757 = vmul.f32 %v1741, %v1756
        %v1758 = vadd.f32 %v1757, 0.112945676
        %v1759 = vmul.f32 %v1741, %v1758
        %v1760 = vadd.f32 %v1759, 0.4994258
        %v1761 = vmul.f32 %v1741, %v1760
        %v1762 = vadd.f32 %v1761, 1.0
        %v1763 = vrcp.pop %v1762
        %v1764 = vmul.f32 %v1762, %v1763
        %v1765 = vsub.f32 1.0, %v1764
        %v1766 = vmul.f32 %v1763, %v1765
        %v1767 = vadd.f32 %v1763, %v1766
        %vm1768 = vweird.f32 %v1762
        %vm1769 = vweird.f32 %v1763
        %vm1770 = vmor %vm1768, %vm1769
        %v1771 = vsel %vm1770, %v1763, %v1767
        %v1772 = vand.u32 2147483647, %v1762
        %vm1773 = vcmp.eq.f32.partialorder %v1772, 8.507059e+37
        %v1774 = vand.u32 %v1762, 2147483648
        %v1775 = vor.u32 1.1754944e-38, %v1774
        %v1776 = vsel %vm1773, %v1775, %v1771
        %v1777 = vmul.f32 %v1752, %v1776
        %v1778 = vmin.f32 %v1777, 1.0
        %v1779 = vmax.f32 %v1778, -1.0
        %v1780 = vadd.f32 %v1739, 1.0
        %v1781 = vadd.f32 %v1779, 1.0
        %v1782 = vmul.f32 %v1696, %v1780
        %v1783 = vmul.f32 %v1697, %v1781
        %v1784 = vld [vmem:[#allocation4] sm:$0xff]
        %v1785 = vpack.c.bf16 %v1782, %v1782
        %v1786 = vpack.c.bf16 %v1783, %v1783
        %v1787 = vld [vmem:[%s610] sm:$0xf]
        %v1788 = vld [vmem:[%s610 + $0x4] sm:$0xf]
        %v1789 = vld [vmem:[%s610 + $0x8] sm:$0xf]
        %v1790 = vld [vmem:[%s610 + $0xc] sm:$0xf]
        %v1791 = vld [vmem:[%s610 + $0x10] sm:$0xf]
        %v1792 = vld [vmem:[%s610 + $0x14] sm:$0xf]
        %v1793 = vld [vmem:[%s610 + $0x18] sm:$0xf]
        %v1794 = vld [vmem:[%s610 + $0x1c] sm:$0xf]
        %v1795 = vld [vmem:[%s610 + $0x20] sm:$0xf]
        %v1796 = vld [vmem:[%s610 + $0x24] sm:$0xf]
        %v1797 = vld [vmem:[%s610 + $0x28] sm:$0xf]
        %v1798 = vld [vmem:[%s610 + $0x2c] sm:$0xf]
        %v1799 = vld [vmem:[%s610 + $0x30] sm:$0xf]
        %v1800 = vld [vmem:[%s610 + $0x34] sm:$0xf]
        %v1801 = vld [vmem:[%s610 + $0x38] sm:$0xf]
        %v1802 = vld [vmem:[%s610 + $0x3c] sm:$0xf]
        %v1803 = vld [vmem:[%s610 + $0x40] sm:$0xf]
        %v1804 = vld [vmem:[%s610 + $0x44] sm:$0xf]
        %v1805 = vld [vmem:[%s610 + $0x48] sm:$0xf]
        %v1806 = vld [vmem:[%s610 + $0x4c] sm:$0xf]
        %v1807 = vld [vmem:[%s610 + $0x50] sm:$0xf]
        %v1808 = vld [vmem:[%s610 + $0x54] sm:$0xf]
        %v1809 = vld [vmem:[%s610 + $0x58] sm:$0xf]
        %v1810 = vld [vmem:[%s610 + $0x5c] sm:$0xf]
        %v1811 = vld [vmem:[%s610 + $0x60] sm:$0xf]
        %v1812 = vld [vmem:[%s610 + $0x64] sm:$0xf]
        %v1813 = vld [vmem:[%s610 + $0x68] sm:$0xf]
        %v1814 = vld [vmem:[%s610 + $0x6c] sm:$0xf]
        %v1815 = vld [vmem:[%s610 + $0x70] sm:$0xf]
        %v1816 = vld [vmem:[%s610 + $0x74] sm:$0xf]
        %v1817 = vld [vmem:[%s610 + $0x78] sm:$0xf]
        %v1818 = vld [vmem:[%s610 + $0x7c] sm:$0xf]
        %v1851 = vunpack.c.l.b16 %v1787
        %v1852 = vunpack.c.l.b16 %v1788
        %v1853 = vunpack.c.l.b16 %v1789
        %v1854 = vunpack.c.l.b16 %v1790
        %v1855 = vunpack.c.l.b16 %v1791
        %v1856 = vunpack.c.l.b16 %v1792
        %v1857 = vunpack.c.l.b16 %v1793
        %v1858 = vunpack.c.l.b16 %v1794
        %v1859 = vunpack.c.l.b16 %v1795
        %v1860 = vunpack.c.l.b16 %v1796
        %v1861 = vunpack.c.l.b16 %v1797
        %v1862 = vunpack.c.l.b16 %v1798
        %v1863 = vunpack.c.l.b16 %v1799
        %v1864 = vunpack.c.l.b16 %v1800
        %v1865 = vunpack.c.l.b16 %v1801
        %v1866 = vunpack.c.l.b16 %v1802
        %v1867 = vunpack.c.l.b16 %v1803
        %v1868 = vunpack.c.l.b16 %v1804
        %v1869 = vunpack.c.l.b16 %v1805
        %v1870 = vunpack.c.l.b16 %v1806
        %v1871 = vunpack.c.l.b16 %v1807
        %v1872 = vunpack.c.l.b16 %v1808
        %v1873 = vunpack.c.l.b16 %v1809
        %v1874 = vunpack.c.l.b16 %v1810
        %v1875 = vunpack.c.l.b16 %v1811
        %v1876 = vunpack.c.l.b16 %v1812
        %v1877 = vunpack.c.l.b16 %v1813
        %v1878 = vunpack.c.l.b16 %v1814
        %v1879 = vunpack.c.l.b16 %v1815
        %v1880 = vunpack.c.l.b16 %v1816
        %v1881 = vunpack.c.l.b16 %v1817
        %v1882 = vunpack.c.l.b16 %v1818
        %v1883 = vpack.c.b16 %v1852, %v1851
        %v1884 = vpack.c.b16 %v1854, %v1853
        %v1885 = vpack.c.b16 %v1856, %v1855
        %v1886 = vpack.c.b16 %v1858, %v1857
        %v1887 = vpack.c.b16 %v1860, %v1859
        %v1888 = vpack.c.b16 %v1862, %v1861
        %v1889 = vpack.c.b16 %v1864, %v1863
        %v1890 = vpack.c.b16 %v1866, %v1865
        %v1891 = vpack.c.b16 %v1868, %v1867
        %v1892 = vpack.c.b16 %v1870, %v1869
        %v1893 = vpack.c.b16 %v1872, %v1871
        %v1894 = vpack.c.b16 %v1874, %v1873
        %v1895 = vpack.c.b16 %v1876, %v1875
        %v1896 = vpack.c.b16 %v1878, %v1877
        %v1897 = vpack.c.b16 %v1880, %v1879
        %v1898 = vpack.c.b16 %v1882, %v1881
        %1915 = vmatpush.bf16.msra.mxu0 %v1890
        %1916 = vmatpush.bf16.msra.mxu0 %v1889
        %1917 = vmatpush.bf16.msra.mxu0 %v1888
        %1918 = vmatpush.bf16.msra.mxu0 %v1887
        %1919 = vmatpush.bf16.msra.mxu0 %v1886
        %1920 = vmatpush.bf16.msra.mxu0 %v1885
        %1921 = vmatpush.bf16.msra.mxu0 %v1884
        %1922 = vmatpush.bf16.msra.mxu0 %v1883
        %1923 = vmatmul.bf16.gmra.mxu0 %v1785
        %v1924 = vpop.f32.mrf.mxu0
        %v1925 = vadd.f32 0.0, %v1924
        %v1926 = vpop.f32.mrf.mxu0
        %1927 = vdwg.mxu0
        %1928 = vmatpush.bf16.msra.mxu0 %v1898
        %1929 = vmatpush.bf16.msra.mxu0 %v1897
        %1930 = vmatpush.bf16.msra.mxu0 %v1896
        %1931 = vmatpush.bf16.msra.mxu0 %v1895
        %1932 = vmatpush.bf16.msra.mxu0 %v1894
        %1933 = vmatpush.bf16.msra.mxu0 %v1893
        %1934 = vmatpush.bf16.msra.mxu0 %v1892
        %1935 = vmatpush.bf16.msra.mxu0 %v1891
        %1936 = vmatmul.bf16.gmra.mxu0 %v1786
        %v1937 = vpop.f32.mrf.mxu0
        %v1938 = vadd.f32 %v1925, %v1937
        %v1939 = vpop.f32.mrf.mxu0
        %1940 = vdwg.mxu0
        %v1941 = vadd.f32 %v1784, %v1938
        %1942 = vst [vmem:[#allocation4] sm:$0xff] %v1941
        %p1943 = scmp.eq.s32.totalorder %s39, 1
        // Predicated region
        $region117: #{tpu_custom_call.1} parent=71 // pred_check
          %p1944 = pneg %p1943
        $region118: #{tpu_custom_call.1} parent=71 // pred_check_branch
          %1946 = sbr.rel (%p1944) target = $region120
        $region119: #{tpu_custom_call.1} parent=71 // pred_region
          %v1947 = vld [vmem:[#allocation2] sm:$0xff]
          %v1948 = vld [vmem:[#allocation4] sm:$0xff]
          %v1949 = vadd.f32 %v1947, %v1948
          %v1950 = vld [vmem:[%s12] sm:$0x1]
          %v1952 = vperm.slane %v1950, 0
          %v1954 = vadd.f32 %v1949, %v1952
          %v1955 = vpack.c.bf16 %v1954, %v1954
          %1956 = vst [vmem:[%s667] sm:$0xf] %v1955
        $region120: #{tpu_custom_call.1} parent=71 // pred_fallthru
          _
        %s1957 = sand.u32 %s347, 1
        %s1958 = scalar_lea.sflag [#allocation7], %s1957
        %s1959 = sand.u32 %s347, 1
        %s1960 = smul.addr %s1959, 4
        %s1961 = scalar_lea.vmem [#allocation21], %s1960
        // Predicated region
        $region121: #{tpu_custom_call.1} parent=71 // pred_check
          %p1962 = pneg %p357
        $region122: #{tpu_custom_call.1} parent=71 // pred_check_branch
          %1964 = sbr.rel (%p1962) target = $region124
        $region123: #{tpu_custom_call.1} parent=71 // pred_region
          %1966 = vsyncadd %s1958, 0
          %s1967 = smul.addr %s38, 4
          %s1968 = scalar_lea.hbm %s13, %s1967
          %s1970 = sshll.u32 %s1961, 4
          %s1971 = int_to_ptr.vmem [resolvable:$true] %s1970
          %s1972 = sshll.u32 %s1968, 4
          %s1973 = int_to_ptr.hbm [resolvable:$true] %s1972
          %1975 = dma.vmem_to_hbm [thread:$0]  %s1971, 64, %s1973, %s1958
        $region124: #{tpu_custom_call.1} parent=71 // pred_fallthru
          _
      $region72: #{tpu_custom_call.1} parent=5 // pred_fallthru
        _
      %p1976 = scmp.le.s32.totalorder 2, %s29
      // Predicated region
      $region125: #{tpu_custom_call.1} parent=5 // pred_check
        %p1977 = pneg %p1976
      $region126: #{tpu_custom_call.1} parent=5 // pred_check_branch
        %1979 = sbr.rel (%p1977) target = $region128
      $region127: #{tpu_custom_call.1} parent=5 // pred_region
        %s1980 = ssub.s32 %s29, 2
        // Predicated region
        $region129: #{tpu_custom_call.1} parent=127 // pred_check
          %p1981 = pneg %p363
        $region130: #{tpu_custom_call.1} parent=127 // pred_check_branch
          %1983 = sbr.rel (%p1981) target = $region132
        $region131: #{tpu_custom_call.1} parent=127 // pred_region
          %s1984 = sand.u32 %s348, 1
          %s1985 = scalar_lea.sflag [#allocation7], %s1984
          %s1986 = sand.u32 %s348, 1
          %s1987 = smul.addr %s1986, 4
          %s1988 = scalar_lea.vmem [#allocation21], %s1987
          %1990 = dma.done %s1985, 64
        $region132: #{tpu_custom_call.1} parent=127 // pred_fallthru
          _
      $region128: #{tpu_custom_call.1} parent=5 // pred_fallthru
        _
    $region6: #{tpu_custom_call.1} parent=1 // loop_footer
      %s33 = sadd.s32 1, %s29
    $region7: #{tpu_custom_call.1} parent=1 // loop_footer_branch
      %28 = sbr.rel target = $region3
    $region8: #{tpu_custom_call.1} parent=1 // loop_exit
      _
    %1991 = vsyncpa [#allocation6], 1
    %s1992 = scalar_lea.sflag [#allocation6], 1
    %1993 = vsyncpa %s1992, 1
    %1994 = vsyncpa [#allocation9], 1
    %1995 = vsyncpa [#allocation12], 1
    %1996 = vsyncpa [#allocation15], 1
    %1997 = vsyncpa [#allocation18], 1
    %1998 = vsyncpa [#allocation7], 1
    %s1999 = scalar_lea.sflag [#allocation7], 1
    %2000 = vsyncpa %s1999, 1

</llo_original>
